<compile_context>
chip_gen: v7x
topology: tpu7x:2x2x1
jax: 0.10.0
libtpu: 0.0.40
codegen_flags: <defaults>
</compile_context>

<pallas_src>
import jax
import jax.numpy as jnp
from jax.experimental import pallas as pl
from jax.experimental.pallas import tpu as pltpu

BN_EPS = 1e-5

CONFIG = {
    "model": {"input_channels": 4},
    "backbone": {
        "conv1": {"out_channels": 16, "kernel_size": 7, "stride": 2, "padding": 3},
        "layer1": {"in_channels": 16, "out_channels": 16, "blocks": 2},
        "layer2": {"in_channels": 16, "out_channels": 32, "blocks": 2, "stride": 2},
        "layer3": {"in_channels": 32, "out_channels": 64, "blocks": 2, "stride": 2},
        "layer4": {"in_channels": 64, "out_channels": 128, "blocks": 2, "stride": 2},
    },
}


# ---------------------------------------------------------------------------
# Pallas kernel: tiled (patches @ weights) + bias + ReLU with K-axis accumulation
# ---------------------------------------------------------------------------
def _matmul_bias_relu_kernel(p_ref, w_ref, b_ref, o_ref, acc_ref):
    @pl.when(pl.program_id(2) == 0)
    def _():
        acc_ref[...] = jnp.zeros_like(acc_ref)

    acc_ref[...] += jnp.dot(
        p_ref[...], w_ref[...], preferred_element_type=jnp.float32
    )

    @pl.when(pl.program_id(2) == pl.num_programs(2) - 1)
    def _():
        o_ref[...] = jnp.maximum(acc_ref[...] + b_ref[...], 0.0).astype(o_ref.dtype)


# ---------------------------------------------------------------------------
# Helpers
# ---------------------------------------------------------------------------
def _round_up(x, m):
    return (x + m - 1) // m * m


def _pick_tile(padded, max_tile):
    """Largest multiple-of-128 tile <= max_tile that divides `padded`."""
    if padded <= max_tile:
        return padded
    t = max_tile - (max_tile % 128)
    while t > 128 and padded % t != 0:
        t -= 128
    return t


def _im2col(x_nhwc, kh, kw, stride, padding):
    """Extract conv patches: [N*Ho*Wo, KH*KW*Cin] (kh, kw, cin ordering)."""
    n, h, w, c = x_nhwc.shape
    ho = (h + 2 * padding - kh) // stride + 1
    wo = (w + 2 * padding - kw) // stride + 1
    xp = jnp.pad(x_nhwc, ((0, 0), (padding, padding), (padding, padding), (0, 0)))
    cols = []
    for i in range(kh):
        for j in range(kw):
            cols.append(
                xp[:, i : i + (ho - 1) * stride + 1 : stride,
                      j : j + (wo - 1) * stride + 1 : stride, :]
            )
    patches = jnp.concatenate(cols, axis=-1)  # [N, Ho, Wo, KH*KW*Cin]
    return patches.reshape(n * ho * wo, kh * kw * c), (n, ho, wo)


def _fold_weight(weight_oihw, scale):
    """[Cout, Cin, KH, KW] -> [KH*KW*Cin, Cout] matching patch order, BN scale folded."""
    cout, cin, kh, kw = weight_oihw.shape
    wmat = jnp.transpose(weight_oihw, (2, 3, 1, 0)).reshape(kh * kw * cin, cout)
    return wmat * scale[None, :]


# ---------------------------------------------------------------------------
# Conv + folded-BN + ReLU (im2col -> tiled Pallas matmul)
# ---------------------------------------------------------------------------
def conv_bn_relu(x_nhwc, weight_oihw, scale, bias, stride, padding):
    cout, cin, kh, kw = weight_oihw.shape
    patches, (n, ho, wo) = _im2col(x_nhwc, kh, kw, stride, padding)
    m, k = patches.shape

    wmat = _fold_weight(weight_oihw, scale)  # [K, Cout], BN scale folded at jit time

    # Pad to MXU/vreg-friendly shapes: K, Cout -> multiples of 128 (lane-dense,
    # unmasked loads/stores); M -> multiple of the chosen M tile (>= 8 sublanes).
    kp = _round_up(k, 128)
    cp = _round_up(cout, 128)
    tm = min(512, _round_up(m, 8))
    mp = _round_up(m, tm)
    tk = _pick_tile(kp, 512)
    tn = _pick_tile(cp, 256)

    # bf16 matmul operands (f32 accumulation in the kernel); zero padding is exact.
    patches_p = jnp.pad(patches, ((0, mp - m), (0, kp - k))).astype(jnp.bfloat16)
    wmat_p = jnp.pad(wmat, ((0, kp - k), (0, cp - cout))).astype(jnp.bfloat16)
    bias_p = jnp.pad(bias, (0, cp - cout)).reshape(1, cp).astype(jnp.float32)

    grid = (mp // tm, cp // tn, kp // tk)

    out = pl.pallas_call(
        _matmul_bias_relu_kernel,
        out_shape=jax.ShapeDtypeStruct((mp, cp), jnp.float32),
        grid_spec=pltpu.PrefetchScalarGridSpec(
            num_scalar_prefetch=0,
            grid=grid,
            in_specs=[
                pl.BlockSpec((tm, tk), lambda i, j, kk: (i, kk)),
                pl.BlockSpec((tk, tn), lambda i, j, kk: (kk, j)),
                pl.BlockSpec((1, tn), lambda i, j, kk: (0, j)),
            ],
            out_specs=pl.BlockSpec((tm, tn), lambda i, j, kk: (i, j)),
            scratch_shapes=[pltpu.VMEM((tm, tn), jnp.float32)],
        ),
        compiler_params=pltpu.CompilerParams(
            dimension_semantics=("parallel", "parallel", "arbitrary"),
            vmem_limit_bytes=32 * 1024 * 1024,  # safe on v7x's 64 MiB VMEM
        ),
    )(patches_p, wmat_p, bias_p)

    return out[:m, :cout].reshape(n, ho, wo, cout)


# ---------------------------------------------------------------------------
# MaxPool2d(kernel=3, stride=2, padding=1)
# Left to XLA as a fused jnp.maximum tree over the 9 strided views: one HBM read
# + one write, no (9, M, C) stack materialized.
# ---------------------------------------------------------------------------
def maxpool_3x3_s2_p1(x_nhwc):
    n, h, w, c = x_nhwc.shape
    ho = (h + 2 - 3) // 2 + 1
    wo = (w + 2 - 3) // 2 + 1
    xp = jnp.pad(x_nhwc, ((0, 0), (1, 1), (1, 1), (0, 0)), constant_values=-jnp.inf)
    out = None
    for i in range(3):
        for j in range(3):
            v = xp[:, i : i + (ho - 1) * 2 + 1 : 2, j : j + (wo - 1) * 2 + 1 : 2, :]
            out = v if out is None else jnp.maximum(out, v)
    return out


# ---------------------------------------------------------------------------
# Parameters (deterministic; eval-mode BatchNorm folded to scale/bias)
# ---------------------------------------------------------------------------
def _init_conv_bn(key, cin, cout, ksize):
    kw_, kb_, kg_, kbe_, km_, kv_ = jax.random.split(key, 6)
    w = jax.random.normal(kw_, (cout, cin, ksize, ksize), jnp.float32) * 0.05
    conv_b = jax.random.normal(kb_, (cout,), jnp.float32) * 0.05
    gamma = 1.0 + 0.1 * jax.random.normal(kg_, (cout,), jnp.float32)
    beta = 0.05 * jax.random.normal(kbe_, (cout,), jnp.float32)
    mean = 0.02 * jax.random.normal(km_, (cout,), jnp.float32)
    var = 0.5 + 0.1 * jnp.abs(jax.random.normal(kv_, (cout,), jnp.float32))
    scale = gamma / jnp.sqrt(var + BN_EPS)
    bias = (conv_b - mean) * scale + beta
    return {"w": w, "scale": scale, "bias": bias}


def make_params(key, config=CONFIG):
    bb = config["backbone"]
    keys = jax.random.split(key, 16)
    ki = iter(range(16))
    params = {
        "conv1": _init_conv_bn(
            keys[next(ki)],
            config["model"]["input_channels"],
            bb["conv1"]["out_channels"],
            bb["conv1"]["kernel_size"],
        )
    }
    # NOTE: params pytree contains arrays only — strides live in static CONFIG.
    for name in ("layer1", "layer2", "layer3", "layer4"):
        cin, cout, blocks = bb[name]["in_channels"], bb[name]["out_channels"], bb[name]["blocks"]
        blist = [_init_conv_bn(keys[next(ki)], cin, cout, 3)]
        for _ in range(1, blocks):
            blist.append(_init_conv_bn(keys[next(ki)], cout, cout, 3))
        params[name] = blist
    return params


# ---------------------------------------------------------------------------
# Forward pass (NCHW in / NCHW out to match the PyTorch module)
# ---------------------------------------------------------------------------
def _forward_impl(params, x_nchw, conv_fn):
    bb = CONFIG["backbone"]
    x = jnp.transpose(x_nchw, (0, 2, 3, 1))  # NCHW -> NHWC (lane = channels)

    p1 = params["conv1"]
    x = conv_fn(
        x, p1["w"], p1["scale"], p1["bias"],
        stride=bb["conv1"]["stride"], padding=bb["conv1"]["padding"],
    )
    c1 = maxpool_3x3_s2_p1(x)

    feats = []
    cur = c1
    for name in ("layer1", "layer2", "layer3", "layer4"):
        first_stride = bb[name].get("stride", 1)  # static Python int
        for bi, p in enumerate(params[name]):
            s = first_stride if bi == 0 else 1
            cur = conv_fn(cur, p["w"], p["scale"], p["bias"], stride=s, padding=1)
        feats.append(cur)

    to_nchw = lambda t: jnp.transpose(t, (0, 3, 1, 2))
    return tuple(to_nchw(t) for t in feats)


@jax.jit
def custom_backbone_forward(params, x_nchw):
    return _forward_impl(params, x_nchw, conv_bn_relu)


# Pure-JAX reference using the identical bf16 im2col math (validates the Pallas path).
def _conv_bn_relu_ref(x_nhwc, weight_oihw, scale, bias, stride, padding):
    cout, cin, kh, kw = weight_oihw.shape
    patches, (n, ho, wo) = _im2col(x_nhwc, kh, kw, stride, padding)
    wmat = _fold_weight(weight_oihw, scale)
    out = jnp.dot(patches.astype(jnp.bfloat16), wmat.astype(jnp.bfloat16),
                  preferred_element_type=jnp.float32)
    out = jnp.maximum(out + bias[None, :].astype(jnp.float32), 0.0)
    return out.reshape(n, ho, wo, cout)


@jax.jit
def _reference_forward(params, x_nchw):
    return _forward_impl(params, x_nchw, _conv_bn_relu_ref)


if __name__ == "__main__":
    key = jax.random.PRNGKey(0)
    k_params, k_x = jax.random.split(key)
    params = make_params(k_params)
    x = jax.random.normal(k_x, (2, CONFIG["model"]["input_channels"], 32, 32), jnp.float32)

    feats = custom_backbone_forward(params, x)
    jax.block_until_ready(feats)
    c2, c3, c4, c5 = feats

    assert c2.shape == (2, 16, 8, 8), c2.shape
    assert c3.shape == (2, 32, 4, 4), c3.shape
    assert c4.shape == (2, 64, 2, 2), c4.shape
    assert c5.shape == (2, 128, 1, 1), c5.shape
    assert all(bool(jnp.all(jnp.isfinite(t))) for t in feats)

    ref = _reference_forward(params, x)
    jax.block_until_ready(ref)
    for got, want in zip(feats, ref):
        assert bool(jnp.allclose(got, want, atol=2e-2, rtol=2e-2)), (
            float(jnp.max(jnp.abs(got - want)))
        )

    print("KERNEL_OK")
</pallas_src>

<mosaic_0001>
module attributes {stable_mosaic.version = 11 : i64} {
  func.func @_matmul_bias_relu_kernel(%arg0: i32, %arg1: i32, %arg2: i32, %arg3: memref<512x256xbf16, #tpu.memory_space<vmem>>, %arg4: memref<256x128xbf16, #tpu.memory_space<vmem>>, %arg5: memref<1x128xf32, #tpu.memory_space<vmem>>, %arg6: memref<512x128xf32, #tpu.memory_space<vmem>>, %arg7: memref<512x128xf32, #tpu.memory_space<vmem>>) attributes {dimension_semantics = [#tpu.dimension_semantics<parallel>, #tpu.dimension_semantics<parallel>, #tpu.dimension_semantics<arbitrary>], iteration_bounds = array<i64: 1, 1, 1>, scalar_prefetch = 0 : i64, scratch_operands = 1 : i64, tpu.core_type = #tpu.core_type<tc>, window_params = [{transform_indices = @transform_0, window_bounds = array<i64: 512, 256>}, {transform_indices = @transform_1, window_bounds = array<i64: 256, 128>}, {transform_indices = @transform_2, window_bounds = array<i64: 1, 128>}, {transform_indices = @transform_3, window_bounds = array<i64: 512, 128>}]} {
    %c0_i32 = arith.constant 0 : i32
    %0 = arith.cmpi eq, %arg2, %c0_i32 : i32
    %1 = arith.extui %0 : i1 to i32
    %c0_i32_0 = arith.constant 0 : i32
    %2 = arith.cmpi ne, %1, %c0_i32_0 : i32
    scf.if %2 {
      %cst_10 = arith.constant 0.000000e+00 : f32
      %12 = vector.broadcast %cst_10 : f32 to vector<512x128xf32>
      %c0_11 = arith.constant 0 : index
      %c0_12 = arith.constant 0 : index
      %13 = vector.load %arg7[%c0_11, %c0_12] : memref<512x128xf32, #tpu.memory_space<vmem>>, vector<512x128xf32>
      tpu.vector_store %arg7[%c0_11, %c0_12], %12 {strides = array<i32>} : memref<512x128xf32, #tpu.memory_space<vmem>>, vector<512x128xf32>,
    } else {
    }
    %c0 = arith.constant 0 : index
    %c0_1 = arith.constant 0 : index
    %3 = vector.load %arg7[%c0, %c0_1] : memref<512x128xf32, #tpu.memory_space<vmem>>, vector<512x128xf32>
    %c0_2 = arith.constant 0 : index
    %c0_3 = arith.constant 0 : index
    %4 = vector.load %arg3[%c0_2, %c0_3] : memref<512x256xbf16, #tpu.memory_space<vmem>>, vector<512x256xbf16>
    %c0_4 = arith.constant 0 : index
    %c0_5 = arith.constant 0 : index
    %5 = vector.load %arg4[%c0_4, %c0_5] : memref<256x128xbf16, #tpu.memory_space<vmem>>, vector<256x128xbf16>
    %cst = arith.constant dense<0.000000e+00> : vector<512x128xf32>
    %6 = tpu.matmul %4, %5, %cst {dimension_numbers = #tpu.dot_dimension_numbers<[1], [0], [0], [1], [0, 0, 1, 1], [], []>} : vector<512x256xbf16>, vector<256x128xbf16>, vector<512x128xf32> -> vector<512x128xf32>
    %7 = arith.addf %3, %6 : vector<512x128xf32>
    %c0_6 = arith.constant 0 : index
    %c0_7 = arith.constant 0 : index
    %8 = vector.load %arg7[%c0_6, %c0_7] : memref<512x128xf32, #tpu.memory_space<vmem>>, vector<512x128xf32>
    tpu.vector_store %arg7[%c0_6, %c0_7], %7 {strides = array<i32>} : memref<512x128xf32, #tpu.memory_space<vmem>>, vector<512x128xf32>,
    %c0_i32_8 = arith.constant 0 : i32
    %9 = arith.cmpi eq, %arg2, %c0_i32_8 : i32
    %10 = arith.extui %9 : i1 to i32
    %c0_i32_9 = arith.constant 0 : i32
    %11 = arith.cmpi ne, %10, %c0_i32_9 : i32
    scf.if %11 {
      %c0_10 = arith.constant 0 : index
      %c0_11 = arith.constant 0 : index
      %12 = vector.load %arg7[%c0_10, %c0_11] : memref<512x128xf32, #tpu.memory_space<vmem>>, vector<512x128xf32>
      %c0_12 = arith.constant 0 : index
      %c0_13 = arith.constant 0 : index
      %13 = vector.load %arg5[%c0_12, %c0_13] : memref<1x128xf32, #tpu.memory_space<vmem>>, vector<1x128xf32>
      %14 = vector.broadcast %13 : vector<1x128xf32> to vector<512x128xf32>
      %15 = arith.addf %12, %14 : vector<512x128xf32>
      %cst_14 = arith.constant 0.000000e+00 : f32
      %16 = vector.broadcast %cst_14 : f32 to vector<512x128xf32>
      %17 = arith.maximumf %15, %16 : vector<512x128xf32>
      %c0_15 = arith.constant 0 : index
      %c0_16 = arith.constant 0 : index
      %18 = vector.load %arg6[%c0_15, %c0_16] : memref<512x128xf32, #tpu.memory_space<vmem>>, vector<512x128xf32>
      tpu.vector_store %arg6[%c0_15, %c0_16], %17 {strides = array<i32>} : memref<512x128xf32, #tpu.memory_space<vmem>>, vector<512x128xf32>,
    } else {
    }
    return
  }
  func.func @transform_0(%arg0: i32, %arg1: i32, %arg2: i32) -> (i32, i32) {
    %c0_i32 = arith.constant 0 : i32
    return %arg0, %arg2 : i32, i32
  }
  func.func @transform_1(%arg0: i32, %arg1: i32, %arg2: i32) -> (i32, i32) {
    %c0_i32 = arith.constant 0 : i32
    return %arg2, %arg1 : i32, i32
  }
  func.func @transform_2(%arg0: i32, %arg1: i32, %arg2: i32) -> (i32, i32) {
    %c0_i32 = arith.constant 0 : i32
    %c0_i32_0 = arith.constant 0 : i32
    return %c0_i32, %arg1 : i32, i32
  }
  func.func @transform_3(%arg0: i32, %arg1: i32, %arg2: i32) -> (i32, i32) {
    %c0_i32 = arith.constant 0 : i32
    return %arg0, %arg1 : i32, i32
  }
}

module attributes {stable_mosaic.version = 11 : i64} {
  func.func @_matmul_bias_relu_kernel(%arg0: i32, %arg1: i32, %arg2: i32, %arg3: memref<128x256xbf16, #tpu.memory_space<vmem>>, %arg4: memref<256x128xbf16, #tpu.memory_space<vmem>>, %arg5: memref<1x128xf32, #tpu.memory_space<vmem>>, %arg6: memref<128x128xf32, #tpu.memory_space<vmem>>, %arg7: memref<128x128xf32, #tpu.memory_space<vmem>>) attributes {dimension_semantics = [#tpu.dimension_semantics<parallel>, #tpu.dimension_semantics<parallel>, #tpu.dimension_semantics<arbitrary>], iteration_bounds = array<i64: 1, 1, 1>, scalar_prefetch = 0 : i64, scratch_operands = 1 : i64, tpu.core_type = #tpu.core_type<tc>, window_params = [{transform_indices = @transform_0, window_bounds = array<i64: 128, 256>}, {transform_indices = @transform_1, window_bounds = array<i64: 256, 128>}, {transform_indices = @transform_2, window_bounds = array<i64: 1, 128>}, {transform_indices = @transform_3, window_bounds = array<i64: 128, 128>}]} {
    %c0_i32 = arith.constant 0 : i32
    %0 = arith.cmpi eq, %arg2, %c0_i32 : i32
    %1 = arith.extui %0 : i1 to i32
    %c0_i32_0 = arith.constant 0 : i32
    %2 = arith.cmpi ne, %1, %c0_i32_0 : i32
    scf.if %2 {
      %cst_10 = arith.constant 0.000000e+00 : f32
      %12 = vector.broadcast %cst_10 : f32 to vector<128x128xf32>
      %c0_11 = arith.constant 0 : index
      %c0_12 = arith.constant 0 : index
      %13 = vector.load %arg7[%c0_11, %c0_12] : memref<128x128xf32, #tpu.memory_space<vmem>>, vector<128x128xf32>
      tpu.vector_store %arg7[%c0_11, %c0_12], %12 {strides = array<i32>} : memref<128x128xf32, #tpu.memory_space<vmem>>, vector<128x128xf32>,
    } else {
    }
    %c0 = arith.constant 0 : index
    %c0_1 = arith.constant 0 : index
    %3 = vector.load %arg7[%c0, %c0_1] : memref<128x128xf32, #tpu.memory_space<vmem>>, vector<128x128xf32>
    %c0_2 = arith.constant 0 : index
    %c0_3 = arith.constant 0 : index
    %4 = vector.load %arg3[%c0_2, %c0_3] : memref<128x256xbf16, #tpu.memory_space<vmem>>, vector<128x256xbf16>
    %c0_4 = arith.constant 0 : index
    %c0_5 = arith.constant 0 : index
    %5 = vector.load %arg4[%c0_4, %c0_5] : memref<256x128xbf16, #tpu.memory_space<vmem>>, vector<256x128xbf16>
    %cst = arith.constant dense<0.000000e+00> : vector<128x128xf32>
    %6 = tpu.matmul %4, %5, %cst {dimension_numbers = #tpu.dot_dimension_numbers<[1], [0], [0], [1], [0, 0, 1, 1], [], []>} : vector<128x256xbf16>, vector<256x128xbf16>, vector<128x128xf32> -> vector<128x128xf32>
    %7 = arith.addf %3, %6 : vector<128x128xf32>
    %c0_6 = arith.constant 0 : index
    %c0_7 = arith.constant 0 : index
    %8 = vector.load %arg7[%c0_6, %c0_7] : memref<128x128xf32, #tpu.memory_space<vmem>>, vector<128x128xf32>
    tpu.vector_store %arg7[%c0_6, %c0_7], %7 {strides = array<i32>} : memref<128x128xf32, #tpu.memory_space<vmem>>, vector<128x128xf32>,
    %c0_i32_8 = arith.constant 0 : i32
    %9 = arith.cmpi eq, %arg2, %c0_i32_8 : i32
    %10 = arith.extui %9 : i1 to i32
    %c0_i32_9 = arith.constant 0 : i32
    %11 = arith.cmpi ne, %10, %c0_i32_9 : i32
    scf.if %11 {
      %c0_10 = arith.constant 0 : index
      %c0_11 = arith.constant 0 : index
      %12 = vector.load %arg7[%c0_10, %c0_11] : memref<128x128xf32, #tpu.memory_space<vmem>>, vector<128x128xf32>
      %c0_12 = arith.constant 0 : index
      %c0_13 = arith.constant 0 : index
      %13 = vector.load %arg5[%c0_12, %c0_13] : memref<1x128xf32, #tpu.memory_space<vmem>>, vector<1x128xf32>
      %14 = vector.broadcast %13 : vector<1x128xf32> to vector<128x128xf32>
      %15 = arith.addf %12, %14 : vector<128x128xf32>
      %cst_14 = arith.constant 0.000000e+00 : f32
      %16 = vector.broadcast %cst_14 : f32 to vector<128x128xf32>
      %17 = arith.maximumf %15, %16 : vector<128x128xf32>
      %c0_15 = arith.constant 0 : index
      %c0_16 = arith.constant 0 : index
      %18 = vector.load %arg6[%c0_15, %c0_16] : memref<128x128xf32, #tpu.memory_space<vmem>>, vector<128x128xf32>
      tpu.vector_store %arg6[%c0_15, %c0_16], %17 {strides = array<i32>} : memref<128x128xf32, #tpu.memory_space<vmem>>, vector<128x128xf32>,
    } else {
    }
    return
  }
  func.func @transform_0(%arg0: i32, %arg1: i32, %arg2: i32) -> (i32, i32) {
    %c0_i32 = arith.constant 0 : i32
    return %arg0, %arg2 : i32, i32
  }
  func.func @transform_1(%arg0: i32, %arg1: i32, %arg2: i32) -> (i32, i32) {
    %c0_i32 = arith.constant 0 : i32
    return %arg2, %arg1 : i32, i32
  }
  func.func @transform_2(%arg0: i32, %arg1: i32, %arg2: i32) -> (i32, i32) {
    %c0_i32 = arith.constant 0 : i32
    %c0_i32_0 = arith.constant 0 : i32
    return %c0_i32, %arg1 : i32, i32
  }
  func.func @transform_3(%arg0: i32, %arg1: i32, %arg2: i32) -> (i32, i32) {
    %c0_i32 = arith.constant 0 : i32
    return %arg0, %arg1 : i32, i32
  }
}

module attributes {stable_mosaic.version = 11 : i64} {
  func.func @_matmul_bias_relu_kernel(%arg0: i32, %arg1: i32, %arg2: i32, %arg3: memref<32x256xbf16, #tpu.memory_space<vmem>>, %arg4: memref<256x128xbf16, #tpu.memory_space<vmem>>, %arg5: memref<1x128xf32, #tpu.memory_space<vmem>>, %arg6: memref<32x128xf32, #tpu.memory_space<vmem>>, %arg7: memref<32x128xf32, #tpu.memory_space<vmem>>) attributes {dimension_semantics = [#tpu.dimension_semantics<parallel>, #tpu.dimension_semantics<parallel>, #tpu.dimension_semantics<arbitrary>], iteration_bounds = array<i64: 1, 1, 1>, scalar_prefetch = 0 : i64, scratch_operands = 1 : i64, tpu.core_type = #tpu.core_type<tc>, window_params = [{transform_indices = @transform_0, window_bounds = array<i64: 32, 256>}, {transform_indices = @transform_1, window_bounds = array<i64: 256, 128>}, {transform_indices = @transform_2, window_bounds = array<i64: 1, 128>}, {transform_indices = @transform_3, window_bounds = array<i64: 32, 128>}]} {
    %c0_i32 = arith.constant 0 : i32
    %0 = arith.cmpi eq, %arg2, %c0_i32 : i32
    %1 = arith.extui %0 : i1 to i32
    %c0_i32_0 = arith.constant 0 : i32
    %2 = arith.cmpi ne, %1, %c0_i32_0 : i32
    scf.if %2 {
      %cst_10 = arith.constant 0.000000e+00 : f32
      %12 = vector.broadcast %cst_10 : f32 to vector<32x128xf32>
      %c0_11 = arith.constant 0 : index
      %c0_12 = arith.constant 0 : index
      %13 = vector.load %arg7[%c0_11, %c0_12] : memref<32x128xf32, #tpu.memory_space<vmem>>, vector<32x128xf32>
      tpu.vector_store %arg7[%c0_11, %c0_12], %12 {strides = array<i32>} : memref<32x128xf32, #tpu.memory_space<vmem>>, vector<32x128xf32>,
    } else {
    }
    %c0 = arith.constant 0 : index
    %c0_1 = arith.constant 0 : index
    %3 = vector.load %arg7[%c0, %c0_1] : memref<32x128xf32, #tpu.memory_space<vmem>>, vector<32x128xf32>
    %c0_2 = arith.constant 0 : index
    %c0_3 = arith.constant 0 : index
    %4 = vector.load %arg3[%c0_2, %c0_3] : memref<32x256xbf16, #tpu.memory_space<vmem>>, vector<32x256xbf16>
    %c0_4 = arith.constant 0 : index
    %c0_5 = arith.constant 0 : index
    %5 = vector.load %arg4[%c0_4, %c0_5] : memref<256x128xbf16, #tpu.memory_space<vmem>>, vector<256x128xbf16>
    %cst = arith.constant dense<0.000000e+00> : vector<32x128xf32>
    %6 = tpu.matmul %4, %5, %cst {dimension_numbers = #tpu.dot_dimension_numbers<[1], [0], [0], [1], [0, 0, 1, 1], [], []>} : vector<32x256xbf16>, vector<256x128xbf16>, vector<32x128xf32> -> vector<32x128xf32>
    %7 = arith.addf %3, %6 : vector<32x128xf32>
    %c0_6 = arith.constant 0 : index
    %c0_7 = arith.constant 0 : index
    %8 = vector.load %arg7[%c0_6, %c0_7] : memref<32x128xf32, #tpu.memory_space<vmem>>, vector<32x128xf32>
    tpu.vector_store %arg7[%c0_6, %c0_7], %7 {strides = array<i32>} : memref<32x128xf32, #tpu.memory_space<vmem>>, vector<32x128xf32>,
    %c0_i32_8 = arith.constant 0 : i32
    %9 = arith.cmpi eq, %arg2, %c0_i32_8 : i32
    %10 = arith.extui %9 : i1 to i32
    %c0_i32_9 = arith.constant 0 : i32
    %11 = arith.cmpi ne, %10, %c0_i32_9 : i32
    scf.if %11 {
      %c0_10 = arith.constant 0 : index
      %c0_11 = arith.constant 0 : index
      %12 = vector.load %arg7[%c0_10, %c0_11] : memref<32x128xf32, #tpu.memory_space<vmem>>, vector<32x128xf32>
      %c0_12 = arith.constant 0 : index
      %c0_13 = arith.constant 0 : index
      %13 = vector.load %arg5[%c0_12, %c0_13] : memref<1x128xf32, #tpu.memory_space<vmem>>, vector<1x128xf32>
      %14 = vector.broadcast %13 : vector<1x128xf32> to vector<32x128xf32>
      %15 = arith.addf %12, %14 : vector<32x128xf32>
      %cst_14 = arith.constant 0.000000e+00 : f32
      %16 = vector.broadcast %cst_14 : f32 to vector<32x128xf32>
      %17 = arith.maximumf %15, %16 : vector<32x128xf32>
      %c0_15 = arith.constant 0 : index
      %c0_16 = arith.constant 0 : index
      %18 = vector.load %arg6[%c0_15, %c0_16] : memref<32x128xf32, #tpu.memory_space<vmem>>, vector<32x128xf32>
      tpu.vector_store %arg6[%c0_15, %c0_16], %17 {strides = array<i32>} : memref<32x128xf32, #tpu.memory_space<vmem>>, vector<32x128xf32>,
    } else {
    }
    return
  }
  func.func @transform_0(%arg0: i32, %arg1: i32, %arg2: i32) -> (i32, i32) {
    %c0_i32 = arith.constant 0 : i32
    return %arg0, %arg2 : i32, i32
  }
  func.func @transform_1(%arg0: i32, %arg1: i32, %arg2: i32) -> (i32, i32) {
    %c0_i32 = arith.constant 0 : i32
    return %arg2, %arg1 : i32, i32
  }
  func.func @transform_2(%arg0: i32, %arg1: i32, %arg2: i32) -> (i32, i32) {
    %c0_i32 = arith.constant 0 : i32
    %c0_i32_0 = arith.constant 0 : i32
    return %c0_i32, %arg1 : i32, i32
  }
  func.func @transform_3(%arg0: i32, %arg1: i32, %arg2: i32) -> (i32, i32) {
    %c0_i32 = arith.constant 0 : i32
    return %arg0, %arg1 : i32, i32
  }
}

module attributes {stable_mosaic.version = 11 : i64} {
  func.func @_matmul_bias_relu_kernel(%arg0: i32, %arg1: i32, %arg2: i32, %arg3: memref<32x384xbf16, #tpu.memory_space<vmem>>, %arg4: memref<384x128xbf16, #tpu.memory_space<vmem>>, %arg5: memref<1x128xf32, #tpu.memory_space<vmem>>, %arg6: memref<32x128xf32, #tpu.memory_space<vmem>>, %arg7: memref<32x128xf32, #tpu.memory_space<vmem>>) attributes {dimension_semantics = [#tpu.dimension_semantics<parallel>, #tpu.dimension_semantics<parallel>, #tpu.dimension_semantics<arbitrary>], iteration_bounds = array<i64: 1, 1, 1>, scalar_prefetch = 0 : i64, scratch_operands = 1 : i64, tpu.core_type = #tpu.core_type<tc>, window_params = [{transform_indices = @transform_0, window_bounds = array<i64: 32, 384>}, {transform_indices = @transform_1, window_bounds = array<i64: 384, 128>}, {transform_indices = @transform_2, window_bounds = array<i64: 1, 128>}, {transform_indices = @transform_3, window_bounds = array<i64: 32, 128>}]} {
    %c0_i32 = arith.constant 0 : i32
    %0 = arith.cmpi eq, %arg2, %c0_i32 : i32
    %1 = arith.extui %0 : i1 to i32
    %c0_i32_0 = arith.constant 0 : i32
    %2 = arith.cmpi ne, %1, %c0_i32_0 : i32
    scf.if %2 {
      %cst_10 = arith.constant 0.000000e+00 : f32
      %12 = vector.broadcast %cst_10 : f32 to vector<32x128xf32>
      %c0_11 = arith.constant 0 : index
      %c0_12 = arith.constant 0 : index
      %13 = vector.load %arg7[%c0_11, %c0_12] : memref<32x128xf32, #tpu.memory_space<vmem>>, vector<32x128xf32>
      tpu.vector_store %arg7[%c0_11, %c0_12], %12 {strides = array<i32>} : memref<32x128xf32, #tpu.memory_space<vmem>>, vector<32x128xf32>,
    } else {
    }
    %c0 = arith.constant 0 : index
    %c0_1 = arith.constant 0 : index
    %3 = vector.load %arg7[%c0, %c0_1] : memref<32x128xf32, #tpu.memory_space<vmem>>, vector<32x128xf32>
    %c0_2 = arith.constant 0 : index
    %c0_3 = arith.constant 0 : index
    %4 = vector.load %arg3[%c0_2, %c0_3] : memref<32x384xbf16, #tpu.memory_space<vmem>>, vector<32x384xbf16>
    %c0_4 = arith.constant 0 : index
    %c0_5 = arith.constant 0 : index
    %5 = vector.load %arg4[%c0_4, %c0_5] : memref<384x128xbf16, #tpu.memory_space<vmem>>, vector<384x128xbf16>
    %cst = arith.constant dense<0.000000e+00> : vector<32x128xf32>
    %6 = tpu.matmul %4, %5, %cst {dimension_numbers = #tpu.dot_dimension_numbers<[1], [0], [0], [1], [0, 0, 1, 1], [], []>} : vector<32x384xbf16>, vector<384x128xbf16>, vector<32x128xf32> -> vector<32x128xf32>
    %7 = arith.addf %3, %6 : vector<32x128xf32>
    %c0_6 = arith.constant 0 : index
    %c0_7 = arith.constant 0 : index
    %8 = vector.load %arg7[%c0_6, %c0_7] : memref<32x128xf32, #tpu.memory_space<vmem>>, vector<32x128xf32>
    tpu.vector_store %arg7[%c0_6, %c0_7], %7 {strides = array<i32>} : memref<32x128xf32, #tpu.memory_space<vmem>>, vector<32x128xf32>,
    %c0_i32_8 = arith.constant 0 : i32
    %9 = arith.cmpi eq, %arg2, %c0_i32_8 : i32
    %10 = arith.extui %9 : i1 to i32
    %c0_i32_9 = arith.constant 0 : i32
    %11 = arith.cmpi ne, %10, %c0_i32_9 : i32
    scf.if %11 {
      %c0_10 = arith.constant 0 : index
      %c0_11 = arith.constant 0 : index
      %12 = vector.load %arg7[%c0_10, %c0_11] : memref<32x128xf32, #tpu.memory_space<vmem>>, vector<32x128xf32>
      %c0_12 = arith.constant 0 : index
      %c0_13 = arith.constant 0 : index
      %13 = vector.load %arg5[%c0_12, %c0_13] : memref<1x128xf32, #tpu.memory_space<vmem>>, vector<1x128xf32>
      %14 = vector.broadcast %13 : vector<1x128xf32> to vector<32x128xf32>
      %15 = arith.addf %12, %14 : vector<32x128xf32>
      %cst_14 = arith.constant 0.000000e+00 : f32
      %16 = vector.broadcast %cst_14 : f32 to vector<32x128xf32>
      %17 = arith.maximumf %15, %16 : vector<32x128xf32>
      %c0_15 = arith.constant 0 : index
      %c0_16 = arith.constant 0 : index
      %18 = vector.load %arg6[%c0_15, %c0_16] : memref<32x128xf32, #tpu.memory_space<vmem>>, vector<32x128xf32>
      tpu.vector_store %arg6[%c0_15, %c0_16], %17 {strides = array<i32>} : memref<32x128xf32, #tpu.memory_space<vmem>>, vector<32x128xf32>,
    } else {
    }
    return
  }
  func.func @transform_0(%arg0: i32, %arg1: i32, %arg2: i32) -> (i32, i32) {
    %c0_i32 = arith.constant 0 : i32
    return %arg0, %arg2 : i32, i32
  }
  func.func @transform_1(%arg0: i32, %arg1: i32, %arg2: i32) -> (i32, i32) {
    %c0_i32 = arith.constant 0 : i32
    return %arg2, %arg1 : i32, i32
  }
  func.func @transform_2(%arg0: i32, %arg1: i32, %arg2: i32) -> (i32, i32) {
    %c0_i32 = arith.constant 0 : i32
    %c0_i32_0 = arith.constant 0 : i32
    return %c0_i32, %arg1 : i32, i32
  }
  func.func @transform_3(%arg0: i32, %arg1: i32, %arg2: i32) -> (i32, i32) {
    %c0_i32 = arith.constant 0 : i32
    return %arg0, %arg1 : i32, i32
  }
}

module attributes {stable_mosaic.version = 11 : i64} {
  func.func @_matmul_bias_relu_kernel(%arg0: i32, %arg1: i32, %arg2: i32, %arg3: memref<8x384xbf16, #tpu.memory_space<vmem>>, %arg4: memref<384x128xbf16, #tpu.memory_space<vmem>>, %arg5: memref<1x128xf32, #tpu.memory_space<vmem>>, %arg6: memref<8x128xf32, #tpu.memory_space<vmem>>, %arg7: memref<8x128xf32, #tpu.memory_space<vmem>>) attributes {dimension_semantics = [#tpu.dimension_semantics<parallel>, #tpu.dimension_semantics<parallel>, #tpu.dimension_semantics<arbitrary>], iteration_bounds = array<i64: 1, 1, 1>, scalar_prefetch = 0 : i64, scratch_operands = 1 : i64, tpu.core_type = #tpu.core_type<tc>, window_params = [{transform_indices = @transform_0, window_bounds = array<i64: 8, 384>}, {transform_indices = @transform_1, window_bounds = array<i64: 384, 128>}, {transform_indices = @transform_2, window_bounds = array<i64: 1, 128>}, {transform_indices = @transform_3, window_bounds = array<i64: 8, 128>}]} {
    %c0_i32 = arith.constant 0 : i32
    %0 = arith.cmpi eq, %arg2, %c0_i32 : i32
    %1 = arith.extui %0 : i1 to i32
    %c0_i32_0 = arith.constant 0 : i32
    %2 = arith.cmpi ne, %1, %c0_i32_0 : i32
    scf.if %2 {
      %cst_10 = arith.constant 0.000000e+00 : f32
      %12 = vector.broadcast %cst_10 : f32 to vector<8x128xf32>
      %c0_11 = arith.constant 0 : index
      %c0_12 = arith.constant 0 : index
      %13 = vector.load %arg7[%c0_11, %c0_12] : memref<8x128xf32, #tpu.memory_space<vmem>>, vector<8x128xf32>
      tpu.vector_store %arg7[%c0_11, %c0_12], %12 {strides = array<i32>} : memref<8x128xf32, #tpu.memory_space<vmem>>, vector<8x128xf32>,
    } else {
    }
    %c0 = arith.constant 0 : index
    %c0_1 = arith.constant 0 : index
    %3 = vector.load %arg7[%c0, %c0_1] : memref<8x128xf32, #tpu.memory_space<vmem>>, vector<8x128xf32>
    %c0_2 = arith.constant 0 : index
    %c0_3 = arith.constant 0 : index
    %4 = vector.load %arg3[%c0_2, %c0_3] : memref<8x384xbf16, #tpu.memory_space<vmem>>, vector<8x384xbf16>
    %c0_4 = arith.constant 0 : index
    %c0_5 = arith.constant 0 : index
    %5 = vector.load %arg4[%c0_4, %c0_5] : memref<384x128xbf16, #tpu.memory_space<vmem>>, vector<384x128xbf16>
    %cst = arith.constant dense<0.000000e+00> : vector<8x128xf32>
    %6 = tpu.matmul %4, %5, %cst {dimension_numbers = #tpu.dot_dimension_numbers<[1], [0], [0], [1], [0, 0, 1, 1], [], []>} : vector<8x384xbf16>, vector<384x128xbf16>, vector<8x128xf32> -> vector<8x128xf32>
    %7 = arith.addf %3, %6 : vector<8x128xf32>
    %c0_6 = arith.constant 0 : index
    %c0_7 = arith.constant 0 : index
    %8 = vector.load %arg7[%c0_6, %c0_7] : memref<8x128xf32, #tpu.memory_space<vmem>>, vector<8x128xf32>
    tpu.vector_store %arg7[%c0_6, %c0_7], %7 {strides = array<i32>} : memref<8x128xf32, #tpu.memory_space<vmem>>, vector<8x128xf32>,
    %c0_i32_8 = arith.constant 0 : i32
    %9 = arith.cmpi eq, %arg2, %c0_i32_8 : i32
    %10 = arith.extui %9 : i1 to i32
    %c0_i32_9 = arith.constant 0 : i32
    %11 = arith.cmpi ne, %10, %c0_i32_9 : i32
    scf.if %11 {
      %c0_10 = arith.constant 0 : index
      %c0_11 = arith.constant 0 : index
      %12 = vector.load %arg7[%c0_10, %c0_11] : memref<8x128xf32, #tpu.memory_space<vmem>>, vector<8x128xf32>
      %c0_12 = arith.constant 0 : index
      %c0_13 = arith.constant 0 : index
      %13 = vector.load %arg5[%c0_12, %c0_13] : memref<1x128xf32, #tpu.memory_space<vmem>>, vector<1x128xf32>
      %14 = vector.broadcast %13 : vector<1x128xf32> to vector<8x128xf32>
      %15 = arith.addf %12, %14 : vector<8x128xf32>
      %cst_14 = arith.constant 0.000000e+00 : f32
      %16 = vector.broadcast %cst_14 : f32 to vector<8x128xf32>
      %17 = arith.maximumf %15, %16 : vector<8x128xf32>
      %c0_15 = arith.constant 0 : index
      %c0_16 = arith.constant 0 : index
      %18 = vector.load %arg6[%c0_15, %c0_16] : memref<8x128xf32, #tpu.memory_space<vmem>>, vector<8x128xf32>
      tpu.vector_store %arg6[%c0_15, %c0_16], %17 {strides = array<i32>} : memref<8x128xf32, #tpu.memory_space<vmem>>, vector<8x128xf32>,
    } else {
    }
    return
  }
  func.func @transform_0(%arg0: i32, %arg1: i32, %arg2: i32) -> (i32, i32) {
    %c0_i32 = arith.constant 0 : i32
    return %arg0, %arg2 : i32, i32
  }
  func.func @transform_1(%arg0: i32, %arg1: i32, %arg2: i32) -> (i32, i32) {
    %c0_i32 = arith.constant 0 : i32
    return %arg2, %arg1 : i32, i32
  }
  func.func @transform_2(%arg0: i32, %arg1: i32, %arg2: i32) -> (i32, i32) {
    %c0_i32 = arith.constant 0 : i32
    %c0_i32_0 = arith.constant 0 : i32
    return %c0_i32, %arg1 : i32, i32
  }
  func.func @transform_3(%arg0: i32, %arg1: i32, %arg2: i32) -> (i32, i32) {
    %c0_i32 = arith.constant 0 : i32
    return %arg0, %arg1 : i32, i32
  }
}

module attributes {stable_mosaic.version = 11 : i64} {
  func.func @_matmul_bias_relu_kernel(%arg0: i32, %arg1: i32, %arg2: i32, %arg3: memref<8x128xbf16, #tpu.memory_space<vmem>>, %arg4: memref<128x128xbf16, #tpu.memory_space<vmem>>, %arg5: memref<1x128xf32, #tpu.memory_space<vmem>>, %arg6: memref<8x128xf32, #tpu.memory_space<vmem>>, %arg7: memref<8x128xf32, #tpu.memory_space<vmem>>) attributes {dimension_semantics = [#tpu.dimension_semantics<parallel>, #tpu.dimension_semantics<parallel>, #tpu.dimension_semantics<arbitrary>], iteration_bounds = array<i64: 1, 1, 5>, scalar_prefetch = 0 : i64, scratch_operands = 1 : i64, tpu.core_type = #tpu.core_type<tc>, window_params = [{transform_indices = @transform_0, window_bounds = array<i64: 8, 128>}, {transform_indices = @transform_1, window_bounds = array<i64: 128, 128>}, {transform_indices = @transform_2, window_bounds = array<i64: 1, 128>}, {transform_indices = @transform_3, window_bounds = array<i64: 8, 128>}]} {
    %c0_i32 = arith.constant 0 : i32
    %0 = arith.cmpi eq, %arg2, %c0_i32 : i32
    %1 = arith.extui %0 : i1 to i32
    %c0_i32_0 = arith.constant 0 : i32
    %2 = arith.cmpi ne, %1, %c0_i32_0 : i32
    scf.if %2 {
      %cst_9 = arith.constant 0.000000e+00 : f32
      %12 = vector.broadcast %cst_9 : f32 to vector<8x128xf32>
      %c0_10 = arith.constant 0 : index
      %c0_11 = arith.constant 0 : index
      %13 = vector.load %arg7[%c0_10, %c0_11] : memref<8x128xf32, #tpu.memory_space<vmem>>, vector<8x128xf32>
      tpu.vector_store %arg7[%c0_10, %c0_11], %12 {strides = array<i32>} : memref<8x128xf32, #tpu.memory_space<vmem>>, vector<8x128xf32>,
    } else {
    }
    %c0 = arith.constant 0 : index
    %c0_1 = arith.constant 0 : index
    %3 = vector.load %arg7[%c0, %c0_1] : memref<8x128xf32, #tpu.memory_space<vmem>>, vector<8x128xf32>
    %c0_2 = arith.constant 0 : index
    %c0_3 = arith.constant 0 : index
    %4 = vector.load %arg3[%c0_2, %c0_3] : memref<8x128xbf16, #tpu.memory_space<vmem>>, vector<8x128xbf16>
    %c0_4 = arith.constant 0 : index
    %c0_5 = arith.constant 0 : index
    %5 = vector.load %arg4[%c0_4, %c0_5] : memref<128x128xbf16, #tpu.memory_space<vmem>>, vector<128x128xbf16>
    %cst = arith.constant dense<0.000000e+00> : vector<8x128xf32>
    %6 = tpu.matmul %4, %5, %cst {dimension_numbers = #tpu.dot_dimension_numbers<[1], [0], [0], [1], [0, 0, 1, 1], [], []>} : vector<8x128xbf16>, vector<128x128xbf16>, vector<8x128xf32> -> vector<8x128xf32>
    %7 = arith.addf %3, %6 : vector<8x128xf32>
    %c0_6 = arith.constant 0 : index
    %c0_7 = arith.constant 0 : index
    %8 = vector.load %arg7[%c0_6, %c0_7] : memref<8x128xf32, #tpu.memory_space<vmem>>, vector<8x128xf32>
    tpu.vector_store %arg7[%c0_6, %c0_7], %7 {strides = array<i32>} : memref<8x128xf32, #tpu.memory_space<vmem>>, vector<8x128xf32>,
    %c4_i32 = arith.constant 4 : i32
    %9 = arith.cmpi eq, %arg2, %c4_i32 : i32
    %10 = arith.extui %9 : i1 to i32
    %c0_i32_8 = arith.constant 0 : i32
    %11 = arith.cmpi ne, %10, %c0_i32_8 : i32
    scf.if %11 {
      %c0_9 = arith.constant 0 : index
      %c0_10 = arith.constant 0 : index
      %12 = vector.load %arg7[%c0_9, %c0_10] : memref<8x128xf32, #tpu.memory_space<vmem>>, vector<8x128xf32>
      %c0_11 = arith.constant 0 : index
      %c0_12 = arith.constant 0 : index
      %13 = vector.load %arg5[%c0_11, %c0_12] : memref<1x128xf32, #tpu.memory_space<vmem>>, vector<1x128xf32>
      %14 = vector.broadcast %13 : vector<1x128xf32> to vector<8x128xf32>
      %15 = arith.addf %12, %14 : vector<8x128xf32>
      %cst_13 = arith.constant 0.000000e+00 : f32
      %16 = vector.broadcast %cst_13 : f32 to vector<8x128xf32>
      %17 = arith.maximumf %15, %16 : vector<8x128xf32>
      %c0_14 = arith.constant 0 : index
      %c0_15 = arith.constant 0 : index
      %18 = vector.load %arg6[%c0_14, %c0_15] : memref<8x128xf32, #tpu.memory_space<vmem>>, vector<8x128xf32>
      tpu.vector_store %arg6[%c0_14, %c0_15], %17 {strides = array<i32>} : memref<8x128xf32, #tpu.memory_space<vmem>>, vector<8x128xf32>,
    } else {
    }
    return
  }
  func.func @transform_0(%arg0: i32, %arg1: i32, %arg2: i32) -> (i32, i32) {
    %c0_i32 = arith.constant 0 : i32
    return %arg0, %arg2 : i32, i32
  }
  func.func @transform_1(%arg0: i32, %arg1: i32, %arg2: i32) -> (i32, i32) {
    %c0_i32 = arith.constant 0 : i32
    return %arg2, %arg1 : i32, i32
  }
  func.func @transform_2(%arg0: i32, %arg1: i32, %arg2: i32) -> (i32, i32) {
    %c0_i32 = arith.constant 0 : i32
    %c0_i32_0 = arith.constant 0 : i32
    return %c0_i32, %arg1 : i32, i32
  }
  func.func @transform_3(%arg0: i32, %arg1: i32, %arg2: i32) -> (i32, i32) {
    %c0_i32 = arith.constant 0 : i32
    return %arg0, %arg1 : i32, i32
  }
}

module attributes {stable_mosaic.version = 11 : i64} {
  func.func @_matmul_bias_relu_kernel(%arg0: i32, %arg1: i32, %arg2: i32, %arg3: memref<8x384xbf16, #tpu.memory_space<vmem>>, %arg4: memref<384x128xbf16, #tpu.memory_space<vmem>>, %arg5: memref<1x128xf32, #tpu.memory_space<vmem>>, %arg6: memref<8x128xf32, #tpu.memory_space<vmem>>, %arg7: memref<8x128xf32, #tpu.memory_space<vmem>>) attributes {dimension_semantics = [#tpu.dimension_semantics<parallel>, #tpu.dimension_semantics<parallel>, #tpu.dimension_semantics<arbitrary>], iteration_bounds = array<i64: 1, 1, 3>, scalar_prefetch = 0 : i64, scratch_operands = 1 : i64, tpu.core_type = #tpu.core_type<tc>, window_params = [{transform_indices = @transform_0, window_bounds = array<i64: 8, 384>}, {transform_indices = @transform_1, window_bounds = array<i64: 384, 128>}, {transform_indices = @transform_2, window_bounds = array<i64: 1, 128>}, {transform_indices = @transform_3, window_bounds = array<i64: 8, 128>}]} {
    %c0_i32 = arith.constant 0 : i32
    %0 = arith.cmpi eq, %arg2, %c0_i32 : i32
    %1 = arith.extui %0 : i1 to i32
    %c0_i32_0 = arith.constant 0 : i32
    %2 = arith.cmpi ne, %1, %c0_i32_0 : i32
    scf.if %2 {
      %cst_9 = arith.constant 0.000000e+00 : f32
      %12 = vector.broadcast %cst_9 : f32 to vector<8x128xf32>
      %c0_10 = arith.constant 0 : index
      %c0_11 = arith.constant 0 : index
      %13 = vector.load %arg7[%c0_10, %c0_11] : memref<8x128xf32, #tpu.memory_space<vmem>>, vector<8x128xf32>
      tpu.vector_store %arg7[%c0_10, %c0_11], %12 {strides = array<i32>} : memref<8x128xf32, #tpu.memory_space<vmem>>, vector<8x128xf32>,
    } else {
    }
    %c0 = arith.constant 0 : index
    %c0_1 = arith.constant 0 : index
    %3 = vector.load %arg7[%c0, %c0_1] : memref<8x128xf32, #tpu.memory_space<vmem>>, vector<8x128xf32>
    %c0_2 = arith.constant 0 : index
    %c0_3 = arith.constant 0 : index
    %4 = vector.load %arg3[%c0_2, %c0_3] : memref<8x384xbf16, #tpu.memory_space<vmem>>, vector<8x384xbf16>
    %c0_4 = arith.constant 0 : index
    %c0_5 = arith.constant 0 : index
    %5 = vector.load %arg4[%c0_4, %c0_5] : memref<384x128xbf16, #tpu.memory_space<vmem>>, vector<384x128xbf16>
    %cst = arith.constant dense<0.000000e+00> : vector<8x128xf32>
    %6 = tpu.matmul %4, %5, %cst {dimension_numbers = #tpu.dot_dimension_numbers<[1], [0], [0], [1], [0, 0, 1, 1], [], []>} : vector<8x384xbf16>, vector<384x128xbf16>, vector<8x128xf32> -> vector<8x128xf32>
    %7 = arith.addf %3, %6 : vector<8x128xf32>
    %c0_6 = arith.constant 0 : index
    %c0_7 = arith.constant 0 : index
    %8 = vector.load %arg7[%c0_6, %c0_7] : memref<8x128xf32, #tpu.memory_space<vmem>>, vector<8x128xf32>
    tpu.vector_store %arg7[%c0_6, %c0_7], %7 {strides = array<i32>} : memref<8x128xf32, #tpu.memory_space<vmem>>, vector<8x128xf32>,
    %c2_i32 = arith.constant 2 : i32
    %9 = arith.cmpi eq, %arg2, %c2_i32 : i32
    %10 = arith.extui %9 : i1 to i32
    %c0_i32_8 = arith.constant 0 : i32
    %11 = arith.cmpi ne, %10, %c0_i32_8 : i32
    scf.if %11 {
      %c0_9 = arith.constant 0 : index
      %c0_10 = arith.constant 0 : index
      %12 = vector.load %arg7[%c0_9, %c0_10] : memref<8x128xf32, #tpu.memory_space<vmem>>, vector<8x128xf32>
      %c0_11 = arith.constant 0 : index
      %c0_12 = arith.constant 0 : index
      %13 = vector.load %arg5[%c0_11, %c0_12] : memref<1x128xf32, #tpu.memory_space<vmem>>, vector<1x128xf32>
      %14 = vector.broadcast %13 : vector<1x128xf32> to vector<8x128xf32>
      %15 = arith.addf %12, %14 : vector<8x128xf32>
      %cst_13 = arith.constant 0.000000e+00 : f32
      %16 = vector.broadcast %cst_13 : f32 to vector<8x128xf32>
      %17 = arith.maximumf %15, %16 : vector<8x128xf32>
      %c0_14 = arith.constant 0 : index
      %c0_15 = arith.constant 0 : index
      %18 = vector.load %arg6[%c0_14, %c0_15] : memref<8x128xf32, #tpu.memory_space<vmem>>, vector<8x128xf32>
      tpu.vector_store %arg6[%c0_14, %c0_15], %17 {strides = array<i32>} : memref<8x128xf32, #tpu.memory_space<vmem>>, vector<8x128xf32>,
    } else {
    }
    return
  }
  func.func @transform_0(%arg0: i32, %arg1: i32, %arg2: i32) -> (i32, i32) {
    %c0_i32 = arith.constant 0 : i32
    return %arg0, %arg2 : i32, i32
  }
  func.func @transform_1(%arg0: i32, %arg1: i32, %arg2: i32) -> (i32, i32) {
    %c0_i32 = arith.constant 0 : i32
    return %arg2, %arg1 : i32, i32
  }
  func.func @transform_2(%arg0: i32, %arg1: i32, %arg2: i32) -> (i32, i32) {
    %c0_i32 = arith.constant 0 : i32
    %c0_i32_0 = arith.constant 0 : i32
    return %c0_i32, %arg1 : i32, i32
  }
  func.func @transform_3(%arg0: i32, %arg1: i32, %arg2: i32) -> (i32, i32) {
    %c0_i32 = arith.constant 0 : i32
    return %arg0, %arg1 : i32, i32
  }
}

</mosaic_0001>

<llo_original>
// kernel: custom_backbone_forward.10
$region0: #{custom_backbone_forward.10}
  #allocation0 [shape = 'u32[]', space=smem, size = 0x4, offset = 0x4, fixed_abs, tag = 'smem constant byte address 0x4 - core index']
  #allocation1 [shape = 'u32[144,128]{1,0:T(1,128)}', space=vmem, size = 0x12000, scoped, tag = 'internal scratch']
  #allocation2 [shape = 'f32[128,128]{1,0:T(8,128)}', space=vmem, size = 0x10000, scoped, tag = 'scratch operand']
  %s0 = inlined_call_operand.vmem [shape: bf16[128,256], index: 0, kind: input, shape index: {}]
  %s1 = inlined_call_operand.vmem [shape: bf16[256,128], index: 1, kind: input, shape index: {}]
  %s2 = inlined_call_operand.vmem [shape: f32[1,128], index: 2, kind: input, shape index: {}]
  %s3 = inlined_call_operand.vmem [shape: f32[128,128], index: 3, kind: output, shape index: {}]
  %s4 = sld [smem:[#allocation0]]
  $region30: #{custom_backbone_forward.10} parent=0
    _
  %s6 = ssub.s32 1, %s4
  %s7 = scalar_select 0, %s6, %s4
  // Predicated region
  $region2: #{custom_backbone_forward.10} parent=0 // pred_check
    _
  $region3: #{custom_backbone_forward.10} parent=0 // pred_check_branch
    %9 = sbr.rel (0) target = $region5
  $region4: #{custom_backbone_forward.10} parent=0 // pred_region
    _
  $region5: #{custom_backbone_forward.10} parent=0 // pred_fallthru
    _
  // Predicated region
  $region6: #{custom_backbone_forward.10} parent=0 // pred_check
    _
  $region7: #{custom_backbone_forward.10} parent=0 // pred_check_branch
    %11 = sbr.rel (0) target = $region9
  $region8: #{custom_backbone_forward.10} parent=0 // pred_region
    _
  $region9: #{custom_backbone_forward.10} parent=0 // pred_fallthru
    _
  // Predicated region
  $region10: #{custom_backbone_forward.10} parent=0 // pred_check
    _
  $region11: #{custom_backbone_forward.10} parent=0 // pred_check_branch
    %13 = sbr.rel (0) target = $region13
  $region12: #{custom_backbone_forward.10} parent=0 // pred_region
    _
  $region13: #{custom_backbone_forward.10} parent=0 // pred_fallthru
    _
  %p15 = scmp.eq.s32.totalorder 0, 0
  // Predicated region
  $region14: #{custom_backbone_forward.10} parent=0 // pred_check
    %p16 = pneg %p15
  $region15: #{custom_backbone_forward.10} parent=0 // pred_check_branch
    %18 = sbr.rel (%p16) target = $region17
  $region16: #{custom_backbone_forward.10} parent=0 // pred_region
    %19 = vst [vmem:[#allocation2] sm:$0xff] 0.0
    %20 = vst [vmem:[#allocation2 + $0x8] sm:$0xff] 0.0
    %21 = vst [vmem:[#allocation2 + $0x10] sm:$0xff] 0.0
    %22 = vst [vmem:[#allocation2 + $0x18] sm:$0xff] 0.0
    %23 = vst [vmem:[#allocation2 + $0x20] sm:$0xff] 0.0
    %24 = vst [vmem:[#allocation2 + $0x28] sm:$0xff] 0.0
    %25 = vst [vmem:[#allocation2 + $0x30] sm:$0xff] 0.0
    %26 = vst [vmem:[#allocation2 + $0x38] sm:$0xff] 0.0
    %27 = vst [vmem:[#allocation2 + $0x40] sm:$0xff] 0.0
    %28 = vst [vmem:[#allocation2 + $0x48] sm:$0xff] 0.0
    %29 = vst [vmem:[#allocation2 + $0x50] sm:$0xff] 0.0
    %30 = vst [vmem:[#allocation2 + $0x58] sm:$0xff] 0.0
    %31 = vst [vmem:[#allocation2 + $0x60] sm:$0xff] 0.0
    %32 = vst [vmem:[#allocation2 + $0x68] sm:$0xff] 0.0
    %33 = vst [vmem:[#allocation2 + $0x70] sm:$0xff] 0.0
    %34 = vst [vmem:[#allocation2 + $0x78] sm:$0xff] 0.0
  $region17: #{custom_backbone_forward.10} parent=0 // pred_fallthru
    _
  %v35 = vld [vmem:[#allocation2] sm:$0xff]
  %v36 = vld [vmem:[#allocation2 + $0x8] sm:$0xff]
  %v37 = vld [vmem:[#allocation2 + $0x10] sm:$0xff]
  %v38 = vld [vmem:[#allocation2 + $0x18] sm:$0xff]
  %v39 = vld [vmem:[#allocation2 + $0x20] sm:$0xff]
  %v40 = vld [vmem:[#allocation2 + $0x28] sm:$0xff]
  %v41 = vld [vmem:[#allocation2 + $0x30] sm:$0xff]
  %v42 = vld [vmem:[#allocation2 + $0x38] sm:$0xff]
  %v43 = vld [vmem:[#allocation2 + $0x40] sm:$0xff]
  %v44 = vld [vmem:[#allocation2 + $0x48] sm:$0xff]
  %v45 = vld [vmem:[#allocation2 + $0x50] sm:$0xff]
  %v46 = vld [vmem:[#allocation2 + $0x58] sm:$0xff]
  %v47 = vld [vmem:[#allocation2 + $0x60] sm:$0xff]
  %v48 = vld [vmem:[#allocation2 + $0x68] sm:$0xff]
  %v49 = vld [vmem:[#allocation2 + $0x70] sm:$0xff]
  %v50 = vld [vmem:[#allocation2 + $0x78] sm:$0xff]
  %v51 = vld [vmem:[%s0] sm:$0xff]
  %v52 = vld [vmem:[%s0 + $0x8] sm:$0xff]
  %v53 = vld [vmem:[%s0 + $0x10] sm:$0xff]
  %v54 = vld [vmem:[%s0 + $0x18] sm:$0xff]
  %v55 = vld [vmem:[%s0 + $0x20] sm:$0xff]
  %v56 = vld [vmem:[%s0 + $0x28] sm:$0xff]
  %v57 = vld [vmem:[%s0 + $0x30] sm:$0xff]
  %v58 = vld [vmem:[%s0 + $0x38] sm:$0xff]
  %v59 = vld [vmem:[%s0 + $0x40] sm:$0xff]
  %v60 = vld [vmem:[%s0 + $0x48] sm:$0xff]
  %v61 = vld [vmem:[%s0 + $0x50] sm:$0xff]
  %v62 = vld [vmem:[%s0 + $0x58] sm:$0xff]
  %v63 = vld [vmem:[%s0 + $0x60] sm:$0xff]
  %v64 = vld [vmem:[%s0 + $0x68] sm:$0xff]
  %v65 = vld [vmem:[%s0 + $0x70] sm:$0xff]
  %v66 = vld [vmem:[%s0 + $0x78] sm:$0xff]
  %v67 = vld [vmem:[%s1] sm:$0xf]
  %v68 = vld [vmem:[%s1 + $0x4] sm:$0xf]
  %v69 = vld [vmem:[%s1 + $0x8] sm:$0xf]
  %v70 = vld [vmem:[%s1 + $0xc] sm:$0xf]
  %v71 = vld [vmem:[%s1 + $0x10] sm:$0xf]
  %v72 = vld [vmem:[%s1 + $0x14] sm:$0xf]
  %v73 = vld [vmem:[%s1 + $0x18] sm:$0xf]
  %v74 = vld [vmem:[%s1 + $0x1c] sm:$0xf]
  %v75 = vld [vmem:[%s1 + $0x20] sm:$0xf]
  %v76 = vld [vmem:[%s1 + $0x24] sm:$0xf]
  %v77 = vld [vmem:[%s1 + $0x28] sm:$0xf]
  %v78 = vld [vmem:[%s1 + $0x2c] sm:$0xf]
  %v79 = vld [vmem:[%s1 + $0x30] sm:$0xf]
  %v80 = vld [vmem:[%s1 + $0x34] sm:$0xf]
  %v81 = vld [vmem:[%s1 + $0x38] sm:$0xf]
  %v82 = vld [vmem:[%s1 + $0x3c] sm:$0xf]
  %v83 = vld [vmem:[%s1 + $0x40] sm:$0xf]
  %v84 = vld [vmem:[%s1 + $0x44] sm:$0xf]
  %v85 = vld [vmem:[%s1 + $0x48] sm:$0xf]
  %v86 = vld [vmem:[%s1 + $0x4c] sm:$0xf]
  %v87 = vld [vmem:[%s1 + $0x50] sm:$0xf]
  %v88 = vld [vmem:[%s1 + $0x54] sm:$0xf]
  %v89 = vld [vmem:[%s1 + $0x58] sm:$0xf]
  %v90 = vld [vmem:[%s1 + $0x5c] sm:$0xf]
  %v91 = vld [vmem:[%s1 + $0x60] sm:$0xf]
  %v92 = vld [vmem:[%s1 + $0x64] sm:$0xf]
  %v93 = vld [vmem:[%s1 + $0x68] sm:$0xf]
  %v94 = vld [vmem:[%s1 + $0x6c] sm:$0xf]
  %v95 = vld [vmem:[%s1 + $0x70] sm:$0xf]
  %v96 = vld [vmem:[%s1 + $0x74] sm:$0xf]
  %v97 = vld [vmem:[%s1 + $0x78] sm:$0xf]
  %v98 = vld [vmem:[%s1 + $0x7c] sm:$0xf]
  %v115 = vunpack.c.l.b16 %v51
  %v116 = vunpack.c.h.b16 %v51
  %v117 = vunpack.c.l.b16 %v52
  %v118 = vunpack.c.h.b16 %v52
  %v119 = vunpack.c.l.b16 %v53
  %v120 = vunpack.c.h.b16 %v53
  %v121 = vunpack.c.l.b16 %v54
  %v122 = vunpack.c.h.b16 %v54
  %v123 = vunpack.c.l.b16 %v55
  %v124 = vunpack.c.h.b16 %v55
  %v125 = vunpack.c.l.b16 %v56
  %v126 = vunpack.c.h.b16 %v56
  %v127 = vunpack.c.l.b16 %v57
  %v128 = vunpack.c.h.b16 %v57
  %v129 = vunpack.c.l.b16 %v58
  %v130 = vunpack.c.h.b16 %v58
  %v131 = vunpack.c.l.b16 %v59
  %v132 = vunpack.c.h.b16 %v59
  %v133 = vunpack.c.l.b16 %v60
  %v134 = vunpack.c.h.b16 %v60
  %v135 = vunpack.c.l.b16 %v61
  %v136 = vunpack.c.h.b16 %v61
  %v137 = vunpack.c.l.b16 %v62
  %v138 = vunpack.c.h.b16 %v62
  %v139 = vunpack.c.l.b16 %v63
  %v140 = vunpack.c.h.b16 %v63
  %v141 = vunpack.c.l.b16 %v64
  %v142 = vunpack.c.h.b16 %v64
  %v143 = vunpack.c.l.b16 %v65
  %v144 = vunpack.c.h.b16 %v65
  %v145 = vunpack.c.l.b16 %v66
  %v146 = vunpack.c.h.b16 %v66
  %v147 = vpack.c.b16 %v117, %v115
  %v148 = vpack.c.b16 %v118, %v116
  %v149 = vpack.c.b16 %v121, %v119
  %v150 = vpack.c.b16 %v122, %v120
  %v151 = vpack.c.b16 %v125, %v123
  %v152 = vpack.c.b16 %v126, %v124
  %v153 = vpack.c.b16 %v129, %v127
  %v154 = vpack.c.b16 %v130, %v128
  %v155 = vpack.c.b16 %v133, %v131
  %v156 = vpack.c.b16 %v134, %v132
  %v157 = vpack.c.b16 %v137, %v135
  %v158 = vpack.c.b16 %v138, %v136
  %v159 = vpack.c.b16 %v141, %v139
  %v160 = vpack.c.b16 %v142, %v140
  %v161 = vpack.c.b16 %v145, %v143
  %v162 = vpack.c.b16 %v146, %v144
  %v211 = vunpack.c.l.b16 %v67
  %v212 = vunpack.c.l.b16 %v68
  %v213 = vunpack.c.l.b16 %v69
  %v214 = vunpack.c.l.b16 %v70
  %v215 = vunpack.c.l.b16 %v71
  %v216 = vunpack.c.l.b16 %v72
  %v217 = vunpack.c.l.b16 %v73
  %v218 = vunpack.c.l.b16 %v74
  %v219 = vunpack.c.l.b16 %v75
  %v220 = vunpack.c.l.b16 %v76
  %v221 = vunpack.c.l.b16 %v77
  %v222 = vunpack.c.l.b16 %v78
  %v223 = vunpack.c.l.b16 %v79
  %v224 = vunpack.c.l.b16 %v80
  %v225 = vunpack.c.l.b16 %v81
  %v226 = vunpack.c.l.b16 %v82
  %v227 = vunpack.c.l.b16 %v83
  %v228 = vunpack.c.l.b16 %v84
  %v229 = vunpack.c.l.b16 %v85
  %v230 = vunpack.c.l.b16 %v86
  %v231 = vunpack.c.l.b16 %v87
  %v232 = vunpack.c.l.b16 %v88
  %v233 = vunpack.c.l.b16 %v89
  %v234 = vunpack.c.l.b16 %v90
  %v235 = vunpack.c.l.b16 %v91
  %v236 = vunpack.c.l.b16 %v92
  %v237 = vunpack.c.l.b16 %v93
  %v238 = vunpack.c.l.b16 %v94
  %v239 = vunpack.c.l.b16 %v95
  %v240 = vunpack.c.l.b16 %v96
  %v241 = vunpack.c.l.b16 %v97
  %v242 = vunpack.c.l.b16 %v98
  %v243 = vpack.c.b16 %v212, %v211
  %v244 = vpack.c.b16 %v214, %v213
  %v245 = vpack.c.b16 %v216, %v215
  %v246 = vpack.c.b16 %v218, %v217
  %v247 = vpack.c.b16 %v220, %v219
  %v248 = vpack.c.b16 %v222, %v221
  %v249 = vpack.c.b16 %v224, %v223
  %v250 = vpack.c.b16 %v226, %v225
  %v251 = vpack.c.b16 %v228, %v227
  %v252 = vpack.c.b16 %v230, %v229
  %v253 = vpack.c.b16 %v232, %v231
  %v254 = vpack.c.b16 %v234, %v233
  %v255 = vpack.c.b16 %v236, %v235
  %v256 = vpack.c.b16 %v238, %v237
  %v257 = vpack.c.b16 %v240, %v239
  %v258 = vpack.c.b16 %v242, %v241
  %275 = vmatprep.subr.bf16.mxu0 0
  %276 = vmatpush1.bf16.msra.mxu0 %v243
  %277 = vmatprep.subr.bf16.mxu0 0
  %278 = vmatpush1.bf16.msra.mxu0 %v244
  %279 = vmatprep.subr.bf16.mxu0 0
  %280 = vmatpush1.bf16.msra.mxu0 %v245
  %281 = vmatprep.subr.bf16.mxu0 0
  %282 = vmatpush1.bf16.msra.mxu0 %v246
  %283 = vmatprep.subr.bf16.mxu0 0
  %284 = vmatpush1.bf16.msra.mxu0 %v247
  %285 = vmatprep.subr.bf16.mxu0 0
  %286 = vmatpush1.bf16.msra.mxu0 %v248
  %287 = vmatprep.subr.bf16.mxu0 0
  %288 = vmatpush1.bf16.msra.mxu0 %v249
  %289 = vmatprep.subr.bf16.mxu0 0
  %290 = vmatpush1.bf16.msra.mxu0 %v250
  %291 = vmatprep.subr.bf16.mxu0 0
  %292 = vmatpush1.bf16.msra.mxu0 %v251
  %293 = vmatprep.subr.bf16.mxu0 0
  %294 = vmatpush1.bf16.msra.mxu0 %v252
  %295 = vmatprep.subr.bf16.mxu0 0
  %296 = vmatpush1.bf16.msra.mxu0 %v253
  %297 = vmatprep.subr.bf16.mxu0 0
  %298 = vmatpush1.bf16.msra.mxu0 %v254
  %299 = vmatprep.subr.bf16.mxu0 0
  %300 = vmatpush1.bf16.msra.mxu0 %v255
  %301 = vmatprep.subr.bf16.mxu0 0
  %302 = vmatpush1.bf16.msra.mxu0 %v256
  %303 = vmatprep.subr.bf16.mxu0 0
  %304 = vmatpush1.bf16.msra.mxu0 %v257
  %305 = vmatprep.subr.bf16.mxu0 0
  %306 = vmatpush1.bf16.msra.mxu0 %v258
  %307 = vmatprep.mubr.bf16.mxu0 %v148
  %308 = vmatmul.mubr.bf16.gmra.mrb[0].mxu0 %v147
  %v309 = vpop.f32.mrb[0].mxu0
  %v310 = vadd.f32 0.0, %v309
  %v311 = vpop.f32.mrb[0].mxu0
  %v312 = vpop.f32.mrb[0].mxu0
  %v313 = vadd.f32 0.0, %v312
  %v314 = vpop.f32.mrb[0].mxu0
  %315 = vmatprep.mubr.bf16.mxu0 %v150
  %316 = vmatmul.mubr.bf16.gmra.mrb[0].mxu0 %v149
  %v317 = vpop.f32.mrb[0].mxu0
  %v318 = vadd.f32 0.0, %v317
  %v319 = vpop.f32.mrb[0].mxu0
  %v320 = vpop.f32.mrb[0].mxu0
  %v321 = vadd.f32 0.0, %v320
  %v322 = vpop.f32.mrb[0].mxu0
  %323 = vmatprep.mubr.bf16.mxu0 %v152
  %324 = vmatmul.mubr.bf16.gmra.mrb[0].mxu0 %v151
  %v325 = vpop.f32.mrb[0].mxu0
  %v326 = vadd.f32 0.0, %v325
  %v327 = vpop.f32.mrb[0].mxu0
  %v328 = vpop.f32.mrb[0].mxu0
  %v329 = vadd.f32 0.0, %v328
  %v330 = vpop.f32.mrb[0].mxu0
  %331 = vmatprep.mubr.bf16.mxu0 %v154
  %332 = vmatmul.mubr.bf16.gmra.mrb[0].mxu0 %v153
  %v333 = vpop.f32.mrb[0].mxu0
  %v334 = vadd.f32 0.0, %v333
  %v335 = vpop.f32.mrb[0].mxu0
  %v336 = vpop.f32.mrb[0].mxu0
  %v337 = vadd.f32 0.0, %v336
  %v338 = vpop.f32.mrb[0].mxu0
  %339 = vmatprep.mubr.bf16.mxu0 %v156
  %340 = vmatmul.mubr.bf16.gmra.mrb[0].mxu0 %v155
  %v341 = vpop.f32.mrb[0].mxu0
  %v342 = vadd.f32 0.0, %v341
  %v343 = vpop.f32.mrb[0].mxu0
  %v344 = vpop.f32.mrb[0].mxu0
  %v345 = vadd.f32 0.0, %v344
  %v346 = vpop.f32.mrb[0].mxu0
  %347 = vmatprep.mubr.bf16.mxu0 %v158
  %348 = vmatmul.mubr.bf16.gmra.mrb[0].mxu0 %v157
  %v349 = vpop.f32.mrb[0].mxu0
  %v350 = vadd.f32 0.0, %v349
  %v351 = vpop.f32.mrb[0].mxu0
  %v352 = vpop.f32.mrb[0].mxu0
  %v353 = vadd.f32 0.0, %v352
  %v354 = vpop.f32.mrb[0].mxu0
  %355 = vmatprep.mubr.bf16.mxu0 %v160
  %356 = vmatmul.mubr.bf16.gmra.mrb[0].mxu0 %v159
  %v357 = vpop.f32.mrb[0].mxu0
  %v358 = vadd.f32 0.0, %v357
  %v359 = vpop.f32.mrb[0].mxu0
  %v360 = vpop.f32.mrb[0].mxu0
  %v361 = vadd.f32 0.0, %v360
  %v362 = vpop.f32.mrb[0].mxu0
  %363 = vmatprep.mubr.bf16.mxu0 %v162
  %364 = vmatmul.mubr.bf16.gmra.mrb[0].mxu0 %v161
  %v365 = vpop.f32.mrb[0].mxu0
  %v366 = vadd.f32 0.0, %v365
  %v367 = vpop.f32.mrb[0].mxu0
  %v368 = vpop.f32.mrb[0].mxu0
  %v369 = vadd.f32 0.0, %v368
  %v370 = vpop.f32.mrb[0].mxu0
  %371 = vdwg.mxu0
  %v372 = vadd.f32 %v35, %v310
  %v373 = vadd.f32 %v36, %v313
  %v374 = vadd.f32 %v37, %v318
  %v375 = vadd.f32 %v38, %v321
  %v376 = vadd.f32 %v39, %v326
  %v377 = vadd.f32 %v40, %v329
  %v378 = vadd.f32 %v41, %v334
  %v379 = vadd.f32 %v42, %v337
  %v380 = vadd.f32 %v43, %v342
  %v381 = vadd.f32 %v44, %v345
  %v382 = vadd.f32 %v45, %v350
  %v383 = vadd.f32 %v46, %v353
  %v384 = vadd.f32 %v47, %v358
  %v385 = vadd.f32 %v48, %v361
  %v386 = vadd.f32 %v49, %v366
  %v387 = vadd.f32 %v50, %v369
  %388 = vst [vmem:[#allocation2] sm:$0xff] %v372
  %389 = vst [vmem:[#allocation2 + $0x8] sm:$0xff] %v373
  %390 = vst [vmem:[#allocation2 + $0x10] sm:$0xff] %v374
  %391 = vst [vmem:[#allocation2 + $0x18] sm:$0xff] %v375
  %392 = vst [vmem:[#allocation2 + $0x20] sm:$0xff] %v376
  %393 = vst [vmem:[#allocation2 + $0x28] sm:$0xff] %v377
  %394 = vst [vmem:[#allocation2 + $0x30] sm:$0xff] %v378
  %395 = vst [vmem:[#allocation2 + $0x38] sm:$0xff] %v379
  %396 = vst [vmem:[#allocation2 + $0x40] sm:$0xff] %v380
  %397 = vst [vmem:[#allocation2 + $0x48] sm:$0xff] %v381
  %398 = vst [vmem:[#allocation2 + $0x50] sm:$0xff] %v382
  %399 = vst [vmem:[#allocation2 + $0x58] sm:$0xff] %v383
  %400 = vst [vmem:[#allocation2 + $0x60] sm:$0xff] %v384
  %401 = vst [vmem:[#allocation2 + $0x68] sm:$0xff] %v385
  %402 = vst [vmem:[#allocation2 + $0x70] sm:$0xff] %v386
  %403 = vst [vmem:[#allocation2 + $0x78] sm:$0xff] %v387
  // Predicated region
  $region18: #{custom_backbone_forward.10} parent=0 // pred_check
    %p404 = pneg %p15
  $region19: #{custom_backbone_forward.10} parent=0 // pred_check_branch
    %406 = sbr.rel (%p404) target = $region21
  $region20: #{custom_backbone_forward.10} parent=0 // pred_region
    %v407 = vld [vmem:[#allocation2] sm:$0xff]
    %v408 = vld [vmem:[#allocation2 + $0x8] sm:$0xff]
    %v409 = vld [vmem:[#allocation2 + $0x10] sm:$0xff]
    %v410 = vld [vmem:[#allocation2 + $0x18] sm:$0xff]
    %v411 = vld [vmem:[#allocation2 + $0x20] sm:$0xff]
    %v412 = vld [vmem:[#allocation2 + $0x28] sm:$0xff]
    %v413 = vld [vmem:[#allocation2 + $0x30] sm:$0xff]
    %v414 = vld [vmem:[#allocation2 + $0x38] sm:$0xff]
    %v415 = vld [vmem:[#allocation2 + $0x40] sm:$0xff]
    %v416 = vld [vmem:[#allocation2 + $0x48] sm:$0xff]
    %v417 = vld [vmem:[#allocation2 + $0x50] sm:$0xff]
    %v418 = vld [vmem:[#allocation2 + $0x58] sm:$0xff]
    %v419 = vld [vmem:[#allocation2 + $0x60] sm:$0xff]
    %v420 = vld [vmem:[#allocation2 + $0x68] sm:$0xff]
    %v421 = vld [vmem:[#allocation2 + $0x70] sm:$0xff]
    %v422 = vld [vmem:[#allocation2 + $0x78] sm:$0xff]
    %v423 = vld [vmem:[%s2] sm:$0x1]
    %v425 = vlaneseq
    %v426 = vshrl.u32 %v425, 7
    %v427 = vsub.s32 0, %v426
    %v428 = vrot.slane %v423, %v427
    %v430 = vadd.f32 %v407, %v428
    %v431 = vadd.f32 %v408, %v428
    %v432 = vadd.f32 %v409, %v428
    %v433 = vadd.f32 %v410, %v428
    %v434 = vadd.f32 %v411, %v428
    %v435 = vadd.f32 %v412, %v428
    %v436 = vadd.f32 %v413, %v428
    %v437 = vadd.f32 %v414, %v428
    %v438 = vadd.f32 %v415, %v428
    %v439 = vadd.f32 %v416, %v428
    %v440 = vadd.f32 %v417, %v428
    %v441 = vadd.f32 %v418, %v428
    %v442 = vadd.f32 %v419, %v428
    %v443 = vadd.f32 %v420, %v428
    %v444 = vadd.f32 %v421, %v428
    %v445 = vadd.f32 %v422, %v428
    %v446 = vmax.f32 %v430, 0.0
    %v447 = vmax.f32 %v431, 0.0
    %v448 = vmax.f32 %v432, 0.0
    %v449 = vmax.f32 %v433, 0.0
    %v450 = vmax.f32 %v434, 0.0
    %v451 = vmax.f32 %v435, 0.0
    %v452 = vmax.f32 %v436, 0.0
    %v453 = vmax.f32 %v437, 0.0
    %v454 = vmax.f32 %v438, 0.0
    %v455 = vmax.f32 %v439, 0.0
    %v456 = vmax.f32 %v440, 0.0
    %v457 = vmax.f32 %v441, 0.0
    %v458 = vmax.f32 %v442, 0.0
    %v459 = vmax.f32 %v443, 0.0
    %v460 = vmax.f32 %v444, 0.0
    %v461 = vmax.f32 %v445, 0.0
    %462 = vst [vmem:[%s3] sm:$0xff] %v446
    %463 = vst [vmem:[%s3 + $0x8] sm:$0xff] %v447
    %464 = vst [vmem:[%s3 + $0x10] sm:$0xff] %v448
    %465 = vst [vmem:[%s3 + $0x18] sm:$0xff] %v449
    %466 = vst [vmem:[%s3 + $0x20] sm:$0xff] %v450
    %467 = vst [vmem:[%s3 + $0x28] sm:$0xff] %v451
    %468 = vst [vmem:[%s3 + $0x30] sm:$0xff] %v452
    %469 = vst [vmem:[%s3 + $0x38] sm:$0xff] %v453
    %470 = vst [vmem:[%s3 + $0x40] sm:$0xff] %v454
    %471 = vst [vmem:[%s3 + $0x48] sm:$0xff] %v455
    %472 = vst [vmem:[%s3 + $0x50] sm:$0xff] %v456
    %473 = vst [vmem:[%s3 + $0x58] sm:$0xff] %v457
    %474 = vst [vmem:[%s3 + $0x60] sm:$0xff] %v458
    %475 = vst [vmem:[%s3 + $0x68] sm:$0xff] %v459
    %476 = vst [vmem:[%s3 + $0x70] sm:$0xff] %v460
    %477 = vst [vmem:[%s3 + $0x78] sm:$0xff] %v461
  $region21: #{custom_backbone_forward.10} parent=0 // pred_fallthru
    _
  // Predicated region
  $region22: #{custom_backbone_forward.10} parent=0 // pred_check
    _
  $region23: #{custom_backbone_forward.10} parent=0 // pred_check_branch
    %479 = sbr.rel (0) target = $region25
  $region24: #{custom_backbone_forward.10} parent=0 // pred_region
    _
  $region25: #{custom_backbone_forward.10} parent=0 // pred_fallthru
    _
  // Predicated region
  $region26: #{custom_backbone_forward.10} parent=0 // pred_check
    _
  $region27: #{custom_backbone_forward.10} parent=0 // pred_check_branch
    %481 = sbr.rel (0) target = $region29
  $region28: #{custom_backbone_forward.10} parent=0 // pred_region
    _
  $region29: #{custom_backbone_forward.10} parent=0 // pred_fallthru
    _

// kernel: custom_backbone_forward.9
$region0: #{custom_backbone_forward.9}
  #allocation0 [shape = 'u32[]', space=smem, size = 0x4, offset = 0x4, fixed_abs, tag = 'smem constant byte address 0x4 - core index']
  #allocation1 [shape = 'u32[144,128]{1,0:T(1,128)}', space=vmem, size = 0x12000, scoped, tag = 'internal scratch']
  #allocation2 [shape = 'f32[512,128]{1,0:T(8,128)}', space=vmem, size = 0x40000, scoped, tag = 'scratch operand']
  %s0 = inlined_call_operand.vmem [shape: bf16[512,256], index: 0, kind: input, shape index: {}]
  %s1 = inlined_call_operand.vmem [shape: bf16[256,128], index: 1, kind: input, shape index: {}]
  %s2 = inlined_call_operand.vmem [shape: f32[1,128], index: 2, kind: input, shape index: {}]
  %s3 = inlined_call_operand.vmem [shape: f32[512,128], index: 3, kind: output, shape index: {}]
  %s4 = sld [smem:[#allocation0]]
  $region30: #{custom_backbone_forward.9} parent=0
    _
  %s6 = ssub.s32 1, %s4
  %s7 = scalar_select 0, %s6, %s4
  // Predicated region
  $region2: #{custom_backbone_forward.9} parent=0 // pred_check
    _
  $region3: #{custom_backbone_forward.9} parent=0 // pred_check_branch
    %9 = sbr.rel (0) target = $region5
  $region4: #{custom_backbone_forward.9} parent=0 // pred_region
    _
  $region5: #{custom_backbone_forward.9} parent=0 // pred_fallthru
    _
  // Predicated region
  $region6: #{custom_backbone_forward.9} parent=0 // pred_check
    _
  $region7: #{custom_backbone_forward.9} parent=0 // pred_check_branch
    %11 = sbr.rel (0) target = $region9
  $region8: #{custom_backbone_forward.9} parent=0 // pred_region
    _
  $region9: #{custom_backbone_forward.9} parent=0 // pred_fallthru
    _
  // Predicated region
  $region10: #{custom_backbone_forward.9} parent=0 // pred_check
    _
  $region11: #{custom_backbone_forward.9} parent=0 // pred_check_branch
    %13 = sbr.rel (0) target = $region13
  $region12: #{custom_backbone_forward.9} parent=0 // pred_region
    _
  $region13: #{custom_backbone_forward.9} parent=0 // pred_fallthru
    _
  %p15 = scmp.eq.s32.totalorder 0, 0
  // Predicated region
  $region14: #{custom_backbone_forward.9} parent=0 // pred_check
    %p16 = pneg %p15
  $region15: #{custom_backbone_forward.9} parent=0 // pred_check_branch
    %18 = sbr.rel (%p16) target = $region17
  $region16: #{custom_backbone_forward.9} parent=0 // pred_region
    %19 = vst [vmem:[#allocation2] sm:$0xff] 0.0
    %20 = vst [vmem:[#allocation2 + $0x8] sm:$0xff] 0.0
    %21 = vst [vmem:[#allocation2 + $0x10] sm:$0xff] 0.0
    %22 = vst [vmem:[#allocation2 + $0x18] sm:$0xff] 0.0
    %23 = vst [vmem:[#allocation2 + $0x20] sm:$0xff] 0.0
    %24 = vst [vmem:[#allocation2 + $0x28] sm:$0xff] 0.0
    %25 = vst [vmem:[#allocation2 + $0x30] sm:$0xff] 0.0
    %26 = vst [vmem:[#allocation2 + $0x38] sm:$0xff] 0.0
    %27 = vst [vmem:[#allocation2 + $0x40] sm:$0xff] 0.0
    %28 = vst [vmem:[#allocation2 + $0x48] sm:$0xff] 0.0
    %29 = vst [vmem:[#allocation2 + $0x50] sm:$0xff] 0.0
    %30 = vst [vmem:[#allocation2 + $0x58] sm:$0xff] 0.0
    %31 = vst [vmem:[#allocation2 + $0x60] sm:$0xff] 0.0
    %32 = vst [vmem:[#allocation2 + $0x68] sm:$0xff] 0.0
    %33 = vst [vmem:[#allocation2 + $0x70] sm:$0xff] 0.0
    %34 = vst [vmem:[#allocation2 + $0x78] sm:$0xff] 0.0
    %35 = vst [vmem:[#allocation2 + $0x80] sm:$0xff] 0.0
    %36 = vst [vmem:[#allocation2 + $0x88] sm:$0xff] 0.0
    %37 = vst [vmem:[#allocation2 + $0x90] sm:$0xff] 0.0
    %38 = vst [vmem:[#allocation2 + $0x98] sm:$0xff] 0.0
    %39 = vst [vmem:[#allocation2 + $0xa0] sm:$0xff] 0.0
    %40 = vst [vmem:[#allocation2 + $0xa8] sm:$0xff] 0.0
    %41 = vst [vmem:[#allocation2 + $0xb0] sm:$0xff] 0.0
    %42 = vst [vmem:[#allocation2 + $0xb8] sm:$0xff] 0.0
    %43 = vst [vmem:[#allocation2 + $0xc0] sm:$0xff] 0.0
    %44 = vst [vmem:[#allocation2 + $0xc8] sm:$0xff] 0.0
    %45 = vst [vmem:[#allocation2 + $0xd0] sm:$0xff] 0.0
    %46 = vst [vmem:[#allocation2 + $0xd8] sm:$0xff] 0.0
    %47 = vst [vmem:[#allocation2 + $0xe0] sm:$0xff] 0.0
    %48 = vst [vmem:[#allocation2 + $0xe8] sm:$0xff] 0.0
    %49 = vst [vmem:[#allocation2 + $0xf0] sm:$0xff] 0.0
    %50 = vst [vmem:[#allocation2 + $0xf8] sm:$0xff] 0.0
    %51 = vst [vmem:[#allocation2 + $0x100] sm:$0xff] 0.0
    %52 = vst [vmem:[#allocation2 + $0x108] sm:$0xff] 0.0
    %53 = vst [vmem:[#allocation2 + $0x110] sm:$0xff] 0.0
    %54 = vst [vmem:[#allocation2 + $0x118] sm:$0xff] 0.0
    %55 = vst [vmem:[#allocation2 + $0x120] sm:$0xff] 0.0
    %56 = vst [vmem:[#allocation2 + $0x128] sm:$0xff] 0.0
    %57 = vst [vmem:[#allocation2 + $0x130] sm:$0xff] 0.0
    %58 = vst [vmem:[#allocation2 + $0x138] sm:$0xff] 0.0
    %59 = vst [vmem:[#allocation2 + $0x140] sm:$0xff] 0.0
    %60 = vst [vmem:[#allocation2 + $0x148] sm:$0xff] 0.0
    %61 = vst [vmem:[#allocation2 + $0x150] sm:$0xff] 0.0
    %62 = vst [vmem:[#allocation2 + $0x158] sm:$0xff] 0.0
    %63 = vst [vmem:[#allocation2 + $0x160] sm:$0xff] 0.0
    %64 = vst [vmem:[#allocation2 + $0x168] sm:$0xff] 0.0
    %65 = vst [vmem:[#allocation2 + $0x170] sm:$0xff] 0.0
    %66 = vst [vmem:[#allocation2 + $0x178] sm:$0xff] 0.0
    %67 = vst [vmem:[#allocation2 + $0x180] sm:$0xff] 0.0
    %68 = vst [vmem:[#allocation2 + $0x188] sm:$0xff] 0.0
    %69 = vst [vmem:[#allocation2 + $0x190] sm:$0xff] 0.0
    %70 = vst [vmem:[#allocation2 + $0x198] sm:$0xff] 0.0
    %71 = vst [vmem:[#allocation2 + $0x1a0] sm:$0xff] 0.0
    %72 = vst [vmem:[#allocation2 + $0x1a8] sm:$0xff] 0.0
    %73 = vst [vmem:[#allocation2 + $0x1b0] sm:$0xff] 0.0
    %74 = vst [vmem:[#allocation2 + $0x1b8] sm:$0xff] 0.0
    %75 = vst [vmem:[#allocation2 + $0x1c0] sm:$0xff] 0.0
    %76 = vst [vmem:[#allocation2 + $0x1c8] sm:$0xff] 0.0
    %77 = vst [vmem:[#allocation2 + $0x1d0] sm:$0xff] 0.0
    %78 = vst [vmem:[#allocation2 + $0x1d8] sm:$0xff] 0.0
    %79 = vst [vmem:[#allocation2 + $0x1e0] sm:$0xff] 0.0
    %80 = vst [vmem:[#allocation2 + $0x1e8] sm:$0xff] 0.0
    %81 = vst [vmem:[#allocation2 + $0x1f0] sm:$0xff] 0.0
    %82 = vst [vmem:[#allocation2 + $0x1f8] sm:$0xff] 0.0
  $region17: #{custom_backbone_forward.9} parent=0 // pred_fallthru
    _
  %v83 = vld [vmem:[#allocation2] sm:$0xff]
  %v84 = vld [vmem:[#allocation2 + $0x8] sm:$0xff]
  %v85 = vld [vmem:[#allocation2 + $0x10] sm:$0xff]
  %v86 = vld [vmem:[#allocation2 + $0x18] sm:$0xff]
  %v87 = vld [vmem:[#allocation2 + $0x20] sm:$0xff]
  %v88 = vld [vmem:[#allocation2 + $0x28] sm:$0xff]
  %v89 = vld [vmem:[#allocation2 + $0x30] sm:$0xff]
  %v90 = vld [vmem:[#allocation2 + $0x38] sm:$0xff]
  %v91 = vld [vmem:[#allocation2 + $0x40] sm:$0xff]
  %v92 = vld [vmem:[#allocation2 + $0x48] sm:$0xff]
  %v93 = vld [vmem:[#allocation2 + $0x50] sm:$0xff]
  %v94 = vld [vmem:[#allocation2 + $0x58] sm:$0xff]
  %v95 = vld [vmem:[#allocation2 + $0x60] sm:$0xff]
  %v96 = vld [vmem:[#allocation2 + $0x68] sm:$0xff]
  %v97 = vld [vmem:[#allocation2 + $0x70] sm:$0xff]
  %v98 = vld [vmem:[#allocation2 + $0x78] sm:$0xff]
  %v99 = vld [vmem:[#allocation2 + $0x80] sm:$0xff]
  %v100 = vld [vmem:[#allocation2 + $0x88] sm:$0xff]
  %v101 = vld [vmem:[#allocation2 + $0x90] sm:$0xff]
  %v102 = vld [vmem:[#allocation2 + $0x98] sm:$0xff]
  %v103 = vld [vmem:[#allocation2 + $0xa0] sm:$0xff]
  %v104 = vld [vmem:[#allocation2 + $0xa8] sm:$0xff]
  %v105 = vld [vmem:[#allocation2 + $0xb0] sm:$0xff]
  %v106 = vld [vmem:[#allocation2 + $0xb8] sm:$0xff]
  %v107 = vld [vmem:[#allocation2 + $0xc0] sm:$0xff]
  %v108 = vld [vmem:[#allocation2 + $0xc8] sm:$0xff]
  %v109 = vld [vmem:[#allocation2 + $0xd0] sm:$0xff]
  %v110 = vld [vmem:[#allocation2 + $0xd8] sm:$0xff]
  %v111 = vld [vmem:[#allocation2 + $0xe0] sm:$0xff]
  %v112 = vld [vmem:[#allocation2 + $0xe8] sm:$0xff]
  %v113 = vld [vmem:[#allocation2 + $0xf0] sm:$0xff]
  %v114 = vld [vmem:[#allocation2 + $0xf8] sm:$0xff]
  %v115 = vld [vmem:[#allocation2 + $0x100] sm:$0xff]
  %v116 = vld [vmem:[#allocation2 + $0x108] sm:$0xff]
  %v117 = vld [vmem:[#allocation2 + $0x110] sm:$0xff]
  %v118 = vld [vmem:[#allocation2 + $0x118] sm:$0xff]
  %v119 = vld [vmem:[#allocation2 + $0x120] sm:$0xff]
  %v120 = vld [vmem:[#allocation2 + $0x128] sm:$0xff]
  %v121 = vld [vmem:[#allocation2 + $0x130] sm:$0xff]
  %v122 = vld [vmem:[#allocation2 + $0x138] sm:$0xff]
  %v123 = vld [vmem:[#allocation2 + $0x140] sm:$0xff]
  %v124 = vld [vmem:[#allocation2 + $0x148] sm:$0xff]
  %v125 = vld [vmem:[#allocation2 + $0x150] sm:$0xff]
  %v126 = vld [vmem:[#allocation2 + $0x158] sm:$0xff]
  %v127 = vld [vmem:[#allocation2 + $0x160] sm:$0xff]
  %v128 = vld [vmem:[#allocation2 + $0x168] sm:$0xff]
  %v129 = vld [vmem:[#allocation2 + $0x170] sm:$0xff]
  %v130 = vld [vmem:[#allocation2 + $0x178] sm:$0xff]
  %v131 = vld [vmem:[#allocation2 + $0x180] sm:$0xff]
  %v132 = vld [vmem:[#allocation2 + $0x188] sm:$0xff]
  %v133 = vld [vmem:[#allocation2 + $0x190] sm:$0xff]
  %v134 = vld [vmem:[#allocation2 + $0x198] sm:$0xff]
  %v135 = vld [vmem:[#allocation2 + $0x1a0] sm:$0xff]
  %v136 = vld [vmem:[#allocation2 + $0x1a8] sm:$0xff]
  %v137 = vld [vmem:[#allocation2 + $0x1b0] sm:$0xff]
  %v138 = vld [vmem:[#allocation2 + $0x1b8] sm:$0xff]
  %v139 = vld [vmem:[#allocation2 + $0x1c0] sm:$0xff]
  %v140 = vld [vmem:[#allocation2 + $0x1c8] sm:$0xff]
  %v141 = vld [vmem:[#allocation2 + $0x1d0] sm:$0xff]
  %v142 = vld [vmem:[#allocation2 + $0x1d8] sm:$0xff]
  %v143 = vld [vmem:[#allocation2 + $0x1e0] sm:$0xff]
  %v144 = vld [vmem:[#allocation2 + $0x1e8] sm:$0xff]
  %v145 = vld [vmem:[#allocation2 + $0x1f0] sm:$0xff]
  %v146 = vld [vmem:[#allocation2 + $0x1f8] sm:$0xff]
  %v147 = vld [vmem:[%s0] sm:$0xff]
  %v148 = vld [vmem:[%s0 + $0x8] sm:$0xff]
  %v149 = vld [vmem:[%s0 + $0x10] sm:$0xff]
  %v150 = vld [vmem:[%s0 + $0x18] sm:$0xff]
  %v151 = vld [vmem:[%s0 + $0x20] sm:$0xff]
  %v152 = vld [vmem:[%s0 + $0x28] sm:$0xff]
  %v153 = vld [vmem:[%s0 + $0x30] sm:$0xff]
  %v154 = vld [vmem:[%s0 + $0x38] sm:$0xff]
  %v155 = vld [vmem:[%s0 + $0x40] sm:$0xff]
  %v156 = vld [vmem:[%s0 + $0x48] sm:$0xff]
  %v157 = vld [vmem:[%s0 + $0x50] sm:$0xff]
  %v158 = vld [vmem:[%s0 + $0x58] sm:$0xff]
  %v159 = vld [vmem:[%s0 + $0x60] sm:$0xff]
  %v160 = vld [vmem:[%s0 + $0x68] sm:$0xff]
  %v161 = vld [vmem:[%s0 + $0x70] sm:$0xff]
  %v162 = vld [vmem:[%s0 + $0x78] sm:$0xff]
  %v163 = vld [vmem:[%s0 + $0x80] sm:$0xff]
  %v164 = vld [vmem:[%s0 + $0x88] sm:$0xff]
  %v165 = vld [vmem:[%s0 + $0x90] sm:$0xff]
  %v166 = vld [vmem:[%s0 + $0x98] sm:$0xff]
  %v167 = vld [vmem:[%s0 + $0xa0] sm:$0xff]
  %v168 = vld [vmem:[%s0 + $0xa8] sm:$0xff]
  %v169 = vld [vmem:[%s0 + $0xb0] sm:$0xff]
  %v170 = vld [vmem:[%s0 + $0xb8] sm:$0xff]
  %v171 = vld [vmem:[%s0 + $0xc0] sm:$0xff]
  %v172 = vld [vmem:[%s0 + $0xc8] sm:$0xff]
  %v173 = vld [vmem:[%s0 + $0xd0] sm:$0xff]
  %v174 = vld [vmem:[%s0 + $0xd8] sm:$0xff]
  %v175 = vld [vmem:[%s0 + $0xe0] sm:$0xff]
  %v176 = vld [vmem:[%s0 + $0xe8] sm:$0xff]
  %v177 = vld [vmem:[%s0 + $0xf0] sm:$0xff]
  %v178 = vld [vmem:[%s0 + $0xf8] sm:$0xff]
  %v179 = vld [vmem:[%s0 + $0x100] sm:$0xff]
  %v180 = vld [vmem:[%s0 + $0x108] sm:$0xff]
  %v181 = vld [vmem:[%s0 + $0x110] sm:$0xff]
  %v182 = vld [vmem:[%s0 + $0x118] sm:$0xff]
  %v183 = vld [vmem:[%s0 + $0x120] sm:$0xff]
  %v184 = vld [vmem:[%s0 + $0x128] sm:$0xff]
  %v185 = vld [vmem:[%s0 + $0x130] sm:$0xff]
  %v186 = vld [vmem:[%s0 + $0x138] sm:$0xff]
  %v187 = vld [vmem:[%s0 + $0x140] sm:$0xff]
  %v188 = vld [vmem:[%s0 + $0x148] sm:$0xff]
  %v189 = vld [vmem:[%s0 + $0x150] sm:$0xff]
  %v190 = vld [vmem:[%s0 + $0x158] sm:$0xff]
  %v191 = vld [vmem:[%s0 + $0x160] sm:$0xff]
  %v192 = vld [vmem:[%s0 + $0x168] sm:$0xff]
  %v193 = vld [vmem:[%s0 + $0x170] sm:$0xff]
  %v194 = vld [vmem:[%s0 + $0x178] sm:$0xff]
  %v195 = vld [vmem:[%s0 + $0x180] sm:$0xff]
  %v196 = vld [vmem:[%s0 + $0x188] sm:$0xff]
  %v197 = vld [vmem:[%s0 + $0x190] sm:$0xff]
  %v198 = vld [vmem:[%s0 + $0x198] sm:$0xff]
  %v199 = vld [vmem:[%s0 + $0x1a0] sm:$0xff]
  %v200 = vld [vmem:[%s0 + $0x1a8] sm:$0xff]
  %v201 = vld [vmem:[%s0 + $0x1b0] sm:$0xff]
  %v202 = vld [vmem:[%s0 + $0x1b8] sm:$0xff]
  %v203 = vld [vmem:[%s0 + $0x1c0] sm:$0xff]
  %v204 = vld [vmem:[%s0 + $0x1c8] sm:$0xff]
  %v205 = vld [vmem:[%s0 + $0x1d0] sm:$0xff]
  %v206 = vld [vmem:[%s0 + $0x1d8] sm:$0xff]
  %v207 = vld [vmem:[%s0 + $0x1e0] sm:$0xff]
  %v208 = vld [vmem:[%s0 + $0x1e8] sm:$0xff]
  %v209 = vld [vmem:[%s0 + $0x1f0] sm:$0xff]
  %v210 = vld [vmem:[%s0 + $0x1f8] sm:$0xff]
  %v211 = vld [vmem:[%s1] sm:$0xf]
  %v212 = vld [vmem:[%s1 + $0x4] sm:$0xf]
  %v213 = vld [vmem:[%s1 + $0x8] sm:$0xf]
  %v214 = vld [vmem:[%s1 + $0xc] sm:$0xf]
  %v215 = vld [vmem:[%s1 + $0x10] sm:$0xf]
  %v216 = vld [vmem:[%s1 + $0x14] sm:$0xf]
  %v217 = vld [vmem:[%s1 + $0x18] sm:$0xf]
  %v218 = vld [vmem:[%s1 + $0x1c] sm:$0xf]
  %v219 = vld [vmem:[%s1 + $0x20] sm:$0xf]
  %v220 = vld [vmem:[%s1 + $0x24] sm:$0xf]
  %v221 = vld [vmem:[%s1 + $0x28] sm:$0xf]
  %v222 = vld [vmem:[%s1 + $0x2c] sm:$0xf]
  %v223 = vld [vmem:[%s1 + $0x30] sm:$0xf]
  %v224 = vld [vmem:[%s1 + $0x34] sm:$0xf]
  %v225 = vld [vmem:[%s1 + $0x38] sm:$0xf]
  %v226 = vld [vmem:[%s1 + $0x3c] sm:$0xf]
  %v227 = vld [vmem:[%s1 + $0x40] sm:$0xf]
  %v228 = vld [vmem:[%s1 + $0x44] sm:$0xf]
  %v229 = vld [vmem:[%s1 + $0x48] sm:$0xf]
  %v230 = vld [vmem:[%s1 + $0x4c] sm:$0xf]
  %v231 = vld [vmem:[%s1 + $0x50] sm:$0xf]
  %v232 = vld [vmem:[%s1 + $0x54] sm:$0xf]
  %v233 = vld [vmem:[%s1 + $0x58] sm:$0xf]
  %v234 = vld [vmem:[%s1 + $0x5c] sm:$0xf]
  %v235 = vld [vmem:[%s1 + $0x60] sm:$0xf]
  %v236 = vld [vmem:[%s1 + $0x64] sm:$0xf]
  %v237 = vld [vmem:[%s1 + $0x68] sm:$0xf]
  %v238 = vld [vmem:[%s1 + $0x6c] sm:$0xf]
  %v239 = vld [vmem:[%s1 + $0x70] sm:$0xf]
  %v240 = vld [vmem:[%s1 + $0x74] sm:$0xf]
  %v241 = vld [vmem:[%s1 + $0x78] sm:$0xf]
  %v242 = vld [vmem:[%s1 + $0x7c] sm:$0xf]
  %v307 = vunpack.c.l.b16 %v147
  %v308 = vunpack.c.h.b16 %v147
  %v309 = vunpack.c.l.b16 %v148
  %v310 = vunpack.c.h.b16 %v148
  %v311 = vunpack.c.l.b16 %v149
  %v312 = vunpack.c.h.b16 %v149
  %v313 = vunpack.c.l.b16 %v150
  %v314 = vunpack.c.h.b16 %v150
  %v315 = vunpack.c.l.b16 %v151
  %v316 = vunpack.c.h.b16 %v151
  %v317 = vunpack.c.l.b16 %v152
  %v318 = vunpack.c.h.b16 %v152
  %v319 = vunpack.c.l.b16 %v153
  %v320 = vunpack.c.h.b16 %v153
  %v321 = vunpack.c.l.b16 %v154
  %v322 = vunpack.c.h.b16 %v154
  %v323 = vunpack.c.l.b16 %v155
  %v324 = vunpack.c.h.b16 %v155
  %v325 = vunpack.c.l.b16 %v156
  %v326 = vunpack.c.h.b16 %v156
  %v327 = vunpack.c.l.b16 %v157
  %v328 = vunpack.c.h.b16 %v157
  %v329 = vunpack.c.l.b16 %v158
  %v330 = vunpack.c.h.b16 %v158
  %v331 = vunpack.c.l.b16 %v159
  %v332 = vunpack.c.h.b16 %v159
  %v333 = vunpack.c.l.b16 %v160
  %v334 = vunpack.c.h.b16 %v160
  %v335 = vunpack.c.l.b16 %v161
  %v336 = vunpack.c.h.b16 %v161
  %v337 = vunpack.c.l.b16 %v162
  %v338 = vunpack.c.h.b16 %v162
  %v339 = vunpack.c.l.b16 %v163
  %v340 = vunpack.c.h.b16 %v163
  %v341 = vunpack.c.l.b16 %v164
  %v342 = vunpack.c.h.b16 %v164
  %v343 = vunpack.c.l.b16 %v165
  %v344 = vunpack.c.h.b16 %v165
  %v345 = vunpack.c.l.b16 %v166
  %v346 = vunpack.c.h.b16 %v166
  %v347 = vunpack.c.l.b16 %v167
  %v348 = vunpack.c.h.b16 %v167
  %v349 = vunpack.c.l.b16 %v168
  %v350 = vunpack.c.h.b16 %v168
  %v351 = vunpack.c.l.b16 %v169
  %v352 = vunpack.c.h.b16 %v169
  %v353 = vunpack.c.l.b16 %v170
  %v354 = vunpack.c.h.b16 %v170
  %v355 = vunpack.c.l.b16 %v171
  %v356 = vunpack.c.h.b16 %v171
  %v357 = vunpack.c.l.b16 %v172
  %v358 = vunpack.c.h.b16 %v172
  %v359 = vunpack.c.l.b16 %v173
  %v360 = vunpack.c.h.b16 %v173
  %v361 = vunpack.c.l.b16 %v174
  %v362 = vunpack.c.h.b16 %v174
  %v363 = vunpack.c.l.b16 %v175
  %v364 = vunpack.c.h.b16 %v175
  %v365 = vunpack.c.l.b16 %v176
  %v366 = vunpack.c.h.b16 %v176
  %v367 = vunpack.c.l.b16 %v177
  %v368 = vunpack.c.h.b16 %v177
  %v369 = vunpack.c.l.b16 %v178
  %v370 = vunpack.c.h.b16 %v178
  %v371 = vunpack.c.l.b16 %v179
  %v372 = vunpack.c.h.b16 %v179
  %v373 = vunpack.c.l.b16 %v180
  %v374 = vunpack.c.h.b16 %v180
  %v375 = vunpack.c.l.b16 %v181
  %v376 = vunpack.c.h.b16 %v181
  %v377 = vunpack.c.l.b16 %v182
  %v378 = vunpack.c.h.b16 %v182
  %v379 = vunpack.c.l.b16 %v183
  %v380 = vunpack.c.h.b16 %v183
  %v381 = vunpack.c.l.b16 %v184
  %v382 = vunpack.c.h.b16 %v184
  %v383 = vunpack.c.l.b16 %v185
  %v384 = vunpack.c.h.b16 %v185
  %v385 = vunpack.c.l.b16 %v186
  %v386 = vunpack.c.h.b16 %v186
  %v387 = vunpack.c.l.b16 %v187
  %v388 = vunpack.c.h.b16 %v187
  %v389 = vunpack.c.l.b16 %v188
  %v390 = vunpack.c.h.b16 %v188
  %v391 = vunpack.c.l.b16 %v189
  %v392 = vunpack.c.h.b16 %v189
  %v393 = vunpack.c.l.b16 %v190
  %v394 = vunpack.c.h.b16 %v190
  %v395 = vunpack.c.l.b16 %v191
  %v396 = vunpack.c.h.b16 %v191
  %v397 = vunpack.c.l.b16 %v192
  %v398 = vunpack.c.h.b16 %v192
  %v399 = vunpack.c.l.b16 %v193
  %v400 = vunpack.c.h.b16 %v193
  %v401 = vunpack.c.l.b16 %v194
  %v402 = vunpack.c.h.b16 %v194
  %v403 = vunpack.c.l.b16 %v195
  %v404 = vunpack.c.h.b16 %v195
  %v405 = vunpack.c.l.b16 %v196
  %v406 = vunpack.c.h.b16 %v196
  %v407 = vunpack.c.l.b16 %v197
  %v408 = vunpack.c.h.b16 %v197
  %v409 = vunpack.c.l.b16 %v198
  %v410 = vunpack.c.h.b16 %v198
  %v411 = vunpack.c.l.b16 %v199
  %v412 = vunpack.c.h.b16 %v199
  %v413 = vunpack.c.l.b16 %v200
  %v414 = vunpack.c.h.b16 %v200
  %v415 = vunpack.c.l.b16 %v201
  %v416 = vunpack.c.h.b16 %v201
  %v417 = vunpack.c.l.b16 %v202
  %v418 = vunpack.c.h.b16 %v202
  %v419 = vunpack.c.l.b16 %v203
  %v420 = vunpack.c.h.b16 %v203
  %v421 = vunpack.c.l.b16 %v204
  %v422 = vunpack.c.h.b16 %v204
  %v423 = vunpack.c.l.b16 %v205
  %v424 = vunpack.c.h.b16 %v205
  %v425 = vunpack.c.l.b16 %v206
  %v426 = vunpack.c.h.b16 %v206
  %v427 = vunpack.c.l.b16 %v207
  %v428 = vunpack.c.h.b16 %v207
  %v429 = vunpack.c.l.b16 %v208
  %v430 = vunpack.c.h.b16 %v208
  %v431 = vunpack.c.l.b16 %v209
  %v432 = vunpack.c.h.b16 %v209
  %v433 = vunpack.c.l.b16 %v210
  %v434 = vunpack.c.h.b16 %v210
  %v435 = vpack.c.b16 %v309, %v307
  %v436 = vpack.c.b16 %v310, %v308
  %v437 = vpack.c.b16 %v313, %v311
  %v438 = vpack.c.b16 %v314, %v312
  %v439 = vpack.c.b16 %v317, %v315
  %v440 = vpack.c.b16 %v318, %v316
  %v441 = vpack.c.b16 %v321, %v319
  %v442 = vpack.c.b16 %v322, %v320
  %v443 = vpack.c.b16 %v325, %v323
  %v444 = vpack.c.b16 %v326, %v324
  %v445 = vpack.c.b16 %v329, %v327
  %v446 = vpack.c.b16 %v330, %v328
  %v447 = vpack.c.b16 %v333, %v331
  %v448 = vpack.c.b16 %v334, %v332
  %v449 = vpack.c.b16 %v337, %v335
  %v450 = vpack.c.b16 %v338, %v336
  %v451 = vpack.c.b16 %v341, %v339
  %v452 = vpack.c.b16 %v342, %v340
  %v453 = vpack.c.b16 %v345, %v343
  %v454 = vpack.c.b16 %v346, %v344
  %v455 = vpack.c.b16 %v349, %v347
  %v456 = vpack.c.b16 %v350, %v348
  %v457 = vpack.c.b16 %v353, %v351
  %v458 = vpack.c.b16 %v354, %v352
  %v459 = vpack.c.b16 %v357, %v355
  %v460 = vpack.c.b16 %v358, %v356
  %v461 = vpack.c.b16 %v361, %v359
  %v462 = vpack.c.b16 %v362, %v360
  %v463 = vpack.c.b16 %v365, %v363
  %v464 = vpack.c.b16 %v366, %v364
  %v465 = vpack.c.b16 %v369, %v367
  %v466 = vpack.c.b16 %v370, %v368
  %v467 = vpack.c.b16 %v373, %v371
  %v468 = vpack.c.b16 %v374, %v372
  %v469 = vpack.c.b16 %v377, %v375
  %v470 = vpack.c.b16 %v378, %v376
  %v471 = vpack.c.b16 %v381, %v379
  %v472 = vpack.c.b16 %v382, %v380
  %v473 = vpack.c.b16 %v385, %v383
  %v474 = vpack.c.b16 %v386, %v384
  %v475 = vpack.c.b16 %v389, %v387
  %v476 = vpack.c.b16 %v390, %v388
  %v477 = vpack.c.b16 %v393, %v391
  %v478 = vpack.c.b16 %v394, %v392
  %v479 = vpack.c.b16 %v397, %v395
  %v480 = vpack.c.b16 %v398, %v396
  %v481 = vpack.c.b16 %v401, %v399
  %v482 = vpack.c.b16 %v402, %v400
  %v483 = vpack.c.b16 %v405, %v403
  %v484 = vpack.c.b16 %v406, %v404
  %v485 = vpack.c.b16 %v409, %v407
  %v486 = vpack.c.b16 %v410, %v408
  %v487 = vpack.c.b16 %v413, %v411
  %v488 = vpack.c.b16 %v414, %v412
  %v489 = vpack.c.b16 %v417, %v415
  %v490 = vpack.c.b16 %v418, %v416
  %v491 = vpack.c.b16 %v421, %v419
  %v492 = vpack.c.b16 %v422, %v420
  %v493 = vpack.c.b16 %v425, %v423
  %v494 = vpack.c.b16 %v426, %v424
  %v495 = vpack.c.b16 %v429, %v427
  %v496 = vpack.c.b16 %v430, %v428
  %v497 = vpack.c.b16 %v433, %v431
  %v498 = vpack.c.b16 %v434, %v432
  %v595 = vunpack.c.l.b16 %v211
  %v596 = vunpack.c.l.b16 %v212
  %v597 = vunpack.c.l.b16 %v213
  %v598 = vunpack.c.l.b16 %v214
  %v599 = vunpack.c.l.b16 %v215
  %v600 = vunpack.c.l.b16 %v216
  %v601 = vunpack.c.l.b16 %v217
  %v602 = vunpack.c.l.b16 %v218
  %v603 = vunpack.c.l.b16 %v219
  %v604 = vunpack.c.l.b16 %v220
  %v605 = vunpack.c.l.b16 %v221
  %v606 = vunpack.c.l.b16 %v222
  %v607 = vunpack.c.l.b16 %v223
  %v608 = vunpack.c.l.b16 %v224
  %v609 = vunpack.c.l.b16 %v225
  %v610 = vunpack.c.l.b16 %v226
  %v611 = vunpack.c.l.b16 %v227
  %v612 = vunpack.c.l.b16 %v228
  %v613 = vunpack.c.l.b16 %v229
  %v614 = vunpack.c.l.b16 %v230
  %v615 = vunpack.c.l.b16 %v231
  %v616 = vunpack.c.l.b16 %v232
  %v617 = vunpack.c.l.b16 %v233
  %v618 = vunpack.c.l.b16 %v234
  %v619 = vunpack.c.l.b16 %v235
  %v620 = vunpack.c.l.b16 %v236
  %v621 = vunpack.c.l.b16 %v237
  %v622 = vunpack.c.l.b16 %v238
  %v623 = vunpack.c.l.b16 %v239
  %v624 = vunpack.c.l.b16 %v240
  %v625 = vunpack.c.l.b16 %v241
  %v626 = vunpack.c.l.b16 %v242
  %v627 = vpack.c.b16 %v596, %v595
  %v628 = vpack.c.b16 %v598, %v597
  %v629 = vpack.c.b16 %v600, %v599
  %v630 = vpack.c.b16 %v602, %v601
  %v631 = vpack.c.b16 %v604, %v603
  %v632 = vpack.c.b16 %v606, %v605
  %v633 = vpack.c.b16 %v608, %v607
  %v634 = vpack.c.b16 %v610, %v609
  %v635 = vpack.c.b16 %v612, %v611
  %v636 = vpack.c.b16 %v614, %v613
  %v637 = vpack.c.b16 %v616, %v615
  %v638 = vpack.c.b16 %v618, %v617
  %v639 = vpack.c.b16 %v620, %v619
  %v640 = vpack.c.b16 %v622, %v621
  %v641 = vpack.c.b16 %v624, %v623
  %v642 = vpack.c.b16 %v626, %v625
  %659 = vmatprep.subr.bf16.mxu0 0
  %660 = vmatpush1.bf16.msra.mxu0 %v627
  %661 = vmatprep.subr.bf16.mxu0 0
  %662 = vmatpush1.bf16.msra.mxu0 %v628
  %663 = vmatprep.subr.bf16.mxu0 0
  %664 = vmatpush1.bf16.msra.mxu0 %v629
  %665 = vmatprep.subr.bf16.mxu0 0
  %666 = vmatpush1.bf16.msra.mxu0 %v630
  %667 = vmatprep.subr.bf16.mxu0 0
  %668 = vmatpush1.bf16.msra.mxu0 %v631
  %669 = vmatprep.subr.bf16.mxu0 0
  %670 = vmatpush1.bf16.msra.mxu0 %v632
  %671 = vmatprep.subr.bf16.mxu0 0
  %672 = vmatpush1.bf16.msra.mxu0 %v633
  %673 = vmatprep.subr.bf16.mxu0 0
  %674 = vmatpush1.bf16.msra.mxu0 %v634
  %675 = vmatprep.subr.bf16.mxu0 0
  %676 = vmatpush1.bf16.msra.mxu0 %v635
  %677 = vmatprep.subr.bf16.mxu0 0
  %678 = vmatpush1.bf16.msra.mxu0 %v636
  %679 = vmatprep.subr.bf16.mxu0 0
  %680 = vmatpush1.bf16.msra.mxu0 %v637
  %681 = vmatprep.subr.bf16.mxu0 0
  %682 = vmatpush1.bf16.msra.mxu0 %v638
  %683 = vmatprep.subr.bf16.mxu0 0
  %684 = vmatpush1.bf16.msra.mxu0 %v639
  %685 = vmatprep.subr.bf16.mxu0 0
  %686 = vmatpush1.bf16.msra.mxu0 %v640
  %687 = vmatprep.subr.bf16.mxu0 0
  %688 = vmatpush1.bf16.msra.mxu0 %v641
  %689 = vmatprep.subr.bf16.mxu0 0
  %690 = vmatpush1.bf16.msra.mxu0 %v642
  %691 = vmatprep.mubr.bf16.mxu0 %v436
  %692 = vmatmul.mubr.bf16.gmra.mrb[0].mxu0 %v435
  %v693 = vpop.f32.mrb[0].mxu0
  %v694 = vadd.f32 0.0, %v693
  %v695 = vpop.f32.mrb[0].mxu0
  %v696 = vpop.f32.mrb[0].mxu0
  %v697 = vadd.f32 0.0, %v696
  %v698 = vpop.f32.mrb[0].mxu0
  %699 = vmatprep.mubr.bf16.mxu0 %v438
  %700 = vmatmul.mubr.bf16.gmra.mrb[0].mxu0 %v437
  %v701 = vpop.f32.mrb[0].mxu0
  %v702 = vadd.f32 0.0, %v701
  %v703 = vpop.f32.mrb[0].mxu0
  %v704 = vpop.f32.mrb[0].mxu0
  %v705 = vadd.f32 0.0, %v704
  %v706 = vpop.f32.mrb[0].mxu0
  %707 = vmatprep.mubr.bf16.mxu0 %v440
  %708 = vmatmul.mubr.bf16.gmra.mrb[0].mxu0 %v439
  %v709 = vpop.f32.mrb[0].mxu0
  %v710 = vadd.f32 0.0, %v709
  %v711 = vpop.f32.mrb[0].mxu0
  %v712 = vpop.f32.mrb[0].mxu0
  %v713 = vadd.f32 0.0, %v712
  %v714 = vpop.f32.mrb[0].mxu0
  %715 = vmatprep.mubr.bf16.mxu0 %v442
  %716 = vmatmul.mubr.bf16.gmra.mrb[0].mxu0 %v441
  %v717 = vpop.f32.mrb[0].mxu0
  %v718 = vadd.f32 0.0, %v717
  %v719 = vpop.f32.mrb[0].mxu0
  %v720 = vpop.f32.mrb[0].mxu0
  %v721 = vadd.f32 0.0, %v720
  %v722 = vpop.f32.mrb[0].mxu0
  %723 = vmatprep.mubr.bf16.mxu0 %v444
  %724 = vmatmul.mubr.bf16.gmra.mrb[0].mxu0 %v443
  %v725 = vpop.f32.mrb[0].mxu0
  %v726 = vadd.f32 0.0, %v725
  %v727 = vpop.f32.mrb[0].mxu0
  %v728 = vpop.f32.mrb[0].mxu0
  %v729 = vadd.f32 0.0, %v728
  %v730 = vpop.f32.mrb[0].mxu0
  %731 = vmatprep.mubr.bf16.mxu0 %v446
  %732 = vmatmul.mubr.bf16.gmra.mrb[0].mxu0 %v445
  %v733 = vpop.f32.mrb[0].mxu0
  %v734 = vadd.f32 0.0, %v733
  %v735 = vpop.f32.mrb[0].mxu0
  %v736 = vpop.f32.mrb[0].mxu0
  %v737 = vadd.f32 0.0, %v736
  %v738 = vpop.f32.mrb[0].mxu0
  %739 = vmatprep.mubr.bf16.mxu0 %v448
  %740 = vmatmul.mubr.bf16.gmra.mrb[0].mxu0 %v447
  %v741 = vpop.f32.mrb[0].mxu0
  %v742 = vadd.f32 0.0, %v741
  %v743 = vpop.f32.mrb[0].mxu0
  %v744 = vpop.f32.mrb[0].mxu0
  %v745 = vadd.f32 0.0, %v744
  %v746 = vpop.f32.mrb[0].mxu0
  %747 = vmatprep.mubr.bf16.mxu0 %v450
  %748 = vmatmul.mubr.bf16.gmra.mrb[0].mxu0 %v449
  %v749 = vpop.f32.mrb[0].mxu0
  %v750 = vadd.f32 0.0, %v749
  %v751 = vpop.f32.mrb[0].mxu0
  %v752 = vpop.f32.mrb[0].mxu0
  %v753 = vadd.f32 0.0, %v752
  %v754 = vpop.f32.mrb[0].mxu0
  %755 = vmatprep.mubr.bf16.mxu0 %v452
  %756 = vmatmul.mubr.bf16.gmra.mrb[0].mxu0 %v451
  %v757 = vpop.f32.mrb[0].mxu0
  %v758 = vadd.f32 0.0, %v757
  %v759 = vpop.f32.mrb[0].mxu0
  %v760 = vpop.f32.mrb[0].mxu0
  %v761 = vadd.f32 0.0, %v760
  %v762 = vpop.f32.mrb[0].mxu0
  %763 = vmatprep.mubr.bf16.mxu0 %v454
  %764 = vmatmul.mubr.bf16.gmra.mrb[0].mxu0 %v453
  %v765 = vpop.f32.mrb[0].mxu0
  %v766 = vadd.f32 0.0, %v765
  %v767 = vpop.f32.mrb[0].mxu0
  %v768 = vpop.f32.mrb[0].mxu0
  %v769 = vadd.f32 0.0, %v768
  %v770 = vpop.f32.mrb[0].mxu0
  %771 = vmatprep.mubr.bf16.mxu0 %v456
  %772 = vmatmul.mubr.bf16.gmra.mrb[0].mxu0 %v455
  %v773 = vpop.f32.mrb[0].mxu0
  %v774 = vadd.f32 0.0, %v773
  %v775 = vpop.f32.mrb[0].mxu0
  %v776 = vpop.f32.mrb[0].mxu0
  %v777 = vadd.f32 0.0, %v776
  %v778 = vpop.f32.mrb[0].mxu0
  %779 = vmatprep.mubr.bf16.mxu0 %v458
  %780 = vmatmul.mubr.bf16.gmra.mrb[0].mxu0 %v457
  %v781 = vpop.f32.mrb[0].mxu0
  %v782 = vadd.f32 0.0, %v781
  %v783 = vpop.f32.mrb[0].mxu0
  %v784 = vpop.f32.mrb[0].mxu0
  %v785 = vadd.f32 0.0, %v784
  %v786 = vpop.f32.mrb[0].mxu0
  %787 = vmatprep.mubr.bf16.mxu0 %v460
  %788 = vmatmul.mubr.bf16.gmra.mrb[0].mxu0 %v459
  %v789 = vpop.f32.mrb[0].mxu0
  %v790 = vadd.f32 0.0, %v789
  %v791 = vpop.f32.mrb[0].mxu0
  %v792 = vpop.f32.mrb[0].mxu0
  %v793 = vadd.f32 0.0, %v792
  %v794 = vpop.f32.mrb[0].mxu0
  %795 = vmatprep.mubr.bf16.mxu0 %v462
  %796 = vmatmul.mubr.bf16.gmra.mrb[0].mxu0 %v461
  %v797 = vpop.f32.mrb[0].mxu0
  %v798 = vadd.f32 0.0, %v797
  %v799 = vpop.f32.mrb[0].mxu0
  %v800 = vpop.f32.mrb[0].mxu0
  %v801 = vadd.f32 0.0, %v800
  %v802 = vpop.f32.mrb[0].mxu0
  %803 = vmatprep.mubr.bf16.mxu0 %v464
  %804 = vmatmul.mubr.bf16.gmra.mrb[0].mxu0 %v463
  %v805 = vpop.f32.mrb[0].mxu0
  %v806 = vadd.f32 0.0, %v805
  %v807 = vpop.f32.mrb[0].mxu0
  %v808 = vpop.f32.mrb[0].mxu0
  %v809 = vadd.f32 0.0, %v808
  %v810 = vpop.f32.mrb[0].mxu0
  %811 = vmatprep.mubr.bf16.mxu0 %v466
  %812 = vmatmul.mubr.bf16.gmra.mrb[0].mxu0 %v465
  %v813 = vpop.f32.mrb[0].mxu0
  %v814 = vadd.f32 0.0, %v813
  %v815 = vpop.f32.mrb[0].mxu0
  %v816 = vpop.f32.mrb[0].mxu0
  %v817 = vadd.f32 0.0, %v816
  %v818 = vpop.f32.mrb[0].mxu0
  %819 = vmatprep.mubr.bf16.mxu0 %v468
  %820 = vmatmul.mubr.bf16.gmra.mrb[0].mxu0 %v467
  %v821 = vpop.f32.mrb[0].mxu0
  %v822 = vadd.f32 0.0, %v821
  %v823 = vpop.f32.mrb[0].mxu0
  %v824 = vpop.f32.mrb[0].mxu0
  %v825 = vadd.f32 0.0, %v824
  %v826 = vpop.f32.mrb[0].mxu0
  %827 = vmatprep.mubr.bf16.mxu0 %v470
  %828 = vmatmul.mubr.bf16.gmra.mrb[0].mxu0 %v469
  %v829 = vpop.f32.mrb[0].mxu0
  %v830 = vadd.f32 0.0, %v829
  %v831 = vpop.f32.mrb[0].mxu0
  %v832 = vpop.f32.mrb[0].mxu0
  %v833 = vadd.f32 0.0, %v832
  %v834 = vpop.f32.mrb[0].mxu0
  %835 = vmatprep.mubr.bf16.mxu0 %v472
  %836 = vmatmul.mubr.bf16.gmra.mrb[0].mxu0 %v471
  %v837 = vpop.f32.mrb[0].mxu0
  %v838 = vadd.f32 0.0, %v837
  %v839 = vpop.f32.mrb[0].mxu0
  %v840 = vpop.f32.mrb[0].mxu0
  %v841 = vadd.f32 0.0, %v840
  %v842 = vpop.f32.mrb[0].mxu0
  %843 = vmatprep.mubr.bf16.mxu0 %v474
  %844 = vmatmul.mubr.bf16.gmra.mrb[0].mxu0 %v473
  %v845 = vpop.f32.mrb[0].mxu0
  %v846 = vadd.f32 0.0, %v845
  %v847 = vpop.f32.mrb[0].mxu0
  %v848 = vpop.f32.mrb[0].mxu0
  %v849 = vadd.f32 0.0, %v848
  %v850 = vpop.f32.mrb[0].mxu0
  %851 = vmatprep.mubr.bf16.mxu0 %v476
  %852 = vmatmul.mubr.bf16.gmra.mrb[0].mxu0 %v475
  %v853 = vpop.f32.mrb[0].mxu0
  %v854 = vadd.f32 0.0, %v853
  %v855 = vpop.f32.mrb[0].mxu0
  %v856 = vpop.f32.mrb[0].mxu0
  %v857 = vadd.f32 0.0, %v856
  %v858 = vpop.f32.mrb[0].mxu0
  %859 = vmatprep.mubr.bf16.mxu0 %v478
  %860 = vmatmul.mubr.bf16.gmra.mrb[0].mxu0 %v477
  %v861 = vpop.f32.mrb[0].mxu0
  %v862 = vadd.f32 0.0, %v861
  %v863 = vpop.f32.mrb[0].mxu0
  %v864 = vpop.f32.mrb[0].mxu0
  %v865 = vadd.f32 0.0, %v864
  %v866 = vpop.f32.mrb[0].mxu0
  %867 = vmatprep.mubr.bf16.mxu0 %v480
  %868 = vmatmul.mubr.bf16.gmra.mrb[0].mxu0 %v479
  %v869 = vpop.f32.mrb[0].mxu0
  %v870 = vadd.f32 0.0, %v869
  %v871 = vpop.f32.mrb[0].mxu0
  %v872 = vpop.f32.mrb[0].mxu0
  %v873 = vadd.f32 0.0, %v872
  %v874 = vpop.f32.mrb[0].mxu0
  %875 = vmatprep.mubr.bf16.mxu0 %v482
  %876 = vmatmul.mubr.bf16.gmra.mrb[0].mxu0 %v481
  %v877 = vpop.f32.mrb[0].mxu0
  %v878 = vadd.f32 0.0, %v877
  %v879 = vpop.f32.mrb[0].mxu0
  %v880 = vpop.f32.mrb[0].mxu0
  %v881 = vadd.f32 0.0, %v880
  %v882 = vpop.f32.mrb[0].mxu0
  %883 = vmatprep.mubr.bf16.mxu0 %v484
  %884 = vmatmul.mubr.bf16.gmra.mrb[0].mxu0 %v483
  %v885 = vpop.f32.mrb[0].mxu0
  %v886 = vadd.f32 0.0, %v885
  %v887 = vpop.f32.mrb[0].mxu0
  %v888 = vpop.f32.mrb[0].mxu0
  %v889 = vadd.f32 0.0, %v888
  %v890 = vpop.f32.mrb[0].mxu0
  %891 = vmatprep.mubr.bf16.mxu0 %v486
  %892 = vmatmul.mubr.bf16.gmra.mrb[0].mxu0 %v485
  %v893 = vpop.f32.mrb[0].mxu0
  %v894 = vadd.f32 0.0, %v893
  %v895 = vpop.f32.mrb[0].mxu0
  %v896 = vpop.f32.mrb[0].mxu0
  %v897 = vadd.f32 0.0, %v896
  %v898 = vpop.f32.mrb[0].mxu0
  %899 = vmatprep.mubr.bf16.mxu0 %v488
  %900 = vmatmul.mubr.bf16.gmra.mrb[0].mxu0 %v487
  %v901 = vpop.f32.mrb[0].mxu0
  %v902 = vadd.f32 0.0, %v901
  %v903 = vpop.f32.mrb[0].mxu0
  %v904 = vpop.f32.mrb[0].mxu0
  %v905 = vadd.f32 0.0, %v904
  %v906 = vpop.f32.mrb[0].mxu0
  %907 = vmatprep.mubr.bf16.mxu0 %v490
  %908 = vmatmul.mubr.bf16.gmra.mrb[0].mxu0 %v489
  %v909 = vpop.f32.mrb[0].mxu0
  %v910 = vadd.f32 0.0, %v909
  %v911 = vpop.f32.mrb[0].mxu0
  %v912 = vpop.f32.mrb[0].mxu0
  %v913 = vadd.f32 0.0, %v912
  %v914 = vpop.f32.mrb[0].mxu0
  %915 = vmatprep.mubr.bf16.mxu0 %v492
  %916 = vmatmul.mubr.bf16.gmra.mrb[0].mxu0 %v491
  %v917 = vpop.f32.mrb[0].mxu0
  %v918 = vadd.f32 0.0, %v917
  %v919 = vpop.f32.mrb[0].mxu0
  %v920 = vpop.f32.mrb[0].mxu0
  %v921 = vadd.f32 0.0, %v920
  %v922 = vpop.f32.mrb[0].mxu0
  %923 = vmatprep.mubr.bf16.mxu0 %v494
  %924 = vmatmul.mubr.bf16.gmra.mrb[0].mxu0 %v493
  %v925 = vpop.f32.mrb[0].mxu0
  %v926 = vadd.f32 0.0, %v925
  %v927 = vpop.f32.mrb[0].mxu0
  %v928 = vpop.f32.mrb[0].mxu0
  %v929 = vadd.f32 0.0, %v928
  %v930 = vpop.f32.mrb[0].mxu0
  %931 = vmatprep.mubr.bf16.mxu0 %v496
  %932 = vmatmul.mubr.bf16.gmra.mrb[0].mxu0 %v495
  %v933 = vpop.f32.mrb[0].mxu0
  %v934 = vadd.f32 0.0, %v933
  %v935 = vpop.f32.mrb[0].mxu0
  %v936 = vpop.f32.mrb[0].mxu0
  %v937 = vadd.f32 0.0, %v936
  %v938 = vpop.f32.mrb[0].mxu0
  %939 = vmatprep.mubr.bf16.mxu0 %v498
  %940 = vmatmul.mubr.bf16.gmra.mrb[0].mxu0 %v497
  %v941 = vpop.f32.mrb[0].mxu0
  %v942 = vadd.f32 0.0, %v941
  %v943 = vpop.f32.mrb[0].mxu0
  %v944 = vpop.f32.mrb[0].mxu0
  %v945 = vadd.f32 0.0, %v944
  %v946 = vpop.f32.mrb[0].mxu0
  %947 = vdwg.mxu0
  %v948 = vadd.f32 %v83, %v694
  %v949 = vadd.f32 %v84, %v697
  %v950 = vadd.f32 %v85, %v702
  %v951 = vadd.f32 %v86, %v705
  %v952 = vadd.f32 %v87, %v710
  %v953 = vadd.f32 %v88, %v713
  %v954 = vadd.f32 %v89, %v718
  %v955 = vadd.f32 %v90, %v721
  %v956 = vadd.f32 %v91, %v726
  %v957 = vadd.f32 %v92, %v729
  %v958 = vadd.f32 %v93, %v734
  %v959 = vadd.f32 %v94, %v737
  %v960 = vadd.f32 %v95, %v742
  %v961 = vadd.f32 %v96, %v745
  %v962 = vadd.f32 %v97, %v750
  %v963 = vadd.f32 %v98, %v753
  %v964 = vadd.f32 %v99, %v758
  %v965 = vadd.f32 %v100, %v761
  %v966 = vadd.f32 %v101, %v766
  %v967 = vadd.f32 %v102, %v769
  %v968 = vadd.f32 %v103, %v774
  %v969 = vadd.f32 %v104, %v777
  %v970 = vadd.f32 %v105, %v782
  %v971 = vadd.f32 %v106, %v785
  %v972 = vadd.f32 %v107, %v790
  %v973 = vadd.f32 %v108, %v793
  %v974 = vadd.f32 %v109, %v798
  %v975 = vadd.f32 %v110, %v801
  %v976 = vadd.f32 %v111, %v806
  %v977 = vadd.f32 %v112, %v809
  %v978 = vadd.f32 %v113, %v814
  %v979 = vadd.f32 %v114, %v817
  %v980 = vadd.f32 %v115, %v822
  %v981 = vadd.f32 %v116, %v825
  %v982 = vadd.f32 %v117, %v830
  %v983 = vadd.f32 %v118, %v833
  %v984 = vadd.f32 %v119, %v838
  %v985 = vadd.f32 %v120, %v841
  %v986 = vadd.f32 %v121, %v846
  %v987 = vadd.f32 %v122, %v849
  %v988 = vadd.f32 %v123, %v854
  %v989 = vadd.f32 %v124, %v857
  %v990 = vadd.f32 %v125, %v862
  %v991 = vadd.f32 %v126, %v865
  %v992 = vadd.f32 %v127, %v870
  %v993 = vadd.f32 %v128, %v873
  %v994 = vadd.f32 %v129, %v878
  %v995 = vadd.f32 %v130, %v881
  %v996 = vadd.f32 %v131, %v886
  %v997 = vadd.f32 %v132, %v889
  %v998 = vadd.f32 %v133, %v894
  %v999 = vadd.f32 %v134, %v897
  %v1000 = vadd.f32 %v135, %v902
  %v1001 = vadd.f32 %v136, %v905
  %v1002 = vadd.f32 %v137, %v910
  %v1003 = vadd.f32 %v138, %v913
  %v1004 = vadd.f32 %v139, %v918
  %v1005 = vadd.f32 %v140, %v921
  %v1006 = vadd.f32 %v141, %v926
  %v1007 = vadd.f32 %v142, %v929
  %v1008 = vadd.f32 %v143, %v934
  %v1009 = vadd.f32 %v144, %v937
  %v1010 = vadd.f32 %v145, %v942
  %v1011 = vadd.f32 %v146, %v945
  %1012 = vst [vmem:[#allocation2] sm:$0xff] %v948
  %1013 = vst [vmem:[#allocation2 + $0x8] sm:$0xff] %v949
  %1014 = vst [vmem:[#allocation2 + $0x10] sm:$0xff] %v950
  %1015 = vst [vmem:[#allocation2 + $0x18] sm:$0xff] %v951
  %1016 = vst [vmem:[#allocation2 + $0x20] sm:$0xff] %v952
  %1017 = vst [vmem:[#allocation2 + $0x28] sm:$0xff] %v953
  %1018 = vst [vmem:[#allocation2 + $0x30] sm:$0xff] %v954
  %1019 = vst [vmem:[#allocation2 + $0x38] sm:$0xff] %v955
  %1020 = vst [vmem:[#allocation2 + $0x40] sm:$0xff] %v956
  %1021 = vst [vmem:[#allocation2 + $0x48] sm:$0xff] %v957
  %1022 = vst [vmem:[#allocation2 + $0x50] sm:$0xff] %v958
  %1023 = vst [vmem:[#allocation2 + $0x58] sm:$0xff] %v959
  %1024 = vst [vmem:[#allocation2 + $0x60] sm:$0xff] %v960
  %1025 = vst [vmem:[#allocation2 + $0x68] sm:$0xff] %v961
  %1026 = vst [vmem:[#allocation2 + $0x70] sm:$0xff] %v962
  %1027 = vst [vmem:[#allocation2 + $0x78] sm:$0xff] %v963
  %1028 = vst [vmem:[#allocation2 + $0x80] sm:$0xff] %v964
  %1029 = vst [vmem:[#allocation2 + $0x88] sm:$0xff] %v965
  %1030 = vst [vmem:[#allocation2 + $0x90] sm:$0xff] %v966
  %1031 = vst [vmem:[#allocation2 + $0x98] sm:$0xff] %v967
  %1032 = vst [vmem:[#allocation2 + $0xa0] sm:$0xff] %v968
  %1033 = vst [vmem:[#allocation2 + $0xa8] sm:$0xff] %v969
  %1034 = vst [vmem:[#allocation2 + $0xb0] sm:$0xff] %v970
  %1035 = vst [vmem:[#allocation2 + $0xb8] sm:$0xff] %v971
  %1036 = vst [vmem:[#allocation2 + $0xc0] sm:$0xff] %v972
  %1037 = vst [vmem:[#allocation2 + $0xc8] sm:$0xff] %v973
  %1038 = vst [vmem:[#allocation2 + $0xd0] sm:$0xff] %v974
  %1039 = vst [vmem:[#allocation2 + $0xd8] sm:$0xff] %v975
  %1040 = vst [vmem:[#allocation2 + $0xe0] sm:$0xff] %v976
  %1041 = vst [vmem:[#allocation2 + $0xe8] sm:$0xff] %v977
  %1042 = vst [vmem:[#allocation2 + $0xf0] sm:$0xff] %v978
  %1043 = vst [vmem:[#allocation2 + $0xf8] sm:$0xff] %v979
  %1044 = vst [vmem:[#allocation2 + $0x100] sm:$0xff] %v980
  %1045 = vst [vmem:[#allocation2 + $0x108] sm:$0xff] %v981
  %1046 = vst [vmem:[#allocation2 + $0x110] sm:$0xff] %v982
  %1047 = vst [vmem:[#allocation2 + $0x118] sm:$0xff] %v983
  %1048 = vst [vmem:[#allocation2 + $0x120] sm:$0xff] %v984
  %1049 = vst [vmem:[#allocation2 + $0x128] sm:$0xff] %v985
  %1050 = vst [vmem:[#allocation2 + $0x130] sm:$0xff] %v986
  %1051 = vst [vmem:[#allocation2 + $0x138] sm:$0xff] %v987
  %1052 = vst [vmem:[#allocation2 + $0x140] sm:$0xff] %v988
  %1053 = vst [vmem:[#allocation2 + $0x148] sm:$0xff] %v989
  %1054 = vst [vmem:[#allocation2 + $0x150] sm:$0xff] %v990
  %1055 = vst [vmem:[#allocation2 + $0x158] sm:$0xff] %v991
  %1056 = vst [vmem:[#allocation2 + $0x160] sm:$0xff] %v992
  %1057 = vst [vmem:[#allocation2 + $0x168] sm:$0xff] %v993
  %1058 = vst [vmem:[#allocation2 + $0x170] sm:$0xff] %v994
  %1059 = vst [vmem:[#allocation2 + $0x178] sm:$0xff] %v995
  %1060 = vst [vmem:[#allocation2 + $0x180] sm:$0xff] %v996
  %1061 = vst [vmem:[#allocation2 + $0x188] sm:$0xff] %v997
  %1062 = vst [vmem:[#allocation2 + $0x190] sm:$0xff] %v998
  %1063 = vst [vmem:[#allocation2 + $0x198] sm:$0xff] %v999
  %1064 = vst [vmem:[#allocation2 + $0x1a0] sm:$0xff] %v1000
  %1065 = vst [vmem:[#allocation2 + $0x1a8] sm:$0xff] %v1001
  %1066 = vst [vmem:[#allocation2 + $0x1b0] sm:$0xff] %v1002
  %1067 = vst [vmem:[#allocation2 + $0x1b8] sm:$0xff] %v1003
  %1068 = vst [vmem:[#allocation2 + $0x1c0] sm:$0xff] %v1004
  %1069 = vst [vmem:[#allocation2 + $0x1c8] sm:$0xff] %v1005
  %1070 = vst [vmem:[#allocation2 + $0x1d0] sm:$0xff] %v1006
  %1071 = vst [vmem:[#allocation2 + $0x1d8] sm:$0xff] %v1007
  %1072 = vst [vmem:[#allocation2 + $0x1e0] sm:$0xff] %v1008
  %1073 = vst [vmem:[#allocation2 + $0x1e8] sm:$0xff] %v1009
  %1074 = vst [vmem:[#allocation2 + $0x1f0] sm:$0xff] %v1010
  %1075 = vst [vmem:[#allocation2 + $0x1f8] sm:$0xff] %v1011
  // Predicated region
  $region18: #{custom_backbone_forward.9} parent=0 // pred_check
    %p1076 = pneg %p15
  $region19: #{custom_backbone_forward.9} parent=0 // pred_check_branch
    %1078 = sbr.rel (%p1076) target = $region21
  $region20: #{custom_backbone_forward.9} parent=0 // pred_region
    %v1079 = vld [vmem:[#allocation2] sm:$0xff]
    %v1080 = vld [vmem:[#allocation2 + $0x8] sm:$0xff]
    %v1081 = vld [vmem:[#allocation2 + $0x10] sm:$0xff]
    %v1082 = vld [vmem:[#allocation2 + $0x18] sm:$0xff]
    %v1083 = vld [vmem:[#allocation2 + $0x20] sm:$0xff]
    %v1084 = vld [vmem:[#allocation2 + $0x28] sm:$0xff]
    %v1085 = vld [vmem:[#allocation2 + $0x30] sm:$0xff]
    %v1086 = vld [vmem:[#allocation2 + $0x38] sm:$0xff]
    %v1087 = vld [vmem:[#allocation2 + $0x40] sm:$0xff]
    %v1088 = vld [vmem:[#allocation2 + $0x48] sm:$0xff]
    %v1089 = vld [vmem:[#allocation2 + $0x50] sm:$0xff]
    %v1090 = vld [vmem:[#allocation2 + $0x58] sm:$0xff]
    %v1091 = vld [vmem:[#allocation2 + $0x60] sm:$0xff]
    %v1092 = vld [vmem:[#allocation2 + $0x68] sm:$0xff]
    %v1093 = vld [vmem:[#allocation2 + $0x70] sm:$0xff]
    %v1094 = vld [vmem:[#allocation2 + $0x78] sm:$0xff]
    %v1095 = vld [vmem:[#allocation2 + $0x80] sm:$0xff]
    %v1096 = vld [vmem:[#allocation2 + $0x88] sm:$0xff]
    %v1097 = vld [vmem:[#allocation2 + $0x90] sm:$0xff]
    %v1098 = vld [vmem:[#allocation2 + $0x98] sm:$0xff]
    %v1099 = vld [vmem:[#allocation2 + $0xa0] sm:$0xff]
    %v1100 = vld [vmem:[#allocation2 + $0xa8] sm:$0xff]
    %v1101 = vld [vmem:[#allocation2 + $0xb0] sm:$0xff]
    %v1102 = vld [vmem:[#allocation2 + $0xb8] sm:$0xff]
    %v1103 = vld [vmem:[#allocation2 + $0xc0] sm:$0xff]
    %v1104 = vld [vmem:[#allocation2 + $0xc8] sm:$0xff]
    %v1105 = vld [vmem:[#allocation2 + $0xd0] sm:$0xff]
    %v1106 = vld [vmem:[#allocation2 + $0xd8] sm:$0xff]
    %v1107 = vld [vmem:[#allocation2 + $0xe0] sm:$0xff]
    %v1108 = vld [vmem:[#allocation2 + $0xe8] sm:$0xff]
    %v1109 = vld [vmem:[#allocation2 + $0xf0] sm:$0xff]
    %v1110 = vld [vmem:[#allocation2 + $0xf8] sm:$0xff]
    %v1111 = vld [vmem:[#allocation2 + $0x100] sm:$0xff]
    %v1112 = vld [vmem:[#allocation2 + $0x108] sm:$0xff]
    %v1113 = vld [vmem:[#allocation2 + $0x110] sm:$0xff]
    %v1114 = vld [vmem:[#allocation2 + $0x118] sm:$0xff]
    %v1115 = vld [vmem:[#allocation2 + $0x120] sm:$0xff]
    %v1116 = vld [vmem:[#allocation2 + $0x128] sm:$0xff]
    %v1117 = vld [vmem:[#allocation2 + $0x130] sm:$0xff]
    %v1118 = vld [vmem:[#allocation2 + $0x138] sm:$0xff]
    %v1119 = vld [vmem:[#allocation2 + $0x140] sm:$0xff]
    %v1120 = vld [vmem:[#allocation2 + $0x148] sm:$0xff]
    %v1121 = vld [vmem:[#allocation2 + $0x150] sm:$0xff]
    %v1122 = vld [vmem:[#allocation2 + $0x158] sm:$0xff]
    %v1123 = vld [vmem:[#allocation2 + $0x160] sm:$0xff]
    %v1124 = vld [vmem:[#allocation2 + $0x168] sm:$0xff]
    %v1125 = vld [vmem:[#allocation2 + $0x170] sm:$0xff]
    %v1126 = vld [vmem:[#allocation2 + $0x178] sm:$0xff]
    %v1127 = vld [vmem:[#allocation2 + $0x180] sm:$0xff]
    %v1128 = vld [vmem:[#allocation2 + $0x188] sm:$0xff]
    %v1129 = vld [vmem:[#allocation2 + $0x190] sm:$0xff]
    %v1130 = vld [vmem:[#allocation2 + $0x198] sm:$0xff]
    %v1131 = vld [vmem:[#allocation2 + $0x1a0] sm:$0xff]
    %v1132 = vld [vmem:[#allocation2 + $0x1a8] sm:$0xff]
    %v1133 = vld [vmem:[#allocation2 + $0x1b0] sm:$0xff]
    %v1134 = vld [vmem:[#allocation2 + $0x1b8] sm:$0xff]
    %v1135 = vld [vmem:[#allocation2 + $0x1c0] sm:$0xff]
    %v1136 = vld [vmem:[#allocation2 + $0x1c8] sm:$0xff]
    %v1137 = vld [vmem:[#allocation2 + $0x1d0] sm:$0xff]
    %v1138 = vld [vmem:[#allocation2 + $0x1d8] sm:$0xff]
    %v1139 = vld [vmem:[#allocation2 + $0x1e0] sm:$0xff]
    %v1140 = vld [vmem:[#allocation2 + $0x1e8] sm:$0xff]
    %v1141 = vld [vmem:[#allocation2 + $0x1f0] sm:$0xff]
    %v1142 = vld [vmem:[#allocation2 + $0x1f8] sm:$0xff]
    %v1143 = vld [vmem:[%s2] sm:$0x1]
    %v1145 = vlaneseq
    %v1146 = vshrl.u32 %v1145, 7
    %v1147 = vsub.s32 0, %v1146
    %v1148 = vrot.slane %v1143, %v1147
    %v1150 = vadd.f32 %v1079, %v1148
    %v1151 = vadd.f32 %v1080, %v1148
    %v1152 = vadd.f32 %v1081, %v1148
    %v1153 = vadd.f32 %v1082, %v1148
    %v1154 = vadd.f32 %v1083, %v1148
    %v1155 = vadd.f32 %v1084, %v1148
    %v1156 = vadd.f32 %v1085, %v1148
    %v1157 = vadd.f32 %v1086, %v1148
    %v1158 = vadd.f32 %v1087, %v1148
    %v1159 = vadd.f32 %v1088, %v1148
    %v1160 = vadd.f32 %v1089, %v1148
    %v1161 = vadd.f32 %v1090, %v1148
    %v1162 = vadd.f32 %v1091, %v1148
    %v1163 = vadd.f32 %v1092, %v1148
    %v1164 = vadd.f32 %v1093, %v1148
    %v1165 = vadd.f32 %v1094, %v1148
    %v1166 = vadd.f32 %v1095, %v1148
    %v1167 = vadd.f32 %v1096, %v1148
    %v1168 = vadd.f32 %v1097, %v1148
    %v1169 = vadd.f32 %v1098, %v1148
    %v1170 = vadd.f32 %v1099, %v1148
    %v1171 = vadd.f32 %v1100, %v1148
    %v1172 = vadd.f32 %v1101, %v1148
    %v1173 = vadd.f32 %v1102, %v1148
    %v1174 = vadd.f32 %v1103, %v1148
    %v1175 = vadd.f32 %v1104, %v1148
    %v1176 = vadd.f32 %v1105, %v1148
    %v1177 = vadd.f32 %v1106, %v1148
    %v1178 = vadd.f32 %v1107, %v1148
    %v1179 = vadd.f32 %v1108, %v1148
    %v1180 = vadd.f32 %v1109, %v1148
    %v1181 = vadd.f32 %v1110, %v1148
    %v1182 = vadd.f32 %v1111, %v1148
    %v1183 = vadd.f32 %v1112, %v1148
    %v1184 = vadd.f32 %v1113, %v1148
    %v1185 = vadd.f32 %v1114, %v1148
    %v1186 = vadd.f32 %v1115, %v1148
    %v1187 = vadd.f32 %v1116, %v1148
    %v1188 = vadd.f32 %v1117, %v1148
    %v1189 = vadd.f32 %v1118, %v1148
    %v1190 = vadd.f32 %v1119, %v1148
    %v1191 = vadd.f32 %v1120, %v1148
    %v1192 = vadd.f32 %v1121, %v1148
    %v1193 = vadd.f32 %v1122, %v1148
    %v1194 = vadd.f32 %v1123, %v1148
    %v1195 = vadd.f32 %v1124, %v1148
    %v1196 = vadd.f32 %v1125, %v1148
    %v1197 = vadd.f32 %v1126, %v1148
    %v1198 = vadd.f32 %v1127, %v1148
    %v1199 = vadd.f32 %v1128, %v1148
    %v1200 = vadd.f32 %v1129, %v1148
    %v1201 = vadd.f32 %v1130, %v1148
    %v1202 = vadd.f32 %v1131, %v1148
    %v1203 = vadd.f32 %v1132, %v1148
    %v1204 = vadd.f32 %v1133, %v1148
    %v1205 = vadd.f32 %v1134, %v1148
    %v1206 = vadd.f32 %v1135, %v1148
    %v1207 = vadd.f32 %v1136, %v1148
    %v1208 = vadd.f32 %v1137, %v1148
    %v1209 = vadd.f32 %v1138, %v1148
    %v1210 = vadd.f32 %v1139, %v1148
    %v1211 = vadd.f32 %v1140, %v1148
    %v1212 = vadd.f32 %v1141, %v1148
    %v1213 = vadd.f32 %v1142, %v1148
    %v1214 = vmax.f32 %v1150, 0.0
    %v1215 = vmax.f32 %v1151, 0.0
    %v1216 = vmax.f32 %v1152, 0.0
    %v1217 = vmax.f32 %v1153, 0.0
    %v1218 = vmax.f32 %v1154, 0.0
    %v1219 = vmax.f32 %v1155, 0.0
    %v1220 = vmax.f32 %v1156, 0.0
    %v1221 = vmax.f32 %v1157, 0.0
    %v1222 = vmax.f32 %v1158, 0.0
    %v1223 = vmax.f32 %v1159, 0.0
    %v1224 = vmax.f32 %v1160, 0.0
    %v1225 = vmax.f32 %v1161, 0.0
    %v1226 = vmax.f32 %v1162, 0.0
    %v1227 = vmax.f32 %v1163, 0.0
    %v1228 = vmax.f32 %v1164, 0.0
    %v1229 = vmax.f32 %v1165, 0.0
    %v1230 = vmax.f32 %v1166, 0.0
    %v1231 = vmax.f32 %v1167, 0.0
    %v1232 = vmax.f32 %v1168, 0.0
    %v1233 = vmax.f32 %v1169, 0.0
    %v1234 = vmax.f32 %v1170, 0.0
    %v1235 = vmax.f32 %v1171, 0.0
    %v1236 = vmax.f32 %v1172, 0.0
    %v1237 = vmax.f32 %v1173, 0.0
    %v1238 = vmax.f32 %v1174, 0.0
    %v1239 = vmax.f32 %v1175, 0.0
    %v1240 = vmax.f32 %v1176, 0.0
    %v1241 = vmax.f32 %v1177, 0.0
    %v1242 = vmax.f32 %v1178, 0.0
    %v1243 = vmax.f32 %v1179, 0.0
    %v1244 = vmax.f32 %v1180, 0.0
    %v1245 = vmax.f32 %v1181, 0.0
    %v1246 = vmax.f32 %v1182, 0.0
    %v1247 = vmax.f32 %v1183, 0.0
    %v1248 = vmax.f32 %v1184, 0.0
    %v1249 = vmax.f32 %v1185, 0.0
    %v1250 = vmax.f32 %v1186, 0.0
    %v1251 = vmax.f32 %v1187, 0.0
    %v1252 = vmax.f32 %v1188, 0.0
    %v1253 = vmax.f32 %v1189, 0.0
    %v1254 = vmax.f32 %v1190, 0.0
    %v1255 = vmax.f32 %v1191, 0.0
    %v1256 = vmax.f32 %v1192, 0.0
    %v1257 = vmax.f32 %v1193, 0.0
    %v1258 = vmax.f32 %v1194, 0.0
    %v1259 = vmax.f32 %v1195, 0.0
    %v1260 = vmax.f32 %v1196, 0.0
    %v1261 = vmax.f32 %v1197, 0.0
    %v1262 = vmax.f32 %v1198, 0.0
    %v1263 = vmax.f32 %v1199, 0.0
    %v1264 = vmax.f32 %v1200, 0.0
    %v1265 = vmax.f32 %v1201, 0.0
    %v1266 = vmax.f32 %v1202, 0.0
    %v1267 = vmax.f32 %v1203, 0.0
    %v1268 = vmax.f32 %v1204, 0.0
    %v1269 = vmax.f32 %v1205, 0.0
    %v1270 = vmax.f32 %v1206, 0.0
    %v1271 = vmax.f32 %v1207, 0.0
    %v1272 = vmax.f32 %v1208, 0.0
    %v1273 = vmax.f32 %v1209, 0.0
    %v1274 = vmax.f32 %v1210, 0.0
    %v1275 = vmax.f32 %v1211, 0.0
    %v1276 = vmax.f32 %v1212, 0.0
    %v1277 = vmax.f32 %v1213, 0.0
    %1278 = vst [vmem:[%s3] sm:$0xff] %v1214
    %1279 = vst [vmem:[%s3 + $0x8] sm:$0xff] %v1215
    %1280 = vst [vmem:[%s3 + $0x10] sm:$0xff] %v1216
    %1281 = vst [vmem:[%s3 + $0x18] sm:$0xff] %v1217
    %1282 = vst [vmem:[%s3 + $0x20] sm:$0xff] %v1218
    %1283 = vst [vmem:[%s3 + $0x28] sm:$0xff] %v1219
    %1284 = vst [vmem:[%s3 + $0x30] sm:$0xff] %v1220
    %1285 = vst [vmem:[%s3 + $0x38] sm:$0xff] %v1221
    %1286 = vst [vmem:[%s3 + $0x40] sm:$0xff] %v1222
    %1287 = vst [vmem:[%s3 + $0x48] sm:$0xff] %v1223
    %1288 = vst [vmem:[%s3 + $0x50] sm:$0xff] %v1224
    %1289 = vst [vmem:[%s3 + $0x58] sm:$0xff] %v1225
    %1290 = vst [vmem:[%s3 + $0x60] sm:$0xff] %v1226
    %1291 = vst [vmem:[%s3 + $0x68] sm:$0xff] %v1227
    %1292 = vst [vmem:[%s3 + $0x70] sm:$0xff] %v1228
    %1293 = vst [vmem:[%s3 + $0x78] sm:$0xff] %v1229
    %1294 = vst [vmem:[%s3 + $0x80] sm:$0xff] %v1230
    %1295 = vst [vmem:[%s3 + $0x88] sm:$0xff] %v1231
    %1296 = vst [vmem:[%s3 + $0x90] sm:$0xff] %v1232
    %1297 = vst [vmem:[%s3 + $0x98] sm:$0xff] %v1233
    %1298 = vst [vmem:[%s3 + $0xa0] sm:$0xff] %v1234
    %1299 = vst [vmem:[%s3 + $0xa8] sm:$0xff] %v1235
    %1300 = vst [vmem:[%s3 + $0xb0] sm:$0xff] %v1236
    %1301 = vst [vmem:[%s3 + $0xb8] sm:$0xff] %v1237
    %1302 = vst [vmem:[%s3 + $0xc0] sm:$0xff] %v1238
    %1303 = vst [vmem:[%s3 + $0xc8] sm:$0xff] %v1239
    %1304 = vst [vmem:[%s3 + $0xd0] sm:$0xff] %v1240
    %1305 = vst [vmem:[%s3 + $0xd8] sm:$0xff] %v1241
    %1306 = vst [vmem:[%s3 + $0xe0] sm:$0xff] %v1242
    %1307 = vst [vmem:[%s3 + $0xe8] sm:$0xff] %v1243
    %1308 = vst [vmem:[%s3 + $0xf0] sm:$0xff] %v1244
    %1309 = vst [vmem:[%s3 + $0xf8] sm:$0xff] %v1245
    %1310 = vst [vmem:[%s3 + $0x100] sm:$0xff] %v1246
    %1311 = vst [vmem:[%s3 + $0x108] sm:$0xff] %v1247
    %1312 = vst [vmem:[%s3 + $0x110] sm:$0xff] %v1248
    %1313 = vst [vmem:[%s3 + $0x118] sm:$0xff] %v1249
    %1314 = vst [vmem:[%s3 + $0x120] sm:$0xff] %v1250
    %1315 = vst [vmem:[%s3 + $0x128] sm:$0xff] %v1251
    %1316 = vst [vmem:[%s3 + $0x130] sm:$0xff] %v1252
    %1317 = vst [vmem:[%s3 + $0x138] sm:$0xff] %v1253
    %1318 = vst [vmem:[%s3 + $0x140] sm:$0xff] %v1254
    %1319 = vst [vmem:[%s3 + $0x148] sm:$0xff] %v1255
    %1320 = vst [vmem:[%s3 + $0x150] sm:$0xff] %v1256
    %1321 = vst [vmem:[%s3 + $0x158] sm:$0xff] %v1257
    %1322 = vst [vmem:[%s3 + $0x160] sm:$0xff] %v1258
    %1323 = vst [vmem:[%s3 + $0x168] sm:$0xff] %v1259
    %1324 = vst [vmem:[%s3 + $0x170] sm:$0xff] %v1260
    %1325 = vst [vmem:[%s3 + $0x178] sm:$0xff] %v1261
    %1326 = vst [vmem:[%s3 + $0x180] sm:$0xff] %v1262
    %1327 = vst [vmem:[%s3 + $0x188] sm:$0xff] %v1263
    %1328 = vst [vmem:[%s3 + $0x190] sm:$0xff] %v1264
    %1329 = vst [vmem:[%s3 + $0x198] sm:$0xff] %v1265
    %1330 = vst [vmem:[%s3 + $0x1a0] sm:$0xff] %v1266
    %1331 = vst [vmem:[%s3 + $0x1a8] sm:$0xff] %v1267
    %1332 = vst [vmem:[%s3 + $0x1b0] sm:$0xff] %v1268
    %1333 = vst [vmem:[%s3 + $0x1b8] sm:$0xff] %v1269
    %1334 = vst [vmem:[%s3 + $0x1c0] sm:$0xff] %v1270
    %1335 = vst [vmem:[%s3 + $0x1c8] sm:$0xff] %v1271
    %1336 = vst [vmem:[%s3 + $0x1d0] sm:$0xff] %v1272
    %1337 = vst [vmem:[%s3 + $0x1d8] sm:$0xff] %v1273
    %1338 = vst [vmem:[%s3 + $0x1e0] sm:$0xff] %v1274
    %1339 = vst [vmem:[%s3 + $0x1e8] sm:$0xff] %v1275
    %1340 = vst [vmem:[%s3 + $0x1f0] sm:$0xff] %v1276
    %1341 = vst [vmem:[%s3 + $0x1f8] sm:$0xff] %v1277
  $region21: #{custom_backbone_forward.9} parent=0 // pred_fallthru
    _
  // Predicated region
  $region22: #{custom_backbone_forward.9} parent=0 // pred_check
    _
  $region23: #{custom_backbone_forward.9} parent=0 // pred_check_branch
    %1343 = sbr.rel (0) target = $region25
  $region24: #{custom_backbone_forward.9} parent=0 // pred_region
    _
  $region25: #{custom_backbone_forward.9} parent=0 // pred_fallthru
    _
  // Predicated region
  $region26: #{custom_backbone_forward.9} parent=0 // pred_check
    _
  $region27: #{custom_backbone_forward.9} parent=0 // pred_check_branch
    %1345 = sbr.rel (0) target = $region29
  $region28: #{custom_backbone_forward.9} parent=0 // pred_region
    _
  $region29: #{custom_backbone_forward.9} parent=0 // pred_fallthru
    _

// kernel: custom_backbone_forward.12
$region0: #{custom_backbone_forward.12}
  #allocation0 [shape = 'u32[]', space=smem, size = 0x4, offset = 0x4, fixed_abs, tag = 'smem constant byte address 0x4 - core index']
  #allocation1 [shape = 'u32[144,128]{1,0:T(1,128)}', space=vmem, size = 0x12000, scoped, tag = 'internal scratch']
  #allocation2 [shape = 'f32[32,128]{1,0:T(8,128)}', space=vmem, size = 0x4000, scoped, tag = 'scratch operand']
  %s0 = inlined_call_operand.vmem [shape: bf16[32,256], index: 0, kind: input, shape index: {}]
  %s1 = inlined_call_operand.vmem [shape: bf16[256,128], index: 1, kind: input, shape index: {}]
  %s2 = inlined_call_operand.vmem [shape: f32[1,128], index: 2, kind: input, shape index: {}]
  %s3 = inlined_call_operand.vmem [shape: f32[32,128], index: 3, kind: output, shape index: {}]
  %s4 = sld [smem:[#allocation0]]
  $region30: #{custom_backbone_forward.12} parent=0
    _
  %s6 = ssub.s32 1, %s4
  %s7 = scalar_select 0, %s6, %s4
  // Predicated region
  $region2: #{custom_backbone_forward.12} parent=0 // pred_check
    _
  $region3: #{custom_backbone_forward.12} parent=0 // pred_check_branch
    %9 = sbr.rel (0) target = $region5
  $region4: #{custom_backbone_forward.12} parent=0 // pred_region
    _
  $region5: #{custom_backbone_forward.12} parent=0 // pred_fallthru
    _
  // Predicated region
  $region6: #{custom_backbone_forward.12} parent=0 // pred_check
    _
  $region7: #{custom_backbone_forward.12} parent=0 // pred_check_branch
    %11 = sbr.rel (0) target = $region9
  $region8: #{custom_backbone_forward.12} parent=0 // pred_region
    _
  $region9: #{custom_backbone_forward.12} parent=0 // pred_fallthru
    _
  // Predicated region
  $region10: #{custom_backbone_forward.12} parent=0 // pred_check
    _
  $region11: #{custom_backbone_forward.12} parent=0 // pred_check_branch
    %13 = sbr.rel (0) target = $region13
  $region12: #{custom_backbone_forward.12} parent=0 // pred_region
    _
  $region13: #{custom_backbone_forward.12} parent=0 // pred_fallthru
    _
  %p15 = scmp.eq.s32.totalorder 0, 0
  // Predicated region
  $region14: #{custom_backbone_forward.12} parent=0 // pred_check
    %p16 = pneg %p15
  $region15: #{custom_backbone_forward.12} parent=0 // pred_check_branch
    %18 = sbr.rel (%p16) target = $region17
  $region16: #{custom_backbone_forward.12} parent=0 // pred_region
    %19 = vst [vmem:[#allocation2] sm:$0xff] 0.0
    %20 = vst [vmem:[#allocation2 + $0x8] sm:$0xff] 0.0
    %21 = vst [vmem:[#allocation2 + $0x10] sm:$0xff] 0.0
    %22 = vst [vmem:[#allocation2 + $0x18] sm:$0xff] 0.0
  $region17: #{custom_backbone_forward.12} parent=0 // pred_fallthru
    _
  %v23 = vld [vmem:[#allocation2] sm:$0xff]
  %v24 = vld [vmem:[#allocation2 + $0x8] sm:$0xff]
  %v25 = vld [vmem:[#allocation2 + $0x10] sm:$0xff]
  %v26 = vld [vmem:[#allocation2 + $0x18] sm:$0xff]
  %v27 = vld [vmem:[%s0] sm:$0xff]
  %v28 = vld [vmem:[%s0 + $0x8] sm:$0xff]
  %v29 = vld [vmem:[%s0 + $0x10] sm:$0xff]
  %v30 = vld [vmem:[%s0 + $0x18] sm:$0xff]
  %v31 = vld [vmem:[%s1] sm:$0xf]
  %v32 = vld [vmem:[%s1 + $0x4] sm:$0xf]
  %v33 = vld [vmem:[%s1 + $0x8] sm:$0xf]
  %v34 = vld [vmem:[%s1 + $0xc] sm:$0xf]
  %v35 = vld [vmem:[%s1 + $0x10] sm:$0xf]
  %v36 = vld [vmem:[%s1 + $0x14] sm:$0xf]
  %v37 = vld [vmem:[%s1 + $0x18] sm:$0xf]
  %v38 = vld [vmem:[%s1 + $0x1c] sm:$0xf]
  %v39 = vld [vmem:[%s1 + $0x20] sm:$0xf]
  %v40 = vld [vmem:[%s1 + $0x24] sm:$0xf]
  %v41 = vld [vmem:[%s1 + $0x28] sm:$0xf]
  %v42 = vld [vmem:[%s1 + $0x2c] sm:$0xf]
  %v43 = vld [vmem:[%s1 + $0x30] sm:$0xf]
  %v44 = vld [vmem:[%s1 + $0x34] sm:$0xf]
  %v45 = vld [vmem:[%s1 + $0x38] sm:$0xf]
  %v46 = vld [vmem:[%s1 + $0x3c] sm:$0xf]
  %v47 = vld [vmem:[%s1 + $0x40] sm:$0xf]
  %v48 = vld [vmem:[%s1 + $0x44] sm:$0xf]
  %v49 = vld [vmem:[%s1 + $0x48] sm:$0xf]
  %v50 = vld [vmem:[%s1 + $0x4c] sm:$0xf]
  %v51 = vld [vmem:[%s1 + $0x50] sm:$0xf]
  %v52 = vld [vmem:[%s1 + $0x54] sm:$0xf]
  %v53 = vld [vmem:[%s1 + $0x58] sm:$0xf]
  %v54 = vld [vmem:[%s1 + $0x5c] sm:$0xf]
  %v55 = vld [vmem:[%s1 + $0x60] sm:$0xf]
  %v56 = vld [vmem:[%s1 + $0x64] sm:$0xf]
  %v57 = vld [vmem:[%s1 + $0x68] sm:$0xf]
  %v58 = vld [vmem:[%s1 + $0x6c] sm:$0xf]
  %v59 = vld [vmem:[%s1 + $0x70] sm:$0xf]
  %v60 = vld [vmem:[%s1 + $0x74] sm:$0xf]
  %v61 = vld [vmem:[%s1 + $0x78] sm:$0xf]
  %v62 = vld [vmem:[%s1 + $0x7c] sm:$0xf]
  %v67 = vunpack.c.l.b16 %v27
  %v68 = vunpack.c.h.b16 %v27
  %v69 = vunpack.c.l.b16 %v28
  %v70 = vunpack.c.h.b16 %v28
  %v71 = vunpack.c.l.b16 %v29
  %v72 = vunpack.c.h.b16 %v29
  %v73 = vunpack.c.l.b16 %v30
  %v74 = vunpack.c.h.b16 %v30
  %v75 = vpack.c.b16 %v69, %v67
  %v76 = vpack.c.b16 %v70, %v68
  %v77 = vpack.c.b16 %v73, %v71
  %v78 = vpack.c.b16 %v74, %v72
  %v115 = vunpack.c.l.b16 %v31
  %v116 = vunpack.c.l.b16 %v32
  %v117 = vunpack.c.l.b16 %v33
  %v118 = vunpack.c.l.b16 %v34
  %v119 = vunpack.c.l.b16 %v35
  %v120 = vunpack.c.l.b16 %v36
  %v121 = vunpack.c.l.b16 %v37
  %v122 = vunpack.c.l.b16 %v38
  %v123 = vunpack.c.l.b16 %v39
  %v124 = vunpack.c.l.b16 %v40
  %v125 = vunpack.c.l.b16 %v41
  %v126 = vunpack.c.l.b16 %v42
  %v127 = vunpack.c.l.b16 %v43
  %v128 = vunpack.c.l.b16 %v44
  %v129 = vunpack.c.l.b16 %v45
  %v130 = vunpack.c.l.b16 %v46
  %v131 = vunpack.c.l.b16 %v47
  %v132 = vunpack.c.l.b16 %v48
  %v133 = vunpack.c.l.b16 %v49
  %v134 = vunpack.c.l.b16 %v50
  %v135 = vunpack.c.l.b16 %v51
  %v136 = vunpack.c.l.b16 %v52
  %v137 = vunpack.c.l.b16 %v53
  %v138 = vunpack.c.l.b16 %v54
  %v139 = vunpack.c.l.b16 %v55
  %v140 = vunpack.c.l.b16 %v56
  %v141 = vunpack.c.l.b16 %v57
  %v142 = vunpack.c.l.b16 %v58
  %v143 = vunpack.c.l.b16 %v59
  %v144 = vunpack.c.l.b16 %v60
  %v145 = vunpack.c.l.b16 %v61
  %v146 = vunpack.c.l.b16 %v62
  %v147 = vpack.c.b16 %v116, %v115
  %v148 = vpack.c.b16 %v118, %v117
  %v149 = vpack.c.b16 %v120, %v119
  %v150 = vpack.c.b16 %v122, %v121
  %v151 = vpack.c.b16 %v124, %v123
  %v152 = vpack.c.b16 %v126, %v125
  %v153 = vpack.c.b16 %v128, %v127
  %v154 = vpack.c.b16 %v130, %v129
  %v155 = vpack.c.b16 %v132, %v131
  %v156 = vpack.c.b16 %v134, %v133
  %v157 = vpack.c.b16 %v136, %v135
  %v158 = vpack.c.b16 %v138, %v137
  %v159 = vpack.c.b16 %v140, %v139
  %v160 = vpack.c.b16 %v142, %v141
  %v161 = vpack.c.b16 %v144, %v143
  %v162 = vpack.c.b16 %v146, %v145
  %179 = vmatprep.subr.bf16.mxu0 0
  %180 = vmatpush1.bf16.msra.mxu0 %v147
  %181 = vmatprep.subr.bf16.mxu0 0
  %182 = vmatpush1.bf16.msra.mxu0 %v148
  %183 = vmatprep.subr.bf16.mxu0 0
  %184 = vmatpush1.bf16.msra.mxu0 %v149
  %185 = vmatprep.subr.bf16.mxu0 0
  %186 = vmatpush1.bf16.msra.mxu0 %v150
  %187 = vmatprep.subr.bf16.mxu0 0
  %188 = vmatpush1.bf16.msra.mxu0 %v151
  %189 = vmatprep.subr.bf16.mxu0 0
  %190 = vmatpush1.bf16.msra.mxu0 %v152
  %191 = vmatprep.subr.bf16.mxu0 0
  %192 = vmatpush1.bf16.msra.mxu0 %v153
  %193 = vmatprep.subr.bf16.mxu0 0
  %194 = vmatpush1.bf16.msra.mxu0 %v154
  %195 = vmatprep.subr.bf16.mxu0 0
  %196 = vmatpush1.bf16.msra.mxu0 %v155
  %197 = vmatprep.subr.bf16.mxu0 0
  %198 = vmatpush1.bf16.msra.mxu0 %v156
  %199 = vmatprep.subr.bf16.mxu0 0
  %200 = vmatpush1.bf16.msra.mxu0 %v157
  %201 = vmatprep.subr.bf16.mxu0 0
  %202 = vmatpush1.bf16.msra.mxu0 %v158
  %203 = vmatprep.subr.bf16.mxu0 0
  %204 = vmatpush1.bf16.msra.mxu0 %v159
  %205 = vmatprep.subr.bf16.mxu0 0
  %206 = vmatpush1.bf16.msra.mxu0 %v160
  %207 = vmatprep.subr.bf16.mxu0 0
  %208 = vmatpush1.bf16.msra.mxu0 %v161
  %209 = vmatprep.subr.bf16.mxu0 0
  %210 = vmatpush1.bf16.msra.mxu0 %v162
  %211 = vmatprep.mubr.bf16.mxu0 %v76
  %212 = vmatmul.mubr.bf16.gmra.mrb[0].mxu0 %v75
  %v213 = vpop.f32.mrb[0].mxu0
  %v214 = vadd.f32 0.0, %v213
  %v215 = vpop.f32.mrb[0].mxu0
  %v216 = vpop.f32.mrb[0].mxu0
  %v217 = vadd.f32 0.0, %v216
  %v218 = vpop.f32.mrb[0].mxu0
  %219 = vmatprep.mubr.bf16.mxu0 %v78
  %220 = vmatmul.mubr.bf16.gmra.mrb[0].mxu0 %v77
  %v221 = vpop.f32.mrb[0].mxu0
  %v222 = vadd.f32 0.0, %v221
  %v223 = vpop.f32.mrb[0].mxu0
  %v224 = vpop.f32.mrb[0].mxu0
  %v225 = vadd.f32 0.0, %v224
  %v226 = vpop.f32.mrb[0].mxu0
  %227 = vdwg.mxu0
  %v228 = vadd.f32 %v23, %v214
  %v229 = vadd.f32 %v24, %v217
  %v230 = vadd.f32 %v25, %v222
  %v231 = vadd.f32 %v26, %v225
  %232 = vst [vmem:[#allocation2] sm:$0xff] %v228
  %233 = vst [vmem:[#allocation2 + $0x8] sm:$0xff] %v229
  %234 = vst [vmem:[#allocation2 + $0x10] sm:$0xff] %v230
  %235 = vst [vmem:[#allocation2 + $0x18] sm:$0xff] %v231
  // Predicated region
  $region18: #{custom_backbone_forward.12} parent=0 // pred_check
    %p236 = pneg %p15
  $region19: #{custom_backbone_forward.12} parent=0 // pred_check_branch
    %238 = sbr.rel (%p236) target = $region21
  $region20: #{custom_backbone_forward.12} parent=0 // pred_region
    %v239 = vld [vmem:[#allocation2] sm:$0xff]
    %v240 = vld [vmem:[#allocation2 + $0x8] sm:$0xff]
    %v241 = vld [vmem:[#allocation2 + $0x10] sm:$0xff]
    %v242 = vld [vmem:[#allocation2 + $0x18] sm:$0xff]
    %v243 = vld [vmem:[%s2] sm:$0x1]
    %v245 = vlaneseq
    %v246 = vshrl.u32 %v245, 7
    %v247 = vsub.s32 0, %v246
    %v248 = vrot.slane %v243, %v247
    %v250 = vadd.f32 %v239, %v248
    %v251 = vadd.f32 %v240, %v248
    %v252 = vadd.f32 %v241, %v248
    %v253 = vadd.f32 %v242, %v248
    %v254 = vmax.f32 %v250, 0.0
    %v255 = vmax.f32 %v251, 0.0
    %v256 = vmax.f32 %v252, 0.0
    %v257 = vmax.f32 %v253, 0.0
    %258 = vst [vmem:[%s3] sm:$0xff] %v254
    %259 = vst [vmem:[%s3 + $0x8] sm:$0xff] %v255
    %260 = vst [vmem:[%s3 + $0x10] sm:$0xff] %v256
    %261 = vst [vmem:[%s3 + $0x18] sm:$0xff] %v257
  $region21: #{custom_backbone_forward.12} parent=0 // pred_fallthru
    _
  // Predicated region
  $region22: #{custom_backbone_forward.12} parent=0 // pred_check
    _
  $region23: #{custom_backbone_forward.12} parent=0 // pred_check_branch
    %263 = sbr.rel (0) target = $region25
  $region24: #{custom_backbone_forward.12} parent=0 // pred_region
    _
  $region25: #{custom_backbone_forward.12} parent=0 // pred_fallthru
    _
  // Predicated region
  $region26: #{custom_backbone_forward.12} parent=0 // pred_check
    _
  $region27: #{custom_backbone_forward.12} parent=0 // pred_check_branch
    %265 = sbr.rel (0) target = $region29
  $region28: #{custom_backbone_forward.12} parent=0 // pred_region
    _
  $region29: #{custom_backbone_forward.12} parent=0 // pred_fallthru
    _

// kernel: custom_backbone_forward.13
$region0: #{custom_backbone_forward.13}
  #allocation0 [shape = 'u32[]', space=smem, size = 0x4, offset = 0x4, fixed_abs, tag = 'smem constant byte address 0x4 - core index']
  #allocation1 [shape = 'u32[144,128]{1,0:T(1,128)}', space=vmem, size = 0x12000, scoped, tag = 'internal scratch']
  #allocation2 [shape = 'f32[32,128]{1,0:T(8,128)}', space=vmem, size = 0x4000, scoped, tag = 'scratch operand']
  %s0 = inlined_call_operand.vmem [shape: bf16[32,384], index: 0, kind: input, shape index: {}]
  %s1 = inlined_call_operand.vmem [shape: bf16[384,128], index: 1, kind: input, shape index: {}]
  %s2 = inlined_call_operand.vmem [shape: f32[1,128], index: 2, kind: input, shape index: {}]
  %s3 = inlined_call_operand.vmem [shape: f32[32,128], index: 3, kind: output, shape index: {}]
  %s4 = sld [smem:[#allocation0]]
  $region30: #{custom_backbone_forward.13} parent=0
    _
  %s6 = ssub.s32 1, %s4
  %s7 = scalar_select 0, %s6, %s4
  // Predicated region
  $region2: #{custom_backbone_forward.13} parent=0 // pred_check
    _
  $region3: #{custom_backbone_forward.13} parent=0 // pred_check_branch
    %9 = sbr.rel (0) target = $region5
  $region4: #{custom_backbone_forward.13} parent=0 // pred_region
    _
  $region5: #{custom_backbone_forward.13} parent=0 // pred_fallthru
    _
  // Predicated region
  $region6: #{custom_backbone_forward.13} parent=0 // pred_check
    _
  $region7: #{custom_backbone_forward.13} parent=0 // pred_check_branch
    %11 = sbr.rel (0) target = $region9
  $region8: #{custom_backbone_forward.13} parent=0 // pred_region
    _
  $region9: #{custom_backbone_forward.13} parent=0 // pred_fallthru
    _
  // Predicated region
  $region10: #{custom_backbone_forward.13} parent=0 // pred_check
    _
  $region11: #{custom_backbone_forward.13} parent=0 // pred_check_branch
    %13 = sbr.rel (0) target = $region13
  $region12: #{custom_backbone_forward.13} parent=0 // pred_region
    _
  $region13: #{custom_backbone_forward.13} parent=0 // pred_fallthru
    _
  %p15 = scmp.eq.s32.totalorder 0, 0
  // Predicated region
  $region14: #{custom_backbone_forward.13} parent=0 // pred_check
    %p16 = pneg %p15
  $region15: #{custom_backbone_forward.13} parent=0 // pred_check_branch
    %18 = sbr.rel (%p16) target = $region17
  $region16: #{custom_backbone_forward.13} parent=0 // pred_region
    %19 = vst [vmem:[#allocation2] sm:$0xff] 0.0
    %20 = vst [vmem:[#allocation2 + $0x8] sm:$0xff] 0.0
    %21 = vst [vmem:[#allocation2 + $0x10] sm:$0xff] 0.0
    %22 = vst [vmem:[#allocation2 + $0x18] sm:$0xff] 0.0
  $region17: #{custom_backbone_forward.13} parent=0 // pred_fallthru
    _
  %v23 = vld [vmem:[#allocation2] sm:$0xff]
  %v24 = vld [vmem:[#allocation2 + $0x8] sm:$0xff]
  %v25 = vld [vmem:[#allocation2 + $0x10] sm:$0xff]
  %v26 = vld [vmem:[#allocation2 + $0x18] sm:$0xff]
  %v27 = vld [vmem:[%s0] sm:$0xff]
  %v28 = vld [vmem:[%s0 + $0x8] sm:$0xf]
  %v29 = vld [vmem:[%s0 + $0xc] sm:$0xff]
  %v30 = vld [vmem:[%s0 + $0x14] sm:$0xf]
  %v31 = vld [vmem:[%s0 + $0x18] sm:$0xff]
  %v32 = vld [vmem:[%s0 + $0x20] sm:$0xf]
  %v33 = vld [vmem:[%s0 + $0x24] sm:$0xff]
  %v34 = vld [vmem:[%s0 + $0x2c] sm:$0xf]
  %v35 = vld [vmem:[%s1] sm:$0xf]
  %v36 = vld [vmem:[%s1 + $0x4] sm:$0xf]
  %v37 = vld [vmem:[%s1 + $0x8] sm:$0xf]
  %v38 = vld [vmem:[%s1 + $0xc] sm:$0xf]
  %v39 = vld [vmem:[%s1 + $0x10] sm:$0xf]
  %v40 = vld [vmem:[%s1 + $0x14] sm:$0xf]
  %v41 = vld [vmem:[%s1 + $0x18] sm:$0xf]
  %v42 = vld [vmem:[%s1 + $0x1c] sm:$0xf]
  %v43 = vld [vmem:[%s1 + $0x20] sm:$0xf]
  %v44 = vld [vmem:[%s1 + $0x24] sm:$0xf]
  %v45 = vld [vmem:[%s1 + $0x28] sm:$0xf]
  %v46 = vld [vmem:[%s1 + $0x2c] sm:$0xf]
  %v47 = vld [vmem:[%s1 + $0x30] sm:$0xf]
  %v48 = vld [vmem:[%s1 + $0x34] sm:$0xf]
  %v49 = vld [vmem:[%s1 + $0x38] sm:$0xf]
  %v50 = vld [vmem:[%s1 + $0x3c] sm:$0xf]
  %v51 = vld [vmem:[%s1 + $0x40] sm:$0xf]
  %v52 = vld [vmem:[%s1 + $0x44] sm:$0xf]
  %v53 = vld [vmem:[%s1 + $0x48] sm:$0xf]
  %v54 = vld [vmem:[%s1 + $0x4c] sm:$0xf]
  %v55 = vld [vmem:[%s1 + $0x50] sm:$0xf]
  %v56 = vld [vmem:[%s1 + $0x54] sm:$0xf]
  %v57 = vld [vmem:[%s1 + $0x58] sm:$0xf]
  %v58 = vld [vmem:[%s1 + $0x5c] sm:$0xf]
  %v59 = vld [vmem:[%s1 + $0x60] sm:$0xf]
  %v60 = vld [vmem:[%s1 + $0x64] sm:$0xf]
  %v61 = vld [vmem:[%s1 + $0x68] sm:$0xf]
  %v62 = vld [vmem:[%s1 + $0x6c] sm:$0xf]
  %v63 = vld [vmem:[%s1 + $0x70] sm:$0xf]
  %v64 = vld [vmem:[%s1 + $0x74] sm:$0xf]
  %v65 = vld [vmem:[%s1 + $0x78] sm:$0xf]
  %v66 = vld [vmem:[%s1 + $0x7c] sm:$0xf]
  %v67 = vld [vmem:[%s1 + $0x80] sm:$0xf]
  %v68 = vld [vmem:[%s1 + $0x84] sm:$0xf]
  %v69 = vld [vmem:[%s1 + $0x88] sm:$0xf]
  %v70 = vld [vmem:[%s1 + $0x8c] sm:$0xf]
  %v71 = vld [vmem:[%s1 + $0x90] sm:$0xf]
  %v72 = vld [vmem:[%s1 + $0x94] sm:$0xf]
  %v73 = vld [vmem:[%s1 + $0x98] sm:$0xf]
  %v74 = vld [vmem:[%s1 + $0x9c] sm:$0xf]
  %v75 = vld [vmem:[%s1 + $0xa0] sm:$0xf]
  %v76 = vld [vmem:[%s1 + $0xa4] sm:$0xf]
  %v77 = vld [vmem:[%s1 + $0xa8] sm:$0xf]
  %v78 = vld [vmem:[%s1 + $0xac] sm:$0xf]
  %v79 = vld [vmem:[%s1 + $0xb0] sm:$0xf]
  %v80 = vld [vmem:[%s1 + $0xb4] sm:$0xf]
  %v81 = vld [vmem:[%s1 + $0xb8] sm:$0xf]
  %v82 = vld [vmem:[%s1 + $0xbc] sm:$0xf]
  %v91 = vunpack.c.l.b16 %v27
  %v92 = vunpack.c.h.b16 %v27
  %v93 = vunpack.c.l.b16 %v28
  %v94 = vunpack.c.l.b16 %v29
  %v95 = vunpack.c.h.b16 %v29
  %v96 = vunpack.c.l.b16 %v30
  %v97 = vunpack.c.l.b16 %v31
  %v98 = vunpack.c.h.b16 %v31
  %v99 = vunpack.c.l.b16 %v32
  %v100 = vunpack.c.l.b16 %v33
  %v101 = vunpack.c.h.b16 %v33
  %v102 = vunpack.c.l.b16 %v34
  %v103 = vpack.c.b16 %v94, %v91
  %v104 = vpack.c.b16 %v95, %v92
  %v105 = vpack.c.b16 %v96, %v93
  %v106 = vpack.c.b16 %v100, %v97
  %v107 = vpack.c.b16 %v101, %v98
  %v108 = vpack.c.b16 %v102, %v99
  %v163 = vunpack.c.l.b16 %v35
  %v164 = vunpack.c.l.b16 %v36
  %v165 = vunpack.c.l.b16 %v37
  %v166 = vunpack.c.l.b16 %v38
  %v167 = vunpack.c.l.b16 %v39
  %v168 = vunpack.c.l.b16 %v40
  %v169 = vunpack.c.l.b16 %v41
  %v170 = vunpack.c.l.b16 %v42
  %v171 = vunpack.c.l.b16 %v43
  %v172 = vunpack.c.l.b16 %v44
  %v173 = vunpack.c.l.b16 %v45
  %v174 = vunpack.c.l.b16 %v46
  %v175 = vunpack.c.l.b16 %v47
  %v176 = vunpack.c.l.b16 %v48
  %v177 = vunpack.c.l.b16 %v49
  %v178 = vunpack.c.l.b16 %v50
  %v179 = vunpack.c.l.b16 %v51
  %v180 = vunpack.c.l.b16 %v52
  %v181 = vunpack.c.l.b16 %v53
  %v182 = vunpack.c.l.b16 %v54
  %v183 = vunpack.c.l.b16 %v55
  %v184 = vunpack.c.l.b16 %v56
  %v185 = vunpack.c.l.b16 %v57
  %v186 = vunpack.c.l.b16 %v58
  %v187 = vunpack.c.l.b16 %v59
  %v188 = vunpack.c.l.b16 %v60
  %v189 = vunpack.c.l.b16 %v61
  %v190 = vunpack.c.l.b16 %v62
  %v191 = vunpack.c.l.b16 %v63
  %v192 = vunpack.c.l.b16 %v64
  %v193 = vunpack.c.l.b16 %v65
  %v194 = vunpack.c.l.b16 %v66
  %v195 = vunpack.c.l.b16 %v67
  %v196 = vunpack.c.l.b16 %v68
  %v197 = vunpack.c.l.b16 %v69
  %v198 = vunpack.c.l.b16 %v70
  %v199 = vunpack.c.l.b16 %v71
  %v200 = vunpack.c.l.b16 %v72
  %v201 = vunpack.c.l.b16 %v73
  %v202 = vunpack.c.l.b16 %v74
  %v203 = vunpack.c.l.b16 %v75
  %v204 = vunpack.c.l.b16 %v76
  %v205 = vunpack.c.l.b16 %v77
  %v206 = vunpack.c.l.b16 %v78
  %v207 = vunpack.c.l.b16 %v79
  %v208 = vunpack.c.l.b16 %v80
  %v209 = vunpack.c.l.b16 %v81
  %v210 = vunpack.c.l.b16 %v82
  %v211 = vpack.c.b16 %v164, %v163
  %v212 = vpack.c.b16 %v166, %v165
  %v213 = vpack.c.b16 %v168, %v167
  %v214 = vpack.c.b16 %v170, %v169
  %v215 = vpack.c.b16 %v172, %v171
  %v216 = vpack.c.b16 %v174, %v173
  %v217 = vpack.c.b16 %v176, %v175
  %v218 = vpack.c.b16 %v178, %v177
  %v219 = vpack.c.b16 %v180, %v179
  %v220 = vpack.c.b16 %v182, %v181
  %v221 = vpack.c.b16 %v184, %v183
  %v222 = vpack.c.b16 %v186, %v185
  %v223 = vpack.c.b16 %v188, %v187
  %v224 = vpack.c.b16 %v190, %v189
  %v225 = vpack.c.b16 %v192, %v191
  %v226 = vpack.c.b16 %v194, %v193
  %v227 = vpack.c.b16 %v196, %v195
  %v228 = vpack.c.b16 %v198, %v197
  %v229 = vpack.c.b16 %v200, %v199
  %v230 = vpack.c.b16 %v202, %v201
  %v231 = vpack.c.b16 %v204, %v203
  %v232 = vpack.c.b16 %v206, %v205
  %v233 = vpack.c.b16 %v208, %v207
  %v234 = vpack.c.b16 %v210, %v209
  %259 = vmatprep.subr.bf16.mxu0 0
  %260 = vmatpush1.bf16.msra.mxu0 %v211
  %261 = vmatprep.subr.bf16.mxu0 0
  %262 = vmatpush1.bf16.msra.mxu0 %v212
  %263 = vmatprep.subr.bf16.mxu0 0
  %264 = vmatpush1.bf16.msra.mxu0 %v213
  %265 = vmatprep.subr.bf16.mxu0 0
  %266 = vmatpush1.bf16.msra.mxu0 %v214
  %267 = vmatprep.subr.bf16.mxu0 0
  %268 = vmatpush1.bf16.msra.mxu0 %v215
  %269 = vmatprep.subr.bf16.mxu0 0
  %270 = vmatpush1.bf16.msra.mxu0 %v216
  %271 = vmatprep.subr.bf16.mxu0 0
  %272 = vmatpush1.bf16.msra.mxu0 %v217
  %273 = vmatprep.subr.bf16.mxu0 0
  %274 = vmatpush1.bf16.msra.mxu0 %v218
  %275 = vmatprep.subr.bf16.mxu0 0
  %276 = vmatpush1.bf16.msra.mxu0 %v219
  %277 = vmatprep.subr.bf16.mxu0 0
  %278 = vmatpush1.bf16.msra.mxu0 %v220
  %279 = vmatprep.subr.bf16.mxu0 0
  %280 = vmatpush1.bf16.msra.mxu0 %v221
  %281 = vmatprep.subr.bf16.mxu0 0
  %282 = vmatpush1.bf16.msra.mxu0 %v222
  %283 = vmatprep.subr.bf16.mxu0 0
  %284 = vmatpush1.bf16.msra.mxu0 %v223
  %285 = vmatprep.subr.bf16.mxu0 0
  %286 = vmatpush1.bf16.msra.mxu0 %v224
  %287 = vmatprep.subr.bf16.mxu0 0
  %288 = vmatpush1.bf16.msra.mxu0 %v225
  %289 = vmatprep.subr.bf16.mxu0 0
  %290 = vmatpush1.bf16.msra.mxu0 %v226
  %291 = vmatprep.mubr.bf16.mxu0 %v104
  %292 = vmatmul.mubr.bf16.gmra.mrb[0].mxu0 %v103
  %v293 = vpop.f32.mrb[0].mxu0
  %v294 = vadd.f32 0.0, %v293
  %v295 = vpop.f32.mrb[0].mxu0
  %v296 = vpop.f32.mrb[0].mxu0
  %v297 = vadd.f32 0.0, %v296
  %v298 = vpop.f32.mrb[0].mxu0
  %299 = vmatprep.mubr.bf16.mxu0 %v107
  %300 = vmatmul.mubr.bf16.gmra.mrb[0].mxu0 %v106
  %v301 = vpop.f32.mrb[0].mxu0
  %v302 = vadd.f32 0.0, %v301
  %v303 = vpop.f32.mrb[0].mxu0
  %v304 = vpop.f32.mrb[0].mxu0
  %v305 = vadd.f32 0.0, %v304
  %v306 = vpop.f32.mrb[0].mxu0
  %307 = vdwg.mxu0
  %308 = vmatprep.subr.bf16.mxu0 0
  %309 = vmatpush1.bf16.msra.mxu0 %v227
  %310 = vmatprep.subr.bf16.mxu0 0
  %311 = vmatpush1.bf16.msra.mxu0 %v228
  %312 = vmatprep.subr.bf16.mxu0 0
  %313 = vmatpush1.bf16.msra.mxu0 %v229
  %314 = vmatprep.subr.bf16.mxu0 0
  %315 = vmatpush1.bf16.msra.mxu0 %v230
  %316 = vmatprep.subr.bf16.mxu0 0
  %317 = vmatpush1.bf16.msra.mxu0 %v231
  %318 = vmatprep.subr.bf16.mxu0 0
  %319 = vmatpush1.bf16.msra.mxu0 %v232
  %320 = vmatprep.subr.bf16.mxu0 0
  %321 = vmatpush1.bf16.msra.mxu0 %v233
  %322 = vmatprep.subr.bf16.mxu0 0
  %323 = vmatpush1.bf16.msra.mxu0 %v234
  %324 = vmatprep.subr.bf16.mxu0 0
  %325 = vmatpush1.bf16.msra.mxu0 0
  %326 = vmatprep.subr.bf16.mxu0 0
  %327 = vmatpush1.bf16.msra.mxu0 0
  %328 = vmatprep.subr.bf16.mxu0 0
  %329 = vmatpush1.bf16.msra.mxu0 0
  %330 = vmatprep.subr.bf16.mxu0 0
  %331 = vmatpush1.bf16.msra.mxu0 0
  %332 = vmatprep.subr.bf16.mxu0 0
  %333 = vmatpush1.bf16.msra.mxu0 0
  %334 = vmatprep.subr.bf16.mxu0 0
  %335 = vmatpush1.bf16.msra.mxu0 0
  %336 = vmatprep.subr.bf16.mxu0 0
  %337 = vmatpush1.bf16.msra.mxu0 0
  %338 = vmatprep.subr.bf16.mxu0 0
  %339 = vmatpush1.bf16.msra.mxu0 0
  %340 = vmatprep.mubr.bf16.mxu0 0
  %341 = vmatmul.mubr.bf16.gmra.mrb[0].mxu0 %v105
  %v342 = vpop.f32.mrb[0].mxu0
  %v343 = vadd.f32 %v294, %v342
  %v344 = vpop.f32.mrb[0].mxu0
  %v345 = vpop.f32.mrb[0].mxu0
  %v346 = vadd.f32 %v297, %v345
  %v347 = vpop.f32.mrb[0].mxu0
  %348 = vmatprep.mubr.bf16.mxu0 0
  %349 = vmatmul.mubr.bf16.gmra.mrb[0].mxu0 %v108
  %v350 = vpop.f32.mrb[0].mxu0
  %v351 = vadd.f32 %v302, %v350
  %v352 = vpop.f32.mrb[0].mxu0
  %v353 = vpop.f32.mrb[0].mxu0
  %v354 = vadd.f32 %v305, %v353
  %v355 = vpop.f32.mrb[0].mxu0
  %356 = vdwg.mxu0
  %v357 = vadd.f32 %v23, %v343
  %v358 = vadd.f32 %v24, %v346
  %v359 = vadd.f32 %v25, %v351
  %v360 = vadd.f32 %v26, %v354
  %361 = vst [vmem:[#allocation2] sm:$0xff] %v357
  %362 = vst [vmem:[#allocation2 + $0x8] sm:$0xff] %v358
  %363 = vst [vmem:[#allocation2 + $0x10] sm:$0xff] %v359
  %364 = vst [vmem:[#allocation2 + $0x18] sm:$0xff] %v360
  // Predicated region
  $region18: #{custom_backbone_forward.13} parent=0 // pred_check
    %p365 = pneg %p15
  $region19: #{custom_backbone_forward.13} parent=0 // pred_check_branch
    %367 = sbr.rel (%p365) target = $region21
  $region20: #{custom_backbone_forward.13} parent=0 // pred_region
    %v368 = vld [vmem:[#allocation2] sm:$0xff]
    %v369 = vld [vmem:[#allocation2 + $0x8] sm:$0xff]
    %v370 = vld [vmem:[#allocation2 + $0x10] sm:$0xff]
    %v371 = vld [vmem:[#allocation2 + $0x18] sm:$0xff]
    %v372 = vld [vmem:[%s2] sm:$0x1]
    %v374 = vlaneseq
    %v375 = vshrl.u32 %v374, 7
    %v376 = vsub.s32 0, %v375
    %v377 = vrot.slane %v372, %v376
    %v379 = vadd.f32 %v368, %v377
    %v380 = vadd.f32 %v369, %v377
    %v381 = vadd.f32 %v370, %v377
    %v382 = vadd.f32 %v371, %v377
    %v383 = vmax.f32 %v379, 0.0
    %v384 = vmax.f32 %v380, 0.0
    %v385 = vmax.f32 %v381, 0.0
    %v386 = vmax.f32 %v382, 0.0
    %387 = vst [vmem:[%s3] sm:$0xff] %v383
    %388 = vst [vmem:[%s3 + $0x8] sm:$0xff] %v384
    %389 = vst [vmem:[%s3 + $0x10] sm:$0xff] %v385
    %390 = vst [vmem:[%s3 + $0x18] sm:$0xff] %v386
  $region21: #{custom_backbone_forward.13} parent=0 // pred_fallthru
    _
  // Predicated region
  $region22: #{custom_backbone_forward.13} parent=0 // pred_check
    _
  $region23: #{custom_backbone_forward.13} parent=0 // pred_check_branch
    %392 = sbr.rel (0) target = $region25
  $region24: #{custom_backbone_forward.13} parent=0 // pred_region
    _
  $region25: #{custom_backbone_forward.13} parent=0 // pred_fallthru
    _
  // Predicated region
  $region26: #{custom_backbone_forward.13} parent=0 // pred_check
    _
  $region27: #{custom_backbone_forward.13} parent=0 // pred_check_branch
    %394 = sbr.rel (0) target = $region29
  $region28: #{custom_backbone_forward.13} parent=0 // pred_region
    _
  $region29: #{custom_backbone_forward.13} parent=0 // pred_fallthru
    _

// kernel: custom_backbone_forward.14
$region0: #{custom_backbone_forward.14}
  #allocation0 [shape = 'u32[]', space=smem, size = 0x4, offset = 0x4, fixed_abs, tag = 'smem constant byte address 0x4 - core index']
  #allocation1 [shape = 'u32[144,128]{1,0:T(1,128)}', space=vmem, size = 0x12000, scoped, tag = 'internal scratch']
  #allocation2 [shape = 'f32[8,128]{1,0:T(8,128)}', space=vmem, size = 0x1000, scoped, tag = 'scratch operand']
  %s0 = inlined_call_operand.vmem [shape: bf16[8,384], index: 0, kind: input, shape index: {}]
  %s1 = inlined_call_operand.vmem [shape: bf16[384,128], index: 1, kind: input, shape index: {}]
  %s2 = inlined_call_operand.vmem [shape: f32[1,128], index: 2, kind: input, shape index: {}]
  %s3 = inlined_call_operand.vmem [shape: f32[8,128], index: 3, kind: output, shape index: {}]
  %s4 = sld [smem:[#allocation0]]
  $region30: #{custom_backbone_forward.14} parent=0
    _
  %s6 = ssub.s32 1, %s4
  %s7 = scalar_select 0, %s6, %s4
  // Predicated region
  $region2: #{custom_backbone_forward.14} parent=0 // pred_check
    _
  $region3: #{custom_backbone_forward.14} parent=0 // pred_check_branch
    %9 = sbr.rel (0) target = $region5
  $region4: #{custom_backbone_forward.14} parent=0 // pred_region
    _
  $region5: #{custom_backbone_forward.14} parent=0 // pred_fallthru
    _
  // Predicated region
  $region6: #{custom_backbone_forward.14} parent=0 // pred_check
    _
  $region7: #{custom_backbone_forward.14} parent=0 // pred_check_branch
    %11 = sbr.rel (0) target = $region9
  $region8: #{custom_backbone_forward.14} parent=0 // pred_region
    _
  $region9: #{custom_backbone_forward.14} parent=0 // pred_fallthru
    _
  // Predicated region
  $region10: #{custom_backbone_forward.14} parent=0 // pred_check
    _
  $region11: #{custom_backbone_forward.14} parent=0 // pred_check_branch
    %13 = sbr.rel (0) target = $region13
  $region12: #{custom_backbone_forward.14} parent=0 // pred_region
    _
  $region13: #{custom_backbone_forward.14} parent=0 // pred_fallthru
    _
  %p15 = scmp.eq.s32.totalorder 0, 0
  // Predicated region
  $region14: #{custom_backbone_forward.14} parent=0 // pred_check
    %p16 = pneg %p15
  $region15: #{custom_backbone_forward.14} parent=0 // pred_check_branch
    %18 = sbr.rel (%p16) target = $region17
  $region16: #{custom_backbone_forward.14} parent=0 // pred_region
    %19 = vst [vmem:[#allocation2] sm:$0xff] 0.0
  $region17: #{custom_backbone_forward.14} parent=0 // pred_fallthru
    _
  %v20 = vld [vmem:[#allocation2] sm:$0xff]
  %v21 = vld [vmem:[%s0] sm:$0xff]
  %v22 = vld [vmem:[%s0 + $0x8] sm:$0xf]
  %v23 = vld [vmem:[%s1] sm:$0xf]
  %v24 = vld [vmem:[%s1 + $0x4] sm:$0xf]
  %v25 = vld [vmem:[%s1 + $0x8] sm:$0xf]
  %v26 = vld [vmem:[%s1 + $0xc] sm:$0xf]
  %v27 = vld [vmem:[%s1 + $0x10] sm:$0xf]
  %v28 = vld [vmem:[%s1 + $0x14] sm:$0xf]
  %v29 = vld [vmem:[%s1 + $0x18] sm:$0xf]
  %v30 = vld [vmem:[%s1 + $0x1c] sm:$0xf]
  %v31 = vld [vmem:[%s1 + $0x20] sm:$0xf]
  %v32 = vld [vmem:[%s1 + $0x24] sm:$0xf]
  %v33 = vld [vmem:[%s1 + $0x28] sm:$0xf]
  %v34 = vld [vmem:[%s1 + $0x2c] sm:$0xf]
  %v35 = vld [vmem:[%s1 + $0x30] sm:$0xf]
  %v36 = vld [vmem:[%s1 + $0x34] sm:$0xf]
  %v37 = vld [vmem:[%s1 + $0x38] sm:$0xf]
  %v38 = vld [vmem:[%s1 + $0x3c] sm:$0xf]
  %v39 = vld [vmem:[%s1 + $0x40] sm:$0xf]
  %v40 = vld [vmem:[%s1 + $0x44] sm:$0xf]
  %v41 = vld [vmem:[%s1 + $0x48] sm:$0xf]
  %v42 = vld [vmem:[%s1 + $0x4c] sm:$0xf]
  %v43 = vld [vmem:[%s1 + $0x50] sm:$0xf]
  %v44 = vld [vmem:[%s1 + $0x54] sm:$0xf]
  %v45 = vld [vmem:[%s1 + $0x58] sm:$0xf]
  %v46 = vld [vmem:[%s1 + $0x5c] sm:$0xf]
  %v47 = vld [vmem:[%s1 + $0x60] sm:$0xf]
  %v48 = vld [vmem:[%s1 + $0x64] sm:$0xf]
  %v49 = vld [vmem:[%s1 + $0x68] sm:$0xf]
  %v50 = vld [vmem:[%s1 + $0x6c] sm:$0xf]
  %v51 = vld [vmem:[%s1 + $0x70] sm:$0xf]
  %v52 = vld [vmem:[%s1 + $0x74] sm:$0xf]
  %v53 = vld [vmem:[%s1 + $0x78] sm:$0xf]
  %v54 = vld [vmem:[%s1 + $0x7c] sm:$0xf]
  %v55 = vld [vmem:[%s1 + $0x80] sm:$0xf]
  %v56 = vld [vmem:[%s1 + $0x84] sm:$0xf]
  %v57 = vld [vmem:[%s1 + $0x88] sm:$0xf]
  %v58 = vld [vmem:[%s1 + $0x8c] sm:$0xf]
  %v59 = vld [vmem:[%s1 + $0x90] sm:$0xf]
  %v60 = vld [vmem:[%s1 + $0x94] sm:$0xf]
  %v61 = vld [vmem:[%s1 + $0x98] sm:$0xf]
  %v62 = vld [vmem:[%s1 + $0x9c] sm:$0xf]
  %v63 = vld [vmem:[%s1 + $0xa0] sm:$0xf]
  %v64 = vld [vmem:[%s1 + $0xa4] sm:$0xf]
  %v65 = vld [vmem:[%s1 + $0xa8] sm:$0xf]
  %v66 = vld [vmem:[%s1 + $0xac] sm:$0xf]
  %v67 = vld [vmem:[%s1 + $0xb0] sm:$0xf]
  %v68 = vld [vmem:[%s1 + $0xb4] sm:$0xf]
  %v69 = vld [vmem:[%s1 + $0xb8] sm:$0xf]
  %v70 = vld [vmem:[%s1 + $0xbc] sm:$0xf]
  %v73 = vunpack.c.l.b16 %v21
  %v74 = vunpack.c.h.b16 %v21
  %v75 = vunpack.c.l.b16 %v22
  %v76 = vpack.c.b16 %v73, %v73
  %v77 = vpack.c.b16 %v74, %v74
  %v78 = vpack.c.b16 %v75, %v75
  %v130 = vunpack.c.l.b16 %v23
  %v131 = vunpack.c.l.b16 %v24
  %v132 = vunpack.c.l.b16 %v25
  %v133 = vunpack.c.l.b16 %v26
  %v134 = vunpack.c.l.b16 %v27
  %v135 = vunpack.c.l.b16 %v28
  %v136 = vunpack.c.l.b16 %v29
  %v137 = vunpack.c.l.b16 %v30
  %v138 = vunpack.c.l.b16 %v31
  %v139 = vunpack.c.l.b16 %v32
  %v140 = vunpack.c.l.b16 %v33
  %v141 = vunpack.c.l.b16 %v34
  %v142 = vunpack.c.l.b16 %v35
  %v143 = vunpack.c.l.b16 %v36
  %v144 = vunpack.c.l.b16 %v37
  %v145 = vunpack.c.l.b16 %v38
  %v146 = vunpack.c.l.b16 %v39
  %v147 = vunpack.c.l.b16 %v40
  %v148 = vunpack.c.l.b16 %v41
  %v149 = vunpack.c.l.b16 %v42
  %v150 = vunpack.c.l.b16 %v43
  %v151 = vunpack.c.l.b16 %v44
  %v152 = vunpack.c.l.b16 %v45
  %v153 = vunpack.c.l.b16 %v46
  %v154 = vunpack.c.l.b16 %v47
  %v155 = vunpack.c.l.b16 %v48
  %v156 = vunpack.c.l.b16 %v49
  %v157 = vunpack.c.l.b16 %v50
  %v158 = vunpack.c.l.b16 %v51
  %v159 = vunpack.c.l.b16 %v52
  %v160 = vunpack.c.l.b16 %v53
  %v161 = vunpack.c.l.b16 %v54
  %v162 = vunpack.c.l.b16 %v55
  %v163 = vunpack.c.l.b16 %v56
  %v164 = vunpack.c.l.b16 %v57
  %v165 = vunpack.c.l.b16 %v58
  %v166 = vunpack.c.l.b16 %v59
  %v167 = vunpack.c.l.b16 %v60
  %v168 = vunpack.c.l.b16 %v61
  %v169 = vunpack.c.l.b16 %v62
  %v170 = vunpack.c.l.b16 %v63
  %v171 = vunpack.c.l.b16 %v64
  %v172 = vunpack.c.l.b16 %v65
  %v173 = vunpack.c.l.b16 %v66
  %v174 = vunpack.c.l.b16 %v67
  %v175 = vunpack.c.l.b16 %v68
  %v176 = vunpack.c.l.b16 %v69
  %v177 = vunpack.c.l.b16 %v70
  %v178 = vpack.c.b16 %v131, %v130
  %v179 = vpack.c.b16 %v133, %v132
  %v180 = vpack.c.b16 %v135, %v134
  %v181 = vpack.c.b16 %v137, %v136
  %v182 = vpack.c.b16 %v139, %v138
  %v183 = vpack.c.b16 %v141, %v140
  %v184 = vpack.c.b16 %v143, %v142
  %v185 = vpack.c.b16 %v145, %v144
  %v186 = vpack.c.b16 %v147, %v146
  %v187 = vpack.c.b16 %v149, %v148
  %v188 = vpack.c.b16 %v151, %v150
  %v189 = vpack.c.b16 %v153, %v152
  %v190 = vpack.c.b16 %v155, %v154
  %v191 = vpack.c.b16 %v157, %v156
  %v192 = vpack.c.b16 %v159, %v158
  %v193 = vpack.c.b16 %v161, %v160
  %v194 = vpack.c.b16 %v163, %v162
  %v195 = vpack.c.b16 %v165, %v164
  %v196 = vpack.c.b16 %v167, %v166
  %v197 = vpack.c.b16 %v169, %v168
  %v198 = vpack.c.b16 %v171, %v170
  %v199 = vpack.c.b16 %v173, %v172
  %v200 = vpack.c.b16 %v175, %v174
  %v201 = vpack.c.b16 %v177, %v176
  %226 = vmatprep.subr.bf16.mxu0 0
  %227 = vmatpush1.bf16.msra.mxu0 %v178
  %228 = vmatprep.subr.bf16.mxu0 0
  %229 = vmatpush1.bf16.msra.mxu0 %v179
  %230 = vmatprep.subr.bf16.mxu0 0
  %231 = vmatpush1.bf16.msra.mxu0 %v180
  %232 = vmatprep.subr.bf16.mxu0 0
  %233 = vmatpush1.bf16.msra.mxu0 %v181
  %234 = vmatprep.subr.bf16.mxu0 0
  %235 = vmatpush1.bf16.msra.mxu0 %v182
  %236 = vmatprep.subr.bf16.mxu0 0
  %237 = vmatpush1.bf16.msra.mxu0 %v183
  %238 = vmatprep.subr.bf16.mxu0 0
  %239 = vmatpush1.bf16.msra.mxu0 %v184
  %240 = vmatprep.subr.bf16.mxu0 0
  %241 = vmatpush1.bf16.msra.mxu0 %v185
  %242 = vmatprep.subr.bf16.mxu0 0
  %243 = vmatpush1.bf16.msra.mxu0 %v186
  %244 = vmatprep.subr.bf16.mxu0 0
  %245 = vmatpush1.bf16.msra.mxu0 %v187
  %246 = vmatprep.subr.bf16.mxu0 0
  %247 = vmatpush1.bf16.msra.mxu0 %v188
  %248 = vmatprep.subr.bf16.mxu0 0
  %249 = vmatpush1.bf16.msra.mxu0 %v189
  %250 = vmatprep.subr.bf16.mxu0 0
  %251 = vmatpush1.bf16.msra.mxu0 %v190
  %252 = vmatprep.subr.bf16.mxu0 0
  %253 = vmatpush1.bf16.msra.mxu0 %v191
  %254 = vmatprep.subr.bf16.mxu0 0
  %255 = vmatpush1.bf16.msra.mxu0 %v192
  %256 = vmatprep.subr.bf16.mxu0 0
  %257 = vmatpush1.bf16.msra.mxu0 %v193
  %258 = vmatprep.mubr.bf16.mxu0 %v77
  %259 = vmatmul.mubr.bf16.gmra.mrb[0].mxu0 %v76
  %v260 = vpop.f32.mrb[0].mxu0
  %v261 = vadd.f32 0.0, %v260
  %v262 = vpop.f32.mrb[0].mxu0
  %v263 = vpop.f32.mrb[0].mxu0
  %v264 = vpop.f32.mrb[0].mxu0
  %265 = vdwg.mxu0
  %266 = vmatprep.subr.bf16.mxu0 0
  %267 = vmatpush1.bf16.msra.mxu0 %v194
  %268 = vmatprep.subr.bf16.mxu0 0
  %269 = vmatpush1.bf16.msra.mxu0 %v195
  %270 = vmatprep.subr.bf16.mxu0 0
  %271 = vmatpush1.bf16.msra.mxu0 %v196
  %272 = vmatprep.subr.bf16.mxu0 0
  %273 = vmatpush1.bf16.msra.mxu0 %v197
  %274 = vmatprep.subr.bf16.mxu0 0
  %275 = vmatpush1.bf16.msra.mxu0 %v198
  %276 = vmatprep.subr.bf16.mxu0 0
  %277 = vmatpush1.bf16.msra.mxu0 %v199
  %278 = vmatprep.subr.bf16.mxu0 0
  %279 = vmatpush1.bf16.msra.mxu0 %v200
  %280 = vmatprep.subr.bf16.mxu0 0
  %281 = vmatpush1.bf16.msra.mxu0 %v201
  %282 = vmatprep.subr.bf16.mxu0 0
  %283 = vmatpush1.bf16.msra.mxu0 0
  %284 = vmatprep.subr.bf16.mxu0 0
  %285 = vmatpush1.bf16.msra.mxu0 0
  %286 = vmatprep.subr.bf16.mxu0 0
  %287 = vmatpush1.bf16.msra.mxu0 0
  %288 = vmatprep.subr.bf16.mxu0 0
  %289 = vmatpush1.bf16.msra.mxu0 0
  %290 = vmatprep.subr.bf16.mxu0 0
  %291 = vmatpush1.bf16.msra.mxu0 0
  %292 = vmatprep.subr.bf16.mxu0 0
  %293 = vmatpush1.bf16.msra.mxu0 0
  %294 = vmatprep.subr.bf16.mxu0 0
  %295 = vmatpush1.bf16.msra.mxu0 0
  %296 = vmatprep.subr.bf16.mxu0 0
  %297 = vmatpush1.bf16.msra.mxu0 0
  %298 = vmatprep.mubr.bf16.mxu0 0
  %299 = vmatmul.mubr.bf16.gmra.mrb[0].mxu0 %v78
  %v300 = vpop.f32.mrb[0].mxu0
  %v301 = vadd.f32 %v261, %v300
  %v302 = vpop.f32.mrb[0].mxu0
  %v303 = vpop.f32.mrb[0].mxu0
  %v304 = vpop.f32.mrb[0].mxu0
  %305 = vdwg.mxu0
  %v306 = vadd.f32 %v20, %v301
  %307 = vst [vmem:[#allocation2] sm:$0xff] %v306
  // Predicated region
  $region18: #{custom_backbone_forward.14} parent=0 // pred_check
    %p308 = pneg %p15
  $region19: #{custom_backbone_forward.14} parent=0 // pred_check_branch
    %310 = sbr.rel (%p308) target = $region21
  $region20: #{custom_backbone_forward.14} parent=0 // pred_region
    %v311 = vld [vmem:[#allocation2] sm:$0xff]
    %v312 = vld [vmem:[%s2] sm:$0x1]
    %v314 = vlaneseq
    %v315 = vshrl.u32 %v314, 7
    %v316 = vsub.s32 0, %v315
    %v317 = vrot.slane %v312, %v316
    %v319 = vadd.f32 %v311, %v317
    %v320 = vmax.f32 %v319, 0.0
    %321 = vst [vmem:[%s3] sm:$0xff] %v320
  $region21: #{custom_backbone_forward.14} parent=0 // pred_fallthru
    _
  // Predicated region
  $region22: #{custom_backbone_forward.14} parent=0 // pred_check
    _
  $region23: #{custom_backbone_forward.14} parent=0 // pred_check_branch
    %323 = sbr.rel (0) target = $region25
  $region24: #{custom_backbone_forward.14} parent=0 // pred_region
    _
  $region25: #{custom_backbone_forward.14} parent=0 // pred_fallthru
    _
  // Predicated region
  $region26: #{custom_backbone_forward.14} parent=0 // pred_check
    _
  $region27: #{custom_backbone_forward.14} parent=0 // pred_check_branch
    %325 = sbr.rel (0) target = $region29
  $region28: #{custom_backbone_forward.14} parent=0 // pred_region
    _
  $region29: #{custom_backbone_forward.14} parent=0 // pred_fallthru
    _

// kernel: custom_backbone_forward.15
$region0: #{custom_backbone_forward.15}
  #allocation0 [shape = 'u32[]', space=smem, size = 0x4, offset = 0x4, fixed_abs, tag = 'smem constant byte address 0x4 - core index']
  #allocation1 [shape = 'u32[144,128]{1,0:T(1,128)}', space=vmem, size = 0x12000, scoped, tag = 'internal scratch']
  #allocation2 [shape = 'f32[8,128]{1,0:T(8,128)}', space=vmem, size = 0x1000, scoped, tag = 'scratch operand']
  %s0 = inlined_call_operand.vmem [shape: bf16[8,640], index: 0, kind: input, shape index: {}]
  %s1 = inlined_call_operand.vmem [shape: bf16[640,128], index: 1, kind: input, shape index: {}]
  %s2 = inlined_call_operand.vmem [shape: f32[1,128], index: 2, kind: input, shape index: {}]
  %s3 = inlined_call_operand.vmem [shape: f32[8,128], index: 3, kind: output, shape index: {}]
  %s4 = sld [smem:[#allocation0]]
  $region53: #{custom_backbone_forward.15} parent=0
    _
  %s6 = ssub.s32 1, %s4
  %s7 = scalar_select 0, %s6, %s4
  loop: start=0, step=1, limit=7
  $region2: #{custom_backbone_forward.15} parent=0 // loop_pre_header
    _
  $region3: #{custom_backbone_forward.15} parent=0 // loop_header
    %s9 = sphi 0, %s13
    %p10 = scmp.ge.s32.totalorder %s9, 7
    %s16 = sphi 0, %s35
    %s17 = sphi 0, %s31
    %s18 = sphi 0, %s27
    %s19 = sphi 0, %s16
    %s20 = sphi 0, %s17
    %s21 = sphi 0, %s18
    %s22 = sphi 0, %s19
    %s23 = sphi 0, %s20
    %s24 = sphi 0, %s21
    %s40 = sphi 0, %s42
    %s43 = sphi 0, %s40
    %s44 = sphi 0, %s43
    %s60 = sphi 0, %s44
    %s68 = sphi 0, %s70
    %s71 = sphi 0, %s68
    %s72 = sphi 0, %s71
    %s88 = sphi 0, %s72
    %s94 = sphi 0, %s96
    %s97 = sphi 0, %s94
    %s98 = sphi 0, %s97
    %s114 = sphi 0, %s98
    %s122 = sphi 0, %s124
    %s125 = sphi 0, %s122
    %s126 = sphi 0, %s125
    %s142 = sphi 0, %s126
  $region4: #{custom_backbone_forward.15} parent=0 // loop_header_branch
    %12 = sbr.rel (%p10) target = $region8
  $region5: #{custom_backbone_forward.15} parent=0 // loop_body
    %s14 = ssub.s32 %s9, 1
    %s15 = ssub.s32 %s9, 2
    %s25 = sadd.s32 1, %s18
    %p26 = scmp.ge.s32.totalorder %s25, 5
    %s27 = scalar_select %p26, 0, %s25
    %s28 = sadd.s32 1, %s17
    %s29 = scalar_select %p26, %s28, %s17
    %p30 = scmp.ge.s32.totalorder %s29, 1
    %s31 = scalar_select %p30, 0, %s29
    %s32 = sadd.s32 1, %s16
    %s33 = scalar_select %p30, %s32, %s16
    %p34 = scmp.ge.s32.totalorder %s33, 1
    %s35 = scalar_select %p34, 0, %s33
    %s36 = ssub.s32 %s16, %s35
    %s37 = ssub.s32 %s18, %s27
    %s38 = sor.u32 %s36, %s37
    %p39 = scmp.eq.s32.totalorder %s38, 0
    %s41 = sadd.s32 %s40, 1
    %s42 = scalar_select %p39, %s40, %s41
    %p45 = pneg %p39
    %p46 = scmp.eq.s32.totalorder %s9, 4
    %p47 = por %p45, %p46
    %p48 = scmp.ne.s32.totalorder %s40, %s43
    %p49 = scmp.eq.s32.totalorder %s9, 0
    %p50 = por %p48, %p49
    %p51 = scmp.ne.s32.totalorder %s40, %s43
    %p52 = scmp.eq.s32.totalorder %s14, 4
    %p53 = por %p51, %p52
    %p54 = scmp.ne.s32.totalorder %s43, %s44
    %p55 = scmp.eq.s32.totalorder %s14, 0
    %p56 = por %p54, %p55
    %p57 = scmp.ne.s32.totalorder %s43, %s44
    %p58 = scmp.eq.s32.totalorder %s15, 4
    %p59 = por %p57, %p58
    %p61 = scmp.ne.s32.totalorder %s44, %s60
    %p62 = scmp.eq.s32.totalorder %s15, 0
    %p63 = por %p61, %p62
    %s64 = ssub.s32 %s18, %s27
    %s65 = ssub.s32 %s17, %s31
    %s66 = sor.u32 %s64, %s65
    %p67 = scmp.eq.s32.totalorder %s66, 0
    %s69 = sadd.s32 %s68, 1
    %s70 = scalar_select %p67, %s68, %s69
    %p73 = pneg %p67
    %p74 = scmp.eq.s32.totalorder %s9, 4
    %p75 = por %p73, %p74
    %p76 = scmp.ne.s32.totalorder %s68, %s71
    %p77 = scmp.eq.s32.totalorder %s9, 0
    %p78 = por %p76, %p77
    %p79 = scmp.ne.s32.totalorder %s68, %s71
    %p80 = scmp.eq.s32.totalorder %s14, 4
    %p81 = por %p79, %p80
    %p82 = scmp.ne.s32.totalorder %s71, %s72
    %p83 = scmp.eq.s32.totalorder %s14, 0
    %p84 = por %p82, %p83
    %p85 = scmp.ne.s32.totalorder %s71, %s72
    %p86 = scmp.eq.s32.totalorder %s15, 4
    %p87 = por %p85, %p86
    %p89 = scmp.ne.s32.totalorder %s72, %s88
    %p90 = scmp.eq.s32.totalorder %s15, 0
    %p91 = por %p89, %p90
    %s92 = ssub.s32 %s17, %s31
    %p93 = scmp.eq.s32.totalorder %s92, 0
    %s95 = sadd.s32 %s94, 1
    %s96 = scalar_select %p93, %s94, %s95
    %p99 = pneg %p93
    %p100 = scmp.eq.s32.totalorder %s9, 4
    %p101 = por %p99, %p100
    %p102 = scmp.ne.s32.totalorder %s94, %s97
    %p103 = scmp.eq.s32.totalorder %s9, 0
    %p104 = por %p102, %p103
    %p105 = scmp.ne.s32.totalorder %s94, %s97
    %p106 = scmp.eq.s32.totalorder %s14, 4
    %p107 = por %p105, %p106
    %p108 = scmp.ne.s32.totalorder %s97, %s98
    %p109 = scmp.eq.s32.totalorder %s14, 0
    %p110 = por %p108, %p109
    %p111 = scmp.ne.s32.totalorder %s97, %s98
    %p112 = scmp.eq.s32.totalorder %s15, 4
    %p113 = por %p111, %p112
    %p115 = scmp.ne.s32.totalorder %s98, %s114
    %p116 = scmp.eq.s32.totalorder %s15, 0
    %p117 = por %p115, %p116
    %s118 = ssub.s32 %s16, %s35
    %s119 = ssub.s32 %s17, %s31
    %s120 = sor.u32 %s118, %s119
    %p121 = scmp.eq.s32.totalorder %s120, 0
    %s123 = sadd.s32 %s122, 1
    %s124 = scalar_select %p121, %s122, %s123
    %p127 = pneg %p121
    %p128 = scmp.eq.s32.totalorder %s9, 4
    %p129 = por %p127, %p128
    %p130 = scmp.ne.s32.totalorder %s122, %s125
    %p131 = scmp.eq.s32.totalorder %s9, 0
    %p132 = por %p130, %p131
    %p133 = scmp.ne.s32.totalorder %s122, %s125
    %p134 = scmp.eq.s32.totalorder %s14, 4
    %p135 = por %p133, %p134
    %p136 = scmp.ne.s32.totalorder %s125, %s126
    %p137 = scmp.eq.s32.totalorder %s14, 0
    %p138 = por %p136, %p137
    %p139 = scmp.ne.s32.totalorder %s125, %s126
    %p140 = scmp.eq.s32.totalorder %s15, 4
    %p141 = por %p139, %p140
    %p143 = scmp.ne.s32.totalorder %s126, %s142
    %p144 = scmp.eq.s32.totalorder %s15, 0
    %p145 = por %p143, %p144
    %p146 = scmp.le.s32.totalorder 1, %s9
    %p147 = scmp.lt.s32.totalorder %s9, 6
    %p148 = pnand %p146, %p147
    %p149 = pneg %p148
    // Predicated region
    $region9: #{custom_backbone_forward.15} parent=5 // pred_check
      _
    $region10: #{custom_backbone_forward.15} parent=5 // pred_check_branch
      %151 = sbr.rel (%p148) target = $region12
    $region11: #{custom_backbone_forward.15} parent=5 // pred_region
      %s152 = ssub.s32 %s9, 1
      // Predicated region
      $region13: #{custom_backbone_forward.15} parent=11 // pred_check
        %p153 = pneg %p110
      $region14: #{custom_backbone_forward.15} parent=11 // pred_check_branch
        %155 = sbr.rel (%p153) target = $region16
      $region15: #{custom_backbone_forward.15} parent=11 // pred_region
        %p156 = scmp.lt.s32.totalorder %s20, 0
        %s157 = scalar_select %p156, %s20, 0
        %s158 = scalar_lea.vmem %s2, %s157
      $region16: #{custom_backbone_forward.15} parent=11 // pred_fallthru
        _
    $region12: #{custom_backbone_forward.15} parent=5 // pred_fallthru
      _
    %p159 = scmp.lt.s32.totalorder %s9, 5
    // Predicated region
    $region17: #{custom_backbone_forward.15} parent=5 // pred_check
      %p160 = pneg %p159
    $region18: #{custom_backbone_forward.15} parent=5 // pred_check_branch
      %162 = sbr.rel (%p160) target = $region20
    $region19: #{custom_backbone_forward.15} parent=5 // pred_region
      // Predicated region
      $region21: #{custom_backbone_forward.15} parent=19 // pred_check
        %p163 = pneg %p50
      $region22: #{custom_backbone_forward.15} parent=19 // pred_check_branch
        %165 = sbr.rel (%p163) target = $region24
      $region23: #{custom_backbone_forward.15} parent=19 // pred_region
        %p166 = scmp.lt.s32.totalorder %s16, 0
        %s167 = scalar_select %p166, %s16, 0
        %p168 = scmp.lt.s32.totalorder %s18, 4
        %s169 = scalar_select %p168, %s18, 4
        %s170 = smul.addr %s167, 5
        %s171 = sadd.s32 %s169, %s170
        %s172 = smul.addr %s171, 4
        %s173 = scalar_lea.vmem %s0, %s172
      $region24: #{custom_backbone_forward.15} parent=19 // pred_fallthru
        _
      // Predicated region
      $region25: #{custom_backbone_forward.15} parent=19 // pred_check
        %p174 = pneg %p78
      $region26: #{custom_backbone_forward.15} parent=19 // pred_check_branch
        %176 = sbr.rel (%p174) target = $region28
      $region27: #{custom_backbone_forward.15} parent=19 // pred_region
        %s177 = smul.u32 16, %s18
        %p178 = scmp.lt.s32.totalorder %s177, 79
        %s179 = scalar_select %p178, %s177, 79
        %p180 = scmp.lt.s32.totalorder %s17, 0
        %s181 = scalar_select %p180, %s17, 0
        %s182 = sadd.s32 %s181, %s179
        %s183 = smul.addr %s182, 4
        %s184 = scalar_lea.vmem %s1, %s183
        %s185 = smul.u32 16, %s18
      $region28: #{custom_backbone_forward.15} parent=19 // pred_fallthru
        _
    $region20: #{custom_backbone_forward.15} parent=5 // pred_fallthru
      _
    %p186 = scmp.le.s32.totalorder 1, %s9
    %p187 = scmp.lt.s32.totalorder %s9, 6
    %p188 = pnand %p186, %p187
    %p189 = pneg %p188
    // Predicated region
    $region29: #{custom_backbone_forward.15} parent=5 // pred_check
      _
    $region30: #{custom_backbone_forward.15} parent=5 // pred_check_branch
      %191 = sbr.rel (%p188) target = $region32
    $region31: #{custom_backbone_forward.15} parent=5 // pred_region
      %s192 = ssub.s32 %s9, 1
      %p193 = scmp.lt.s32.totalorder %s19, 0
      %s194 = scalar_select %p193, %s19, 0
      %p195 = scmp.lt.s32.totalorder %s21, 4
      %s196 = scalar_select %p195, %s21, 4
      %s197 = smul.addr %s194, 5
      %s198 = sadd.s32 %s196, %s197
      %s199 = smul.addr %s198, 4
      %s200 = scalar_lea.vmem %s0, %s199
      %p201 = pneg %p56
      %p202 = pneg %p53
      %s203 = smul.u32 16, %s21
      %p204 = scmp.lt.s32.totalorder %s203, 79
      %s205 = scalar_select %p204, %s203, 79
      %p206 = scmp.lt.s32.totalorder %s20, 0
      %s207 = scalar_select %p206, %s20, 0
      %s208 = sadd.s32 %s207, %s205
      %s209 = smul.addr %s208, 4
      %s210 = scalar_lea.vmem %s1, %s209
      %p211 = pneg %p84
      %p212 = pneg %p81
      %p213 = scmp.lt.s32.totalorder %s20, 0
      %s214 = scalar_select %p213, %s20, 0
      %s215 = scalar_lea.vmem %s2, %s214
      %p216 = pneg %p110
      %p217 = pneg %p107
      %p218 = pneg %p138
      %p219 = pneg %p135
      %p220 = scmp.lt.s32.totalorder %s19, 0
      %s221 = scalar_select %p220, %s19, 0
      %p222 = scmp.lt.s32.totalorder %s20, 0
      %s223 = scalar_select %p222, %s20, 0
      %s224 = sadd.s32 %s223, %s221
      %s225 = smul.addr %s224, 8
      %s226 = scalar_lea.vmem %s3, %s225
      %p227 = scmp.lt.s32.totalorder %s19, 0
      %s228 = scalar_select %p227, %s19, 0
      %p229 = scmp.lt.s32.totalorder %s21, 4
      %s230 = scalar_select %p229, %s21, 4
      %s231 = smul.addr %s228, 5
      %s232 = sadd.s32 %s230, %s231
      %s233 = smul.addr %s232, 4
      %s234 = scalar_lea.vmem %s0, %s233
      %s235 = smul.u32 16, %s21
      %p236 = scmp.lt.s32.totalorder %s235, 79
      %s237 = scalar_select %p236, %s235, 79
      %p238 = scmp.lt.s32.totalorder %s20, 0
      %s239 = scalar_select %p238, %s20, 0
      %s240 = sadd.s32 %s239, %s237
      %s241 = smul.addr %s240, 4
      %s242 = scalar_lea.vmem %s1, %s241
      %s243 = smul.u32 16, %s21
      %p244 = scmp.lt.s32.totalorder %s20, 0
      %s245 = scalar_select %p244, %s20, 0
      %s246 = scalar_lea.vmem %s2, %s245
      %p247 = scmp.lt.s32.totalorder %s19, 0
      %s248 = scalar_select %p247, %s19, 0
      %p249 = scmp.lt.s32.totalorder %s20, 0
      %s250 = scalar_select %p249, %s20, 0
      %s251 = sadd.s32 %s250, %s248
      %s252 = smul.addr %s251, 8
      %s253 = scalar_lea.vmem %s3, %s252
      %p255 = scmp.eq.s32.totalorder %s21, 0
      // Predicated region
      $region33: #{custom_backbone_forward.15} parent=31 // pred_check
        %p256 = pneg %p255
      $region34: #{custom_backbone_forward.15} parent=31 // pred_check_branch
        %258 = sbr.rel (%p256) target = $region36
      $region35: #{custom_backbone_forward.15} parent=31 // pred_region
        %259 = vst [vmem:[#allocation2] sm:$0xff] 0.0
      $region36: #{custom_backbone_forward.15} parent=31 // pred_fallthru
        _
      %v260 = vld [vmem:[#allocation2] sm:$0xff]
      %v261 = vld [vmem:[%s234] sm:$0xf]
      %v262 = vld [vmem:[%s242] sm:$0xf]
      %v263 = vld [vmem:[%s242 + $0x4] sm:$0xf]
      %v264 = vld [vmem:[%s242 + $0x8] sm:$0xf]
      %v265 = vld [vmem:[%s242 + $0xc] sm:$0xf]
      %v266 = vld [vmem:[%s242 + $0x10] sm:$0xf]
      %v267 = vld [vmem:[%s242 + $0x14] sm:$0xf]
      %v268 = vld [vmem:[%s242 + $0x18] sm:$0xf]
      %v269 = vld [vmem:[%s242 + $0x1c] sm:$0xf]
      %v270 = vld [vmem:[%s242 + $0x20] sm:$0xf]
      %v271 = vld [vmem:[%s242 + $0x24] sm:$0xf]
      %v272 = vld [vmem:[%s242 + $0x28] sm:$0xf]
      %v273 = vld [vmem:[%s242 + $0x2c] sm:$0xf]
      %v274 = vld [vmem:[%s242 + $0x30] sm:$0xf]
      %v275 = vld [vmem:[%s242 + $0x34] sm:$0xf]
      %v276 = vld [vmem:[%s242 + $0x38] sm:$0xf]
      %v277 = vld [vmem:[%s242 + $0x3c] sm:$0xf]
      %v294 = vunpack.c.l.b16 %v262
      %v295 = vunpack.c.l.b16 %v263
      %v296 = vunpack.c.l.b16 %v264
      %v297 = vunpack.c.l.b16 %v265
      %v298 = vunpack.c.l.b16 %v266
      %v299 = vunpack.c.l.b16 %v267
      %v300 = vunpack.c.l.b16 %v268
      %v301 = vunpack.c.l.b16 %v269
      %v302 = vunpack.c.l.b16 %v270
      %v303 = vunpack.c.l.b16 %v271
      %v304 = vunpack.c.l.b16 %v272
      %v305 = vunpack.c.l.b16 %v273
      %v306 = vunpack.c.l.b16 %v274
      %v307 = vunpack.c.l.b16 %v275
      %v308 = vunpack.c.l.b16 %v276
      %v309 = vunpack.c.l.b16 %v277
      %v310 = vpack.c.b16 %v295, %v294
      %v311 = vpack.c.b16 %v297, %v296
      %v312 = vpack.c.b16 %v299, %v298
      %v313 = vpack.c.b16 %v301, %v300
      %v314 = vpack.c.b16 %v303, %v302
      %v315 = vpack.c.b16 %v305, %v304
      %v316 = vpack.c.b16 %v307, %v306
      %v317 = vpack.c.b16 %v309, %v308
      %326 = vmatprep.subr.bf16.mxu0 0
      %327 = vmatpush1.bf16.msra.mxu0 %v310
      %328 = vmatprep.subr.bf16.mxu0 0
      %329 = vmatpush1.bf16.msra.mxu0 %v311
      %330 = vmatprep.subr.bf16.mxu0 0
      %331 = vmatpush1.bf16.msra.mxu0 %v312
      %332 = vmatprep.subr.bf16.mxu0 0
      %333 = vmatpush1.bf16.msra.mxu0 %v313
      %334 = vmatprep.subr.bf16.mxu0 0
      %335 = vmatpush1.bf16.msra.mxu0 %v314
      %336 = vmatprep.subr.bf16.mxu0 0
      %337 = vmatpush1.bf16.msra.mxu0 %v315
      %338 = vmatprep.subr.bf16.mxu0 0
      %339 = vmatpush1.bf16.msra.mxu0 %v316
      %340 = vmatprep.subr.bf16.mxu0 0
      %341 = vmatpush1.bf16.msra.mxu0 %v317
      %342 = vmatprep.subr.bf16.mxu0 0
      %343 = vmatpush1.bf16.msra.mxu0 0
      %344 = vmatprep.subr.bf16.mxu0 0
      %345 = vmatpush1.bf16.msra.mxu0 0
      %346 = vmatprep.subr.bf16.mxu0 0
      %347 = vmatpush1.bf16.msra.mxu0 0
      %348 = vmatprep.subr.bf16.mxu0 0
      %349 = vmatpush1.bf16.msra.mxu0 0
      %350 = vmatprep.subr.bf16.mxu0 0
      %351 = vmatpush1.bf16.msra.mxu0 0
      %352 = vmatprep.subr.bf16.mxu0 0
      %353 = vmatpush1.bf16.msra.mxu0 0
      %354 = vmatprep.subr.bf16.mxu0 0
      %355 = vmatpush1.bf16.msra.mxu0 0
      %356 = vmatprep.subr.bf16.mxu0 0
      %357 = vmatpush1.bf16.msra.mxu0 0
      %358 = vmatprep.mubr.bf16.mxu0 0
      %359 = vmatmul.mubr.bf16.gmra.mrb[0].mxu0 %v261
      %v360 = vpop.f32.mrb[0].mxu0
      %v361 = vadd.f32 0.0, %v360
      %v362 = vpop.f32.mrb[0].mxu0
      %v363 = vpop.f32.mrb[0].mxu0
      %v364 = vpop.f32.mrb[0].mxu0
      %365 = vdwg.mxu0
      %v366 = vadd.f32 %v260, %v361
      %367 = vst [vmem:[#allocation2] sm:$0xff] %v366
      %p368 = scmp.eq.s32.totalorder %s21, 4
      // Predicated region
      $region37: #{custom_backbone_forward.15} parent=31 // pred_check
        %p369 = pneg %p368
      $region38: #{custom_backbone_forward.15} parent=31 // pred_check_branch
        %371 = sbr.rel (%p369) target = $region40
      $region39: #{custom_backbone_forward.15} parent=31 // pred_region
        %v372 = vld [vmem:[#allocation2] sm:$0xff]
        %v373 = vld [vmem:[%s246] sm:$0x1]
        %v375 = vlaneseq
        %v376 = vshrl.u32 %v375, 7
        %v377 = vsub.s32 0, %v376
        %v378 = vrot.slane %v373, %v377
        %v380 = vadd.f32 %v372, %v378
        %v381 = vmax.f32 %v380, 0.0
        %382 = vst [vmem:[%s253] sm:$0xff] %v381
      $region40: #{custom_backbone_forward.15} parent=31 // pred_fallthru
        _
      %p383 = scmp.lt.s32.totalorder %s19, 0
      %s384 = scalar_select %p383, %s19, 0
      %p385 = scmp.lt.s32.totalorder %s20, 0
      %s386 = scalar_select %p385, %s20, 0
      %s387 = sadd.s32 %s386, %s384
      %s388 = smul.addr %s387, 8
      %s389 = scalar_lea.vmem %s3, %s388
      // Predicated region
      $region41: #{custom_backbone_forward.15} parent=31 // pred_check
        %p390 = pneg %p135
      $region42: #{custom_backbone_forward.15} parent=31 // pred_check_branch
        %392 = sbr.rel (%p390) target = $region44
      $region43: #{custom_backbone_forward.15} parent=31 // pred_region
        _
      $region44: #{custom_backbone_forward.15} parent=31 // pred_fallthru
        _
      // Predicated region
      $region45: #{custom_backbone_forward.15} parent=31 // pred_check
        %p393 = pneg %p135
      $region46: #{custom_backbone_forward.15} parent=31 // pred_check_branch
        %395 = sbr.rel (%p393) target = $region48
      $region47: #{custom_backbone_forward.15} parent=31 // pred_region
        %p396 = scmp.lt.s32.totalorder %s19, 0
        %s397 = scalar_select %p396, %s19, 0
        %p398 = scmp.lt.s32.totalorder %s20, 0
        %s399 = scalar_select %p398, %s20, 0
        %s400 = sadd.s32 %s399, %s397
        %s401 = smul.addr %s400, 8
        %s402 = scalar_lea.vmem %s3, %s401
      $region48: #{custom_backbone_forward.15} parent=31 // pred_fallthru
        _
    $region32: #{custom_backbone_forward.15} parent=5 // pred_fallthru
      _
    %p403 = scmp.le.s32.totalorder 2, %s9
    // Predicated region
    $region49: #{custom_backbone_forward.15} parent=5 // pred_check
      %p404 = pneg %p403
    $region50: #{custom_backbone_forward.15} parent=5 // pred_check_branch
      %406 = sbr.rel (%p404) target = $region52
    $region51: #{custom_backbone_forward.15} parent=5 // pred_region
      %s407 = ssub.s32 %s9, 2
    $region52: #{custom_backbone_forward.15} parent=5 // pred_fallthru
      _
  $region6: #{custom_backbone_forward.15} parent=0 // loop_footer
    %s13 = sadd.s32 1, %s9
  $region7: #{custom_backbone_forward.15} parent=0 // loop_footer_branch
    %8 = sbr.rel target = $region3
  $region8: #{custom_backbone_forward.15} parent=0 // loop_exit
    _

// kernel: custom_backbone_forward.17
$region0: #{custom_backbone_forward.17}
  #allocation0 [shape = 'u32[]', space=smem, size = 0x4, offset = 0x4, fixed_abs, tag = 'smem constant byte address 0x4 - core index']
  #allocation1 [shape = 'u32[144,128]{1,0:T(1,128)}', space=vmem, size = 0x12000, scoped, tag = 'internal scratch']
  #allocation2 [shape = 'f32[8,128]{1,0:T(8,128)}', space=vmem, size = 0x1000, scoped, tag = 'scratch operand']
  %s0 = inlined_call_operand.vmem [shape: bf16[8,1152], index: 0, kind: input, shape index: {}]
  %s1 = inlined_call_operand.vmem [shape: bf16[1152,128], index: 1, kind: input, shape index: {}]
  %s2 = inlined_call_operand.vmem [shape: f32[1,128], index: 2, kind: input, shape index: {}]
  %s3 = inlined_call_operand.vmem [shape: f32[8,128], index: 3, kind: output, shape index: {}]
  %s4 = sld [smem:[#allocation0]]
  $region53: #{custom_backbone_forward.17} parent=0
    _
  %s6 = ssub.s32 1, %s4
  %s7 = scalar_select 0, %s6, %s4
  loop: start=0, step=1, limit=5
  $region2: #{custom_backbone_forward.17} parent=0 // loop_pre_header
    _
  $region3: #{custom_backbone_forward.17} parent=0 // loop_header
    %s9 = sphi 0, %s13
    %p10 = scmp.ge.s32.totalorder %s9, 5
    %s16 = sphi 0, %s35
    %s17 = sphi 0, %s31
    %s18 = sphi 0, %s27
    %s19 = sphi 0, %s16
    %s20 = sphi 0, %s17
    %s21 = sphi 0, %s18
    %s22 = sphi 0, %s19
    %s23 = sphi 0, %s20
    %s24 = sphi 0, %s21
    %s40 = sphi 0, %s42
    %s43 = sphi 0, %s40
    %s44 = sphi 0, %s43
    %s60 = sphi 0, %s44
    %s68 = sphi 0, %s70
    %s71 = sphi 0, %s68
    %s72 = sphi 0, %s71
    %s88 = sphi 0, %s72
    %s94 = sphi 0, %s96
    %s97 = sphi 0, %s94
    %s98 = sphi 0, %s97
    %s114 = sphi 0, %s98
    %s122 = sphi 0, %s124
    %s125 = sphi 0, %s122
    %s126 = sphi 0, %s125
    %s142 = sphi 0, %s126
  $region4: #{custom_backbone_forward.17} parent=0 // loop_header_branch
    %12 = sbr.rel (%p10) target = $region8
  $region5: #{custom_backbone_forward.17} parent=0 // loop_body
    %s14 = ssub.s32 %s9, 1
    %s15 = ssub.s32 %s9, 2
    %s25 = sadd.s32 1, %s18
    %p26 = scmp.ge.s32.totalorder %s25, 3
    %s27 = scalar_select %p26, 0, %s25
    %s28 = sadd.s32 1, %s17
    %s29 = scalar_select %p26, %s28, %s17
    %p30 = scmp.ge.s32.totalorder %s29, 1
    %s31 = scalar_select %p30, 0, %s29
    %s32 = sadd.s32 1, %s16
    %s33 = scalar_select %p30, %s32, %s16
    %p34 = scmp.ge.s32.totalorder %s33, 1
    %s35 = scalar_select %p34, 0, %s33
    %s36 = ssub.s32 %s16, %s35
    %s37 = ssub.s32 %s18, %s27
    %s38 = sor.u32 %s36, %s37
    %p39 = scmp.eq.s32.totalorder %s38, 0
    %s41 = sadd.s32 %s40, 1
    %s42 = scalar_select %p39, %s40, %s41
    %p45 = pneg %p39
    %p46 = scmp.eq.s32.totalorder %s9, 2
    %p47 = por %p45, %p46
    %p48 = scmp.ne.s32.totalorder %s40, %s43
    %p49 = scmp.eq.s32.totalorder %s9, 0
    %p50 = por %p48, %p49
    %p51 = scmp.ne.s32.totalorder %s40, %s43
    %p52 = scmp.eq.s32.totalorder %s14, 2
    %p53 = por %p51, %p52
    %p54 = scmp.ne.s32.totalorder %s43, %s44
    %p55 = scmp.eq.s32.totalorder %s14, 0
    %p56 = por %p54, %p55
    %p57 = scmp.ne.s32.totalorder %s43, %s44
    %p58 = scmp.eq.s32.totalorder %s15, 2
    %p59 = por %p57, %p58
    %p61 = scmp.ne.s32.totalorder %s44, %s60
    %p62 = scmp.eq.s32.totalorder %s15, 0
    %p63 = por %p61, %p62
    %s64 = ssub.s32 %s18, %s27
    %s65 = ssub.s32 %s17, %s31
    %s66 = sor.u32 %s64, %s65
    %p67 = scmp.eq.s32.totalorder %s66, 0
    %s69 = sadd.s32 %s68, 1
    %s70 = scalar_select %p67, %s68, %s69
    %p73 = pneg %p67
    %p74 = scmp.eq.s32.totalorder %s9, 2
    %p75 = por %p73, %p74
    %p76 = scmp.ne.s32.totalorder %s68, %s71
    %p77 = scmp.eq.s32.totalorder %s9, 0
    %p78 = por %p76, %p77
    %p79 = scmp.ne.s32.totalorder %s68, %s71
    %p80 = scmp.eq.s32.totalorder %s14, 2
    %p81 = por %p79, %p80
    %p82 = scmp.ne.s32.totalorder %s71, %s72
    %p83 = scmp.eq.s32.totalorder %s14, 0
    %p84 = por %p82, %p83
    %p85 = scmp.ne.s32.totalorder %s71, %s72
    %p86 = scmp.eq.s32.totalorder %s15, 2
    %p87 = por %p85, %p86
    %p89 = scmp.ne.s32.totalorder %s72, %s88
    %p90 = scmp.eq.s32.totalorder %s15, 0
    %p91 = por %p89, %p90
    %s92 = ssub.s32 %s17, %s31
    %p93 = scmp.eq.s32.totalorder %s92, 0
    %s95 = sadd.s32 %s94, 1
    %s96 = scalar_select %p93, %s94, %s95
    %p99 = pneg %p93
    %p100 = scmp.eq.s32.totalorder %s9, 2
    %p101 = por %p99, %p100
    %p102 = scmp.ne.s32.totalorder %s94, %s97
    %p103 = scmp.eq.s32.totalorder %s9, 0
    %p104 = por %p102, %p103
    %p105 = scmp.ne.s32.totalorder %s94, %s97
    %p106 = scmp.eq.s32.totalorder %s14, 2
    %p107 = por %p105, %p106
    %p108 = scmp.ne.s32.totalorder %s97, %s98
    %p109 = scmp.eq.s32.totalorder %s14, 0
    %p110 = por %p108, %p109
    %p111 = scmp.ne.s32.totalorder %s97, %s98
    %p112 = scmp.eq.s32.totalorder %s15, 2
    %p113 = por %p111, %p112
    %p115 = scmp.ne.s32.totalorder %s98, %s114
    %p116 = scmp.eq.s32.totalorder %s15, 0
    %p117 = por %p115, %p116
    %s118 = ssub.s32 %s16, %s35
    %s119 = ssub.s32 %s17, %s31
    %s120 = sor.u32 %s118, %s119
    %p121 = scmp.eq.s32.totalorder %s120, 0
    %s123 = sadd.s32 %s122, 1
    %s124 = scalar_select %p121, %s122, %s123
    %p127 = pneg %p121
    %p128 = scmp.eq.s32.totalorder %s9, 2
    %p129 = por %p127, %p128
    %p130 = scmp.ne.s32.totalorder %s122, %s125
    %p131 = scmp.eq.s32.totalorder %s9, 0
    %p132 = por %p130, %p131
    %p133 = scmp.ne.s32.totalorder %s122, %s125
    %p134 = scmp.eq.s32.totalorder %s14, 2
    %p135 = por %p133, %p134
    %p136 = scmp.ne.s32.totalorder %s125, %s126
    %p137 = scmp.eq.s32.totalorder %s14, 0
    %p138 = por %p136, %p137
    %p139 = scmp.ne.s32.totalorder %s125, %s126
    %p140 = scmp.eq.s32.totalorder %s15, 2
    %p141 = por %p139, %p140
    %p143 = scmp.ne.s32.totalorder %s126, %s142
    %p144 = scmp.eq.s32.totalorder %s15, 0
    %p145 = por %p143, %p144
    %p146 = scmp.le.s32.totalorder 1, %s9
    %p147 = scmp.lt.s32.totalorder %s9, 4
    %p148 = pnand %p146, %p147
    %p149 = pneg %p148
    // Predicated region
    $region9: #{custom_backbone_forward.17} parent=5 // pred_check
      _
    $region10: #{custom_backbone_forward.17} parent=5 // pred_check_branch
      %151 = sbr.rel (%p148) target = $region12
    $region11: #{custom_backbone_forward.17} parent=5 // pred_region
      %s152 = ssub.s32 %s9, 1
      // Predicated region
      $region13: #{custom_backbone_forward.17} parent=11 // pred_check
        %p153 = pneg %p110
      $region14: #{custom_backbone_forward.17} parent=11 // pred_check_branch
        %155 = sbr.rel (%p153) target = $region16
      $region15: #{custom_backbone_forward.17} parent=11 // pred_region
        %p156 = scmp.lt.s32.totalorder %s20, 0
        %s157 = scalar_select %p156, %s20, 0
        %s158 = scalar_lea.vmem %s2, %s157
      $region16: #{custom_backbone_forward.17} parent=11 // pred_fallthru
        _
    $region12: #{custom_backbone_forward.17} parent=5 // pred_fallthru
      _
    %p159 = scmp.lt.s32.totalorder %s9, 3
    // Predicated region
    $region17: #{custom_backbone_forward.17} parent=5 // pred_check
      %p160 = pneg %p159
    $region18: #{custom_backbone_forward.17} parent=5 // pred_check_branch
      %162 = sbr.rel (%p160) target = $region20
    $region19: #{custom_backbone_forward.17} parent=5 // pred_region
      // Predicated region
      $region21: #{custom_backbone_forward.17} parent=19 // pred_check
        %p163 = pneg %p50
      $region22: #{custom_backbone_forward.17} parent=19 // pred_check_branch
        %165 = sbr.rel (%p163) target = $region24
      $region23: #{custom_backbone_forward.17} parent=19 // pred_region
        %s166 = smul.u32 3, %s18
        %p167 = scmp.lt.s32.totalorder %s16, 0
        %s168 = scalar_select %p167, %s16, 0
        %p169 = scmp.lt.s32.totalorder %s166, 8
        %s170 = scalar_select %p169, %s166, 8
        %s171 = smul.addr %s168, 9
        %s172 = sadd.s32 %s170, %s171
        %s173 = smul.addr %s172, 4
        %s174 = scalar_lea.vmem %s0, %s173
        %s175 = smul.u32 3, %s18
      $region24: #{custom_backbone_forward.17} parent=19 // pred_fallthru
        _
      // Predicated region
      $region25: #{custom_backbone_forward.17} parent=19 // pred_check
        %p176 = pneg %p78
      $region26: #{custom_backbone_forward.17} parent=19 // pred_check_branch
        %178 = sbr.rel (%p176) target = $region28
      $region27: #{custom_backbone_forward.17} parent=19 // pred_region
        %s179 = smul.u32 48, %s18
        %p180 = scmp.lt.s32.totalorder %s179, 143
        %s181 = scalar_select %p180, %s179, 143
        %p182 = scmp.lt.s32.totalorder %s17, 0
        %s183 = scalar_select %p182, %s17, 0
        %s184 = sadd.s32 %s183, %s181
        %s185 = smul.addr %s184, 4
        %s186 = scalar_lea.vmem %s1, %s185
        %s187 = smul.u32 48, %s18
      $region28: #{custom_backbone_forward.17} parent=19 // pred_fallthru
        _
    $region20: #{custom_backbone_forward.17} parent=5 // pred_fallthru
      _
    %p188 = scmp.le.s32.totalorder 1, %s9
    %p189 = scmp.lt.s32.totalorder %s9, 4
    %p190 = pnand %p188, %p189
    %p191 = pneg %p190
    // Predicated region
    $region29: #{custom_backbone_forward.17} parent=5 // pred_check
      _
    $region30: #{custom_backbone_forward.17} parent=5 // pred_check_branch
      %193 = sbr.rel (%p190) target = $region32
    $region31: #{custom_backbone_forward.17} parent=5 // pred_region
      %s194 = ssub.s32 %s9, 1
      %s195 = smul.u32 3, %s21
      %p196 = scmp.lt.s32.totalorder %s19, 0
      %s197 = scalar_select %p196, %s19, 0
      %p198 = scmp.lt.s32.totalorder %s195, 8
      %s199 = scalar_select %p198, %s195, 8
      %s200 = smul.addr %s197, 9
      %s201 = sadd.s32 %s199, %s200
      %s202 = smul.addr %s201, 4
      %s203 = scalar_lea.vmem %s0, %s202
      %p204 = pneg %p56
      %p205 = pneg %p53
      %s206 = smul.u32 48, %s21
      %p207 = scmp.lt.s32.totalorder %s206, 143
      %s208 = scalar_select %p207, %s206, 143
      %p209 = scmp.lt.s32.totalorder %s20, 0
      %s210 = scalar_select %p209, %s20, 0
      %s211 = sadd.s32 %s210, %s208
      %s212 = smul.addr %s211, 4
      %s213 = scalar_lea.vmem %s1, %s212
      %p214 = pneg %p84
      %p215 = pneg %p81
      %p216 = scmp.lt.s32.totalorder %s20, 0
      %s217 = scalar_select %p216, %s20, 0
      %s218 = scalar_lea.vmem %s2, %s217
      %p219 = pneg %p110
      %p220 = pneg %p107
      %p221 = pneg %p138
      %p222 = pneg %p135
      %p223 = scmp.lt.s32.totalorder %s19, 0
      %s224 = scalar_select %p223, %s19, 0
      %p225 = scmp.lt.s32.totalorder %s20, 0
      %s226 = scalar_select %p225, %s20, 0
      %s227 = sadd.s32 %s226, %s224
      %s228 = smul.addr %s227, 8
      %s229 = scalar_lea.vmem %s3, %s228
      %s230 = smul.u32 3, %s21
      %p231 = scmp.lt.s32.totalorder %s19, 0
      %s232 = scalar_select %p231, %s19, 0
      %p233 = scmp.lt.s32.totalorder %s230, 8
      %s234 = scalar_select %p233, %s230, 8
      %s235 = smul.addr %s232, 9
      %s236 = sadd.s32 %s234, %s235
      %s237 = smul.addr %s236, 4
      %s238 = scalar_lea.vmem %s0, %s237
      %s239 = smul.u32 3, %s21
      %s240 = smul.u32 48, %s21
      %p241 = scmp.lt.s32.totalorder %s240, 143
      %s242 = scalar_select %p241, %s240, 143
      %p243 = scmp.lt.s32.totalorder %s20, 0
      %s244 = scalar_select %p243, %s20, 0
      %s245 = sadd.s32 %s244, %s242
      %s246 = smul.addr %s245, 4
      %s247 = scalar_lea.vmem %s1, %s246
      %s248 = smul.u32 48, %s21
      %p249 = scmp.lt.s32.totalorder %s20, 0
      %s250 = scalar_select %p249, %s20, 0
      %s251 = scalar_lea.vmem %s2, %s250
      %p252 = scmp.lt.s32.totalorder %s19, 0
      %s253 = scalar_select %p252, %s19, 0
      %p254 = scmp.lt.s32.totalorder %s20, 0
      %s255 = scalar_select %p254, %s20, 0
      %s256 = sadd.s32 %s255, %s253
      %s257 = smul.addr %s256, 8
      %s258 = scalar_lea.vmem %s3, %s257
      %p260 = scmp.eq.s32.totalorder %s21, 0
      // Predicated region
      $region33: #{custom_backbone_forward.17} parent=31 // pred_check
        %p261 = pneg %p260
      $region34: #{custom_backbone_forward.17} parent=31 // pred_check_branch
        %263 = sbr.rel (%p261) target = $region36
      $region35: #{custom_backbone_forward.17} parent=31 // pred_region
        %264 = vst [vmem:[#allocation2] sm:$0xff] 0.0
      $region36: #{custom_backbone_forward.17} parent=31 // pred_fallthru
        _
      %v265 = vld [vmem:[#allocation2] sm:$0xff]
      %v266 = vld [vmem:[%s238] sm:$0xff]
      %v267 = vld [vmem:[%s238 + $0x8] sm:$0xf]
      %v268 = vld [vmem:[%s247] sm:$0xf]
      %v269 = vld [vmem:[%s247 + $0x4] sm:$0xf]
      %v270 = vld [vmem:[%s247 + $0x8] sm:$0xf]
      %v271 = vld [vmem:[%s247 + $0xc] sm:$0xf]
      %v272 = vld [vmem:[%s247 + $0x10] sm:$0xf]
      %v273 = vld [vmem:[%s247 + $0x14] sm:$0xf]
      %v274 = vld [vmem:[%s247 + $0x18] sm:$0xf]
      %v275 = vld [vmem:[%s247 + $0x1c] sm:$0xf]
      %v276 = vld [vmem:[%s247 + $0x20] sm:$0xf]
      %v277 = vld [vmem:[%s247 + $0x24] sm:$0xf]
      %v278 = vld [vmem:[%s247 + $0x28] sm:$0xf]
      %v279 = vld [vmem:[%s247 + $0x2c] sm:$0xf]
      %v280 = vld [vmem:[%s247 + $0x30] sm:$0xf]
      %v281 = vld [vmem:[%s247 + $0x34] sm:$0xf]
      %v282 = vld [vmem:[%s247 + $0x38] sm:$0xf]
      %v283 = vld [vmem:[%s247 + $0x3c] sm:$0xf]
      %v284 = vld [vmem:[%s247 + $0x40] sm:$0xf]
      %v285 = vld [vmem:[%s247 + $0x44] sm:$0xf]
      %v286 = vld [vmem:[%s247 + $0x48] sm:$0xf]
      %v287 = vld [vmem:[%s247 + $0x4c] sm:$0xf]
      %v288 = vld [vmem:[%s247 + $0x50] sm:$0xf]
      %v289 = vld [vmem:[%s247 + $0x54] sm:$0xf]
      %v290 = vld [vmem:[%s247 + $0x58] sm:$0xf]
      %v291 = vld [vmem:[%s247 + $0x5c] sm:$0xf]
      %v292 = vld [vmem:[%s247 + $0x60] sm:$0xf]
      %v293 = vld [vmem:[%s247 + $0x64] sm:$0xf]
      %v294 = vld [vmem:[%s247 + $0x68] sm:$0xf]
      %v295 = vld [vmem:[%s247 + $0x6c] sm:$0xf]
      %v296 = vld [vmem:[%s247 + $0x70] sm:$0xf]
      %v297 = vld [vmem:[%s247 + $0x74] sm:$0xf]
      %v298 = vld [vmem:[%s247 + $0x78] sm:$0xf]
      %v299 = vld [vmem:[%s247 + $0x7c] sm:$0xf]
      %v300 = vld [vmem:[%s247 + $0x80] sm:$0xf]
      %v301 = vld [vmem:[%s247 + $0x84] sm:$0xf]
      %v302 = vld [vmem:[%s247 + $0x88] sm:$0xf]
      %v303 = vld [vmem:[%s247 + $0x8c] sm:$0xf]
      %v304 = vld [vmem:[%s247 + $0x90] sm:$0xf]
      %v305 = vld [vmem:[%s247 + $0x94] sm:$0xf]
      %v306 = vld [vmem:[%s247 + $0x98] sm:$0xf]
      %v307 = vld [vmem:[%s247 + $0x9c] sm:$0xf]
      %v308 = vld [vmem:[%s247 + $0xa0] sm:$0xf]
      %v309 = vld [vmem:[%s247 + $0xa4] sm:$0xf]
      %v310 = vld [vmem:[%s247 + $0xa8] sm:$0xf]
      %v311 = vld [vmem:[%s247 + $0xac] sm:$0xf]
      %v312 = vld [vmem:[%s247 + $0xb0] sm:$0xf]
      %v313 = vld [vmem:[%s247 + $0xb4] sm:$0xf]
      %v314 = vld [vmem:[%s247 + $0xb8] sm:$0xf]
      %v315 = vld [vmem:[%s247 + $0xbc] sm:$0xf]
      %v318 = vunpack.c.l.b16 %v266
      %v319 = vunpack.c.h.b16 %v266
      %v320 = vunpack.c.l.b16 %v267
      %v321 = vpack.c.b16 %v318, %v318
      %v322 = vpack.c.b16 %v319, %v319
      %v323 = vpack.c.b16 %v320, %v320
      %v375 = vunpack.c.l.b16 %v268
      %v376 = vunpack.c.l.b16 %v269
      %v377 = vunpack.c.l.b16 %v270
      %v378 = vunpack.c.l.b16 %v271
      %v379 = vunpack.c.l.b16 %v272
      %v380 = vunpack.c.l.b16 %v273
      %v381 = vunpack.c.l.b16 %v274
      %v382 = vunpack.c.l.b16 %v275
      %v383 = vunpack.c.l.b16 %v276
      %v384 = vunpack.c.l.b16 %v277
      %v385 = vunpack.c.l.b16 %v278
      %v386 = vunpack.c.l.b16 %v279
      %v387 = vunpack.c.l.b16 %v280
      %v388 = vunpack.c.l.b16 %v281
      %v389 = vunpack.c.l.b16 %v282
      %v390 = vunpack.c.l.b16 %v283
      %v391 = vunpack.c.l.b16 %v284
      %v392 = vunpack.c.l.b16 %v285
      %v393 = vunpack.c.l.b16 %v286
      %v394 = vunpack.c.l.b16 %v287
      %v395 = vunpack.c.l.b16 %v288
      %v396 = vunpack.c.l.b16 %v289
      %v397 = vunpack.c.l.b16 %v290
      %v398 = vunpack.c.l.b16 %v291
      %v399 = vunpack.c.l.b16 %v292
      %v400 = vunpack.c.l.b16 %v293
      %v401 = vunpack.c.l.b16 %v294
      %v402 = vunpack.c.l.b16 %v295
      %v403 = vunpack.c.l.b16 %v296
      %v404 = vunpack.c.l.b16 %v297
      %v405 = vunpack.c.l.b16 %v298
      %v406 = vunpack.c.l.b16 %v299
      %v407 = vunpack.c.l.b16 %v300
      %v408 = vunpack.c.l.b16 %v301
      %v409 = vunpack.c.l.b16 %v302
      %v410 = vunpack.c.l.b16 %v303
      %v411 = vunpack.c.l.b16 %v304
      %v412 = vunpack.c.l.b16 %v305
      %v413 = vunpack.c.l.b16 %v306
      %v414 = vunpack.c.l.b16 %v307
      %v415 = vunpack.c.l.b16 %v308
      %v416 = vunpack.c.l.b16 %v309
      %v417 = vunpack.c.l.b16 %v310
      %v418 = vunpack.c.l.b16 %v311
      %v419 = vunpack.c.l.b16 %v312
      %v420 = vunpack.c.l.b16 %v313
      %v421 = vunpack.c.l.b16 %v314
      %v422 = vunpack.c.l.b16 %v315
      %v423 = vpack.c.b16 %v376, %v375
      %v424 = vpack.c.b16 %v378, %v377
      %v425 = vpack.c.b16 %v380, %v379
      %v426 = vpack.c.b16 %v382, %v381
      %v427 = vpack.c.b16 %v384, %v383
      %v428 = vpack.c.b16 %v386, %v385
      %v429 = vpack.c.b16 %v388, %v387
      %v430 = vpack.c.b16 %v390, %v389
      %v431 = vpack.c.b16 %v392, %v391
      %v432 = vpack.c.b16 %v394, %v393
      %v433 = vpack.c.b16 %v396, %v395
      %v434 = vpack.c.b16 %v398, %v397
      %v435 = vpack.c.b16 %v400, %v399
      %v436 = vpack.c.b16 %v402, %v401
      %v437 = vpack.c.b16 %v404, %v403
      %v438 = vpack.c.b16 %v406, %v405
      %v439 = vpack.c.b16 %v408, %v407
      %v440 = vpack.c.b16 %v410, %v409
      %v441 = vpack.c.b16 %v412, %v411
      %v442 = vpack.c.b16 %v414, %v413
      %v443 = vpack.c.b16 %v416, %v415
      %v444 = vpack.c.b16 %v418, %v417
      %v445 = vpack.c.b16 %v420, %v419
      %v446 = vpack.c.b16 %v422, %v421
      %471 = vmatprep.subr.bf16.mxu0 0
      %472 = vmatpush1.bf16.msra.mxu0 %v423
      %473 = vmatprep.subr.bf16.mxu0 0
      %474 = vmatpush1.bf16.msra.mxu0 %v424
      %475 = vmatprep.subr.bf16.mxu0 0
      %476 = vmatpush1.bf16.msra.mxu0 %v425
      %477 = vmatprep.subr.bf16.mxu0 0
      %478 = vmatpush1.bf16.msra.mxu0 %v426
      %479 = vmatprep.subr.bf16.mxu0 0
      %480 = vmatpush1.bf16.msra.mxu0 %v427
      %481 = vmatprep.subr.bf16.mxu0 0
      %482 = vmatpush1.bf16.msra.mxu0 %v428
      %483 = vmatprep.subr.bf16.mxu0 0
      %484 = vmatpush1.bf16.msra.mxu0 %v429
      %485 = vmatprep.subr.bf16.mxu0 0
      %486 = vmatpush1.bf16.msra.mxu0 %v430
      %487 = vmatprep.subr.bf16.mxu0 0
      %488 = vmatpush1.bf16.msra.mxu0 %v431
      %489 = vmatprep.subr.bf16.mxu0 0
      %490 = vmatpush1.bf16.msra.mxu0 %v432
      %491 = vmatprep.subr.bf16.mxu0 0
      %492 = vmatpush1.bf16.msra.mxu0 %v433
      %493 = vmatprep.subr.bf16.mxu0 0
      %494 = vmatpush1.bf16.msra.mxu0 %v434
      %495 = vmatprep.subr.bf16.mxu0 0
      %496 = vmatpush1.bf16.msra.mxu0 %v435
      %497 = vmatprep.subr.bf16.mxu0 0
      %498 = vmatpush1.bf16.msra.mxu0 %v436
      %499 = vmatprep.subr.bf16.mxu0 0
      %500 = vmatpush1.bf16.msra.mxu0 %v437
      %501 = vmatprep.subr.bf16.mxu0 0
      %502 = vmatpush1.bf16.msra.mxu0 %v438
      %503 = vmatprep.mubr.bf16.mxu0 %v322
      %504 = vmatmul.mubr.bf16.gmra.mrb[0].mxu0 %v321
      %v505 = vpop.f32.mrb[0].mxu0
      %v506 = vadd.f32 0.0, %v505
      %v507 = vpop.f32.mrb[0].mxu0
      %v508 = vpop.f32.mrb[0].mxu0
      %v509 = vpop.f32.mrb[0].mxu0
      %510 = vdwg.mxu0
      %511 = vmatprep.subr.bf16.mxu0 0
      %512 = vmatpush1.bf16.msra.mxu0 %v439
      %513 = vmatprep.subr.bf16.mxu0 0
      %514 = vmatpush1.bf16.msra.mxu0 %v440
      %515 = vmatprep.subr.bf16.mxu0 0
      %516 = vmatpush1.bf16.msra.mxu0 %v441
      %517 = vmatprep.subr.bf16.mxu0 0
      %518 = vmatpush1.bf16.msra.mxu0 %v442
      %519 = vmatprep.subr.bf16.mxu0 0
      %520 = vmatpush1.bf16.msra.mxu0 %v443
      %521 = vmatprep.subr.bf16.mxu0 0
      %522 = vmatpush1.bf16.msra.mxu0 %v444
      %523 = vmatprep.subr.bf16.mxu0 0
      %524 = vmatpush1.bf16.msra.mxu0 %v445
      %525 = vmatprep.subr.bf16.mxu0 0
      %526 = vmatpush1.bf16.msra.mxu0 %v446
      %527 = vmatprep.subr.bf16.mxu0 0
      %528 = vmatpush1.bf16.msra.mxu0 0
      %529 = vmatprep.subr.bf16.mxu0 0
      %530 = vmatpush1.bf16.msra.mxu0 0
      %531 = vmatprep.subr.bf16.mxu0 0
      %532 = vmatpush1.bf16.msra.mxu0 0
      %533 = vmatprep.subr.bf16.mxu0 0
      %534 = vmatpush1.bf16.msra.mxu0 0
      %535 = vmatprep.subr.bf16.mxu0 0
      %536 = vmatpush1.bf16.msra.mxu0 0
      %537 = vmatprep.subr.bf16.mxu0 0
      %538 = vmatpush1.bf16.msra.mxu0 0
      %539 = vmatprep.subr.bf16.mxu0 0
      %540 = vmatpush1.bf16.msra.mxu0 0
      %541 = vmatprep.subr.bf16.mxu0 0
      %542 = vmatpush1.bf16.msra.mxu0 0
      %543 = vmatprep.mubr.bf16.mxu0 0
      %544 = vmatmul.mubr.bf16.gmra.mrb[0].mxu0 %v323
      %v545 = vpop.f32.mrb[0].mxu0
      %v546 = vadd.f32 %v506, %v545
      %v547 = vpop.f32.mrb[0].mxu0
      %v548 = vpop.f32.mrb[0].mxu0
      %v549 = vpop.f32.mrb[0].mxu0
      %550 = vdwg.mxu0
      %v551 = vadd.f32 %v265, %v546
      %552 = vst [vmem:[#allocation2] sm:$0xff] %v551
      %p553 = scmp.eq.s32.totalorder %s21, 2
      // Predicated region
      $region37: #{custom_backbone_forward.17} parent=31 // pred_check
        %p554 = pneg %p553
      $region38: #{custom_backbone_forward.17} parent=31 // pred_check_branch
        %556 = sbr.rel (%p554) target = $region40
      $region39: #{custom_backbone_forward.17} parent=31 // pred_region
        %v557 = vld [vmem:[#allocation2] sm:$0xff]
        %v558 = vld [vmem:[%s251] sm:$0x1]
        %v560 = vlaneseq
        %v561 = vshrl.u32 %v560, 7
        %v562 = vsub.s32 0, %v561
        %v563 = vrot.slane %v558, %v562
        %v565 = vadd.f32 %v557, %v563
        %v566 = vmax.f32 %v565, 0.0
        %567 = vst [vmem:[%s258] sm:$0xff] %v566
      $region40: #{custom_backbone_forward.17} parent=31 // pred_fallthru
        _
      %p568 = scmp.lt.s32.totalorder %s19, 0
      %s569 = scalar_select %p568, %s19, 0
      %p570 = scmp.lt.s32.totalorder %s20, 0
      %s571 = scalar_select %p570, %s20, 0
      %s572 = sadd.s32 %s571, %s569
      %s573 = smul.addr %s572, 8
      %s574 = scalar_lea.vmem %s3, %s573
      // Predicated region
      $region41: #{custom_backbone_forward.17} parent=31 // pred_check
        %p575 = pneg %p135
      $region42: #{custom_backbone_forward.17} parent=31 // pred_check_branch
        %577 = sbr.rel (%p575) target = $region44
      $region43: #{custom_backbone_forward.17} parent=31 // pred_region
        _
      $region44: #{custom_backbone_forward.17} parent=31 // pred_fallthru
        _
      // Predicated region
      $region45: #{custom_backbone_forward.17} parent=31 // pred_check
        %p578 = pneg %p135
      $region46: #{custom_backbone_forward.17} parent=31 // pred_check_branch
        %580 = sbr.rel (%p578) target = $region48
      $region47: #{custom_backbone_forward.17} parent=31 // pred_region
        %p581 = scmp.lt.s32.totalorder %s19, 0
        %s582 = scalar_select %p581, %s19, 0
        %p583 = scmp.lt.s32.totalorder %s20, 0
        %s584 = scalar_select %p583, %s20, 0
        %s585 = sadd.s32 %s584, %s582
        %s586 = smul.addr %s585, 8
        %s587 = scalar_lea.vmem %s3, %s586
      $region48: #{custom_backbone_forward.17} parent=31 // pred_fallthru
        _
    $region32: #{custom_backbone_forward.17} parent=5 // pred_fallthru
      _
    %p588 = scmp.le.s32.totalorder 2, %s9
    // Predicated region
    $region49: #{custom_backbone_forward.17} parent=5 // pred_check
      %p589 = pneg %p588
    $region50: #{custom_backbone_forward.17} parent=5 // pred_check_branch
      %591 = sbr.rel (%p589) target = $region52
    $region51: #{custom_backbone_forward.17} parent=5 // pred_region
      %s592 = ssub.s32 %s9, 2
    $region52: #{custom_backbone_forward.17} parent=5 // pred_fallthru
      _
  $region6: #{custom_backbone_forward.17} parent=0 // loop_footer
    %s13 = sadd.s32 1, %s9
  $region7: #{custom_backbone_forward.17} parent=0 // loop_footer_branch
    %8 = sbr.rel target = $region3
  $region8: #{custom_backbone_forward.17} parent=0 // loop_exit
    _

</llo_original>
